<compile_context>
chip_gen: v6e
topology: v6e:2x2x1
jax: 0.10.0
libtpu: 0.0.40
codegen_flags: <defaults>
</compile_context>

<pallas_src>
import functools

import jax
import jax.numpy as jnp
from jax.experimental import pallas as pl
from jax.experimental.pallas import tpu as pltpu

BETA = 0.9
THRESH = 1.0

_VMEM = pl.BlockSpec(memory_space=pltpu.MemorySpace.VMEM)

# ------------------------------ tiling helpers ------------------------------ #

_TM_MAX = 256     # M tile (rows)      - multiple of 16, safe for bf16 packing
_TK_MAX = 2048    # K tile (reduction) - multiple of 128
_TN = 128         # N tile (lanes)     - lane-dense stores


def _round_up(x, m):
    return (x + m - 1) // m * m


def _m_tiling(M):
    Mp = _round_up(M, 8)
    if Mp <= _TM_MAX:
        return Mp, Mp
    return _round_up(M, _TM_MAX), _TM_MAX


def _k_tiling(K):
    Kp = _round_up(K, 128)
    if Kp <= _TK_MAX:
        return Kp, Kp
    return _round_up(K, _TK_MAX), _TK_MAX


def _n_tiling(N):
    return _round_up(N, _TN), _TN


def _out_size(h, k, s, p):
    return (h + 2 * p - k) // s + 1


# ----------------------------- Pallas kernels ------------------------------ #

def _conv_lif_kernel(x_ref, w_ref, b_ref, *rest, has_residual):
    """Tiled GEMM (bf16 x bf16 -> f32 acc) fused with bias + snn.Leaky update
    (+ optional SEW residual add of the downsample branch's spikes)."""
    if has_residual:
        res_ref, mem_ref, out_ref, mem_out_ref, acc_ref = rest
    else:
        mem_ref, out_ref, mem_out_ref, acc_ref = rest
        res_ref = None

    k = pl.program_id(2)

    @pl.when(k == 0)
    def _init():
        acc_ref[...] = jnp.zeros_like(acc_ref)

    acc_ref[...] += jnp.dot(x_ref[...], w_ref[...],
                            preferred_element_type=jnp.float32)

    @pl.when(k == pl.num_programs(2) - 1)
    def _finalize():
        z = acc_ref[...] + b_ref[...]
        mem_prev = mem_ref[...]
        # snnTorch Leaky: subtract-reset from *previous* membrane, hard spike.
        reset = jnp.where(mem_prev > THRESH, THRESH, 0.0).astype(jnp.float32)
        mem_new = BETA * mem_prev + z - reset
        spk = jnp.where(mem_new > THRESH, 1.0, 0.0).astype(jnp.float32)
        if has_residual:
            spk = spk + res_ref[...]
        out_ref[...] = spk
        mem_out_ref[...] = mem_new


def _tail_kernel(x_ref, fcw_ref, fcb_ref, finw_ref, mem_ref, acc_ref,
                 acc_out_ref, mem_out_ref):
    """Fused global avg-pool + fc + LIF + final matmul + accumulator update."""
    pooled = jnp.mean(x_ref[...], axis=1)                       # (B, C)
    z = jnp.dot(pooled, fcw_ref[...],
                preferred_element_type=jnp.float32) + fcb_ref[...]
    mem_prev = mem_ref[...]
    reset = jnp.where(mem_prev > THRESH, THRESH, 0.0).astype(jnp.float32)
    mem_new = BETA * mem_prev + z - reset
    spk = jnp.where(mem_new > THRESH, 1.0, 0.0).astype(jnp.float32)
    mem_out_ref[...] = mem_new
    acc_out_ref[...] = acc_ref[...] + jnp.dot(
        spk, finw_ref[...], preferred_element_type=jnp.float32)


# ----------------------------- kernel wrappers ----------------------------- #

def gemm_bias_lif(x_p, w_p, b_p, mem_p, res_p, *, tm, tk, tn):
    """x_p (Mp,Kp) bf16, w_p (Kp,Np) bf16, b_p (1,Np) f32, mem_p/res_p (Mp,Np)
    f32. Returns (spk_or_sum, mem_new), both (Mp,Np) f32. Membrane is updated
    in place (input_output_aliases)."""
    Mp, Kp = x_p.shape
    Np = w_p.shape[1]
    assert Mp % tm == 0 and Kp % tk == 0 and Np % tn == 0
    assert mem_p.shape == (Mp, Np)
    has_res = res_p is not None
    if has_res:
        assert res_p.shape == (Mp, Np)

    grid = (Mp // tm, Np // tn, Kp // tk)

    in_specs = [
        pl.BlockSpec((tm, tk), lambda i, j, k: (i, k)),   # patches / spikes
        pl.BlockSpec((tk, tn), lambda i, j, k: (k, j)),   # weight matrix
        pl.BlockSpec((1, tn), lambda i, j, k: (0, j)),    # bias row
    ]
    args = [x_p, w_p, b_p]
    if has_res:
        in_specs.append(pl.BlockSpec((tm, tn), lambda i, j, k: (i, j)))
        args.append(res_p)
    in_specs.append(pl.BlockSpec((tm, tn), lambda i, j, k: (i, j)))
    args.append(mem_p)
    mem_idx = len(args) - 1

    out_block = pl.BlockSpec((tm, tn), lambda i, j, k: (i, j))
    grid_spec = pltpu.PrefetchScalarGridSpec(
        num_scalar_prefetch=0,
        grid=grid,
        in_specs=in_specs,
        out_specs=(out_block, out_block),
        scratch_shapes=[pltpu.VMEM((tm, tn), jnp.float32)],
    )
    return pl.pallas_call(
        functools.partial(_conv_lif_kernel, has_residual=has_res),
        grid_spec=grid_spec,
        out_shape=(jax.ShapeDtypeStruct((Mp, Np), jnp.float32),
                   jax.ShapeDtypeStruct((Mp, Np), jnp.float32)),
        input_output_aliases={mem_idx: 1},                # mem updated in place
        compiler_params=pltpu.CompilerParams(
            dimension_semantics=("parallel", "parallel", "arbitrary")),
    )(*args)


def tail_fused(x_bsc, fc_w, fc_b, fin_w, mem, acc):
    """x_bsc (B,S,C) f32; returns (acc_new (B,n_out), mem_new (B,n_fc))."""
    B = x_bsc.shape[0]
    n_fc = fc_w.shape[1]
    n_out = fin_w.shape[1]
    return pl.pallas_call(
        _tail_kernel,
        out_shape=(jax.ShapeDtypeStruct((B, n_out), jnp.float32),
                   jax.ShapeDtypeStruct((B, n_fc), jnp.float32)),
        in_specs=[_VMEM] * 6,
        out_specs=(_VMEM, _VMEM),
        input_output_aliases={4: 1, 5: 0},   # mem -> mem_new, acc -> acc_new
    )(x_bsc, fc_w, fc_b, fin_w, mem, acc)


# ------------------------------- conv glue --------------------------------- #

def im2col(x, kh, kw, stride, pad):
    # x: (B, H, W, C) -> patches (B*OH*OW, kh*kw*C), column order = (kh, kw, cin)
    B, H, W, C = x.shape
    OH = _out_size(H, kh, stride, pad)
    OW = _out_size(W, kw, stride, pad)
    xp = jnp.pad(x, ((0, 0), (pad, pad), (pad, pad), (0, 0)))
    cols = []
    for i in range(kh):
        for j in range(kw):
            cols.append(xp[:, i:i + stride * OH:stride, j:j + stride * OW:stride, :])
    patches = jnp.concatenate(cols, axis=-1)          # (B, OH, OW, kh*kw*C)
    return patches.reshape(B * OH * OW, kh * kw * C), (B, OH, OW)


def conv2d_lif(x_nhwc, cp, mem_p, stride, pad, res_p=None):
    """Conv2d + bias + snn.Leaky (+ optional fused residual add).
    Returns padded (Mp, Np) spikes/sum and the new padded membrane."""
    patches, (B, OH, OW) = im2col(x_nhwc.astype(jnp.bfloat16),
                                  cp['kh'], cp['kw'], stride, pad)
    M = B * OH * OW
    Mp, tm = _m_tiling(M)
    patches = jnp.pad(patches, ((0, Mp - M), (0, cp['Kp'] - cp['K'])))
    out_p, mem_new = gemm_bias_lif(patches, cp['w'], cp['b'], mem_p, res_p,
                                   tm=tm, tk=cp['tk'], tn=cp['tn'])
    return out_p, mem_new, (B, OH, OW)


# ------------------------------- parameters -------------------------------- #

def init_params(key, in_channels, out_channels):
    ks = jax.random.split(key, 9)

    def conv_init(k, cout, cin, kh, kw):
        k1, k2 = jax.random.split(k)
        bound = 1.0 / float(cin * kh * kw) ** 0.5
        w = jax.random.uniform(k1, (cout, cin, kh, kw), jnp.float32, -bound, bound)
        b = jax.random.uniform(k2, (cout,), jnp.float32, -bound, bound)
        return w, b

    def linear_init(k, cout, cin, bias=True):
        k1, k2 = jax.random.split(k)
        bound = 1.0 / float(cin) ** 0.5
        w = jax.random.uniform(k1, (cout, cin), jnp.float32, -bound, bound)
        b = jax.random.uniform(k2, (cout,), jnp.float32, -bound, bound) if bias \
            else jnp.zeros((cout,), jnp.float32)
        return w, b

    return {
        'conv1':      conv_init(ks[0], 64, in_channels, 7, 7),
        'res2_conv1': conv_init(ks[1], 64, 64, 3, 3),
        'res2_conv2': conv_init(ks[2], 64, 64, 3, 3),
        'res2_dconv': conv_init(ks[3], 64, 64, 1, 1),
        'res3_conv1': conv_init(ks[4], 128, 64, 3, 3),
        'res3_conv2': conv_init(ks[5], 128, 128, 3, 3),
        'res3_dconv': conv_init(ks[6], 128, 64, 1, 1),
        'fc':         linear_init(ks[7], 32, 128, bias=True),
        'final':      linear_init(ks[8], out_channels, 32, bias=False),
    }


def _prep_conv(w, b):
    """One-time per-conv prep: (Cout,Cin,KH,KW) -> padded bf16 GEMM weight,
    padded f32 bias row, plus tiling metadata."""
    Cout, Cin, KH, KW = w.shape
    K = KH * KW * Cin
    N = Cout
    Kp, tk = _k_tiling(K)
    Np, tn = _n_tiling(N)
    w_mat = jnp.transpose(w, (2, 3, 1, 0)).reshape(K, N)     # (kh,kw,cin) x cout
    w_mat = jnp.pad(w_mat, ((0, Kp - K), (0, Np - N))).astype(jnp.bfloat16)
    b_row = jnp.pad(b, (0, Np - N)).reshape(1, Np).astype(jnp.float32)
    return dict(w=w_mat, b=b_row, kh=KH, kw=KW, cin=Cin, cout=Cout,
                K=K, Kp=Kp, tk=tk, Np=Np, tn=tn)


def prep_params(params):
    """Hoist all weight reshape / transpose / pad / dtype work out of the
    timestep loop."""
    pp = {}
    for name in ('conv1', 'res2_conv1', 'res2_conv2', 'res2_dconv',
                 'res3_conv1', 'res3_conv2', 'res3_dconv'):
        w, b = params[name]
        pp[name] = _prep_conv(w, b)
    fc_w, fc_b = params['fc']
    pp['fc_w'] = fc_w.T.astype(jnp.float32)                  # (128, 32)
    pp['fc_b'] = fc_b.reshape(1, -1).astype(jnp.float32)     # (1, 32)
    fin_w, _ = params['final']
    pp['final_w'] = fin_w.T.astype(jnp.float32)              # (32, n_out)
    return pp


# ------------------------------- forward pass ------------------------------ #

def resnet5_forward(inputs, pp, timesteps):
    # inputs: (T, B, Cin, H, W) float32, matching the PyTorch forward.
    T, B, Cin, H, W = inputs.shape
    H1, W1 = _out_size(H, 7, 2, 3), _out_size(W, 7, 2, 3)
    H2, W2 = _out_size(H1, 3, 2, 1), _out_size(W1, 3, 2, 1)
    H3, W3 = _out_size(H2, 3, 2, 1), _out_size(W2, 3, 2, 1)

    def zmem(M, cp):
        Mp, _ = _m_tiling(M)
        return jnp.zeros((Mp, cp['Np']), jnp.float32)

    mem = {
        'spike1':      zmem(B * H1 * W1, pp['conv1']),
        'res2_spike1': zmem(B * H1 * W1, pp['res2_conv1']),
        'res2_spike2': zmem(B * H2 * W2, pp['res2_conv2']),
        'res2_dspike': zmem(B * H2 * W2, pp['res2_dconv']),
        'res3_spike1': zmem(B * H2 * W2, pp['res3_conv1']),
        'res3_spike2': zmem(B * H3 * W3, pp['res3_conv2']),
        'res3_dspike': zmem(B * H3 * W3, pp['res3_dconv']),
        'fc_spike':    jnp.zeros((B, pp['fc_w'].shape[1]), jnp.float32),
    }
    n_out = pp['final_w'].shape[1]
    acc = jnp.zeros((B, n_out), jnp.float32)

    def unpad(out_p, B, OH, OW, cout):
        return out_p[:B * OH * OW, :cout].reshape(B, OH, OW, cout)

    for k in range(timesteps):
        x = jnp.transpose(inputs[k], (0, 2, 3, 1))            # NCHW -> NHWC

        # ---- stem ----
        spk, mem['spike1'], _ = conv2d_lif(x, pp['conv1'], mem['spike1'], 2, 3)
        x = unpad(spk, B, H1, W1, pp['conv1']['cout'])

        # ---- res2 block (downsample branch first; its spikes are fused as
        #      the residual into the conv2 epilogue) ----
        dsp, mem['res2_dspike'], _ = conv2d_lif(x, pp['res2_dconv'],
                                                mem['res2_dspike'], 2, 0)
        spk, mem['res2_spike1'], _ = conv2d_lif(x, pp['res2_conv1'],
                                                mem['res2_spike1'], 1, 1)
        x = unpad(spk, B, H1, W1, pp['res2_conv1']['cout'])
        ssum, mem['res2_spike2'], _ = conv2d_lif(x, pp['res2_conv2'],
                                                 mem['res2_spike2'], 2, 1,
                                                 res_p=dsp)
        x = unpad(ssum, B, H2, W2, pp['res2_conv2']['cout'])

        # ---- res3 block ----
        dsp, mem['res3_dspike'], _ = conv2d_lif(x, pp['res3_dconv'],
                                                mem['res3_dspike'], 2, 0)
        spk, mem['res3_spike1'], _ = conv2d_lif(x, pp['res3_conv1'],
                                                mem['res3_spike1'], 1, 1)
        x = unpad(spk, B, H2, W2, pp['res3_conv1']['cout'])
        ssum, mem['res3_spike2'], _ = conv2d_lif(x, pp['res3_conv2'],
                                                 mem['res3_spike2'], 2, 1,
                                                 res_p=dsp)

        # ---- fused tail: avg-pool + fc + LIF + final + accumulate ----
        cout3 = pp['res3_conv2']['cout']
        x_tail = ssum[:B * H3 * W3, :cout3].reshape(B, H3 * W3, cout3)
        acc, mem['fc_spike'] = tail_fused(x_tail, pp['fc_w'], pp['fc_b'],
                                          pp['final_w'], mem['fc_spike'], acc)
    return acc


# ---------------------------------- main ------------------------------------ #

if __name__ == "__main__":
    TIMESTEPS, B, CIN, H, W, COUT = 3, 2, 4, 16, 16, 10
    key = jax.random.PRNGKey(0)
    kp, kx = jax.random.split(key)
    params = init_params(kp, CIN, COUT)
    pp = prep_params(params)
    inputs = jax.random.normal(kx, (TIMESTEPS, B, CIN, H, W), jnp.float32)

    fwd = jax.jit(lambda inp: resnet5_forward(inp, pp, TIMESTEPS))
    out = fwd(inputs)
    jax.block_until_ready(out)
    assert out.shape == (B, COUT) and out.dtype == jnp.float32
    print("KERNEL_OK")
</pallas_src>

<mosaic_0001>
module attributes {stable_mosaic.version = 11 : i64} {
  func.func @_conv_lif_kernel(%arg0: i32, %arg1: i32, %arg2: i32, %arg3: memref<128x256xbf16, #tpu.memory_space<vmem>>, %arg4: memref<256x128xbf16, #tpu.memory_space<vmem>>, %arg5: memref<1x128xf32, #tpu.memory_space<vmem>>, %arg6: memref<128x128xf32, #tpu.memory_space<vmem>>, %arg7: memref<128x128xf32, #tpu.memory_space<vmem>>, %arg8: memref<128x128xf32, #tpu.memory_space<vmem>>, %arg9: memref<128x128xf32, #tpu.memory_space<vmem>>) attributes {dimension_semantics = [#tpu.dimension_semantics<parallel>, #tpu.dimension_semantics<parallel>, #tpu.dimension_semantics<arbitrary>], iteration_bounds = array<i64: 1, 1, 1>, scalar_prefetch = 0 : i64, scratch_operands = 1 : i64, tpu.core_type = #tpu.core_type<tc>, window_params = [{transform_indices = @transform_0, window_bounds = array<i64: 128, 256>}, {transform_indices = @transform_1, window_bounds = array<i64: 256, 128>}, {transform_indices = @transform_2, window_bounds = array<i64: 1, 128>}, {transform_indices = @transform_3, window_bounds = array<i64: 128, 128>}, {transform_indices = @transform_4, window_bounds = array<i64: 128, 128>}, {transform_indices = @transform_5, window_bounds = array<i64: 128, 128>}]} {
    %c0_i32 = arith.constant 0 : i32
    %0 = arith.cmpi eq, %arg2, %c0_i32 : i32
    %1 = arith.extui %0 : i1 to i32
    %c0_i32_0 = arith.constant 0 : i32
    %2 = arith.cmpi ne, %1, %c0_i32_0 : i32
    scf.if %2 {
      %cst_10 = arith.constant 0.000000e+00 : f32
      %12 = vector.broadcast %cst_10 : f32 to vector<128x128xf32>
      %c0_11 = arith.constant 0 : index
      %c0_12 = arith.constant 0 : index
      %13 = vector.load %arg9[%c0_11, %c0_12] : memref<128x128xf32, #tpu.memory_space<vmem>>, vector<128x128xf32>
      tpu.vector_store %arg9[%c0_11, %c0_12], %12 {strides = array<i32>} : memref<128x128xf32, #tpu.memory_space<vmem>>, vector<128x128xf32>,
    } else {
    }
    %c0 = arith.constant 0 : index
    %c0_1 = arith.constant 0 : index
    %3 = vector.load %arg9[%c0, %c0_1] : memref<128x128xf32, #tpu.memory_space<vmem>>, vector<128x128xf32>
    %c0_2 = arith.constant 0 : index
    %c0_3 = arith.constant 0 : index
    %4 = vector.load %arg3[%c0_2, %c0_3] : memref<128x256xbf16, #tpu.memory_space<vmem>>, vector<128x256xbf16>
    %c0_4 = arith.constant 0 : index
    %c0_5 = arith.constant 0 : index
    %5 = vector.load %arg4[%c0_4, %c0_5] : memref<256x128xbf16, #tpu.memory_space<vmem>>, vector<256x128xbf16>
    %cst = arith.constant dense<0.000000e+00> : vector<128x128xf32>
    %6 = tpu.matmul %4, %5, %cst {dimension_numbers = #tpu.dot_dimension_numbers<[1], [0], [0], [1], [0, 0, 1, 1], [], []>} : vector<128x256xbf16>, vector<256x128xbf16>, vector<128x128xf32> -> vector<128x128xf32>
    %7 = arith.addf %3, %6 : vector<128x128xf32>
    %c0_6 = arith.constant 0 : index
    %c0_7 = arith.constant 0 : index
    %8 = vector.load %arg9[%c0_6, %c0_7] : memref<128x128xf32, #tpu.memory_space<vmem>>, vector<128x128xf32>
    tpu.vector_store %arg9[%c0_6, %c0_7], %7 {strides = array<i32>} : memref<128x128xf32, #tpu.memory_space<vmem>>, vector<128x128xf32>,
    %c0_i32_8 = arith.constant 0 : i32
    %9 = arith.cmpi eq, %arg2, %c0_i32_8 : i32
    %10 = arith.extui %9 : i1 to i32
    %c0_i32_9 = arith.constant 0 : i32
    %11 = arith.cmpi ne, %10, %c0_i32_9 : i32
    scf.if %11 {
      %c0_10 = arith.constant 0 : index
      %c0_11 = arith.constant 0 : index
      %12 = vector.load %arg9[%c0_10, %c0_11] : memref<128x128xf32, #tpu.memory_space<vmem>>, vector<128x128xf32>
      %c0_12 = arith.constant 0 : index
      %c0_13 = arith.constant 0 : index
      %13 = vector.load %arg5[%c0_12, %c0_13] : memref<1x128xf32, #tpu.memory_space<vmem>>, vector<1x128xf32>
      %14 = vector.broadcast %13 : vector<1x128xf32> to vector<128x128xf32>
      %15 = arith.addf %12, %14 : vector<128x128xf32>
      %c0_14 = arith.constant 0 : index
      %c0_15 = arith.constant 0 : index
      %16 = vector.load %arg6[%c0_14, %c0_15] : memref<128x128xf32, #tpu.memory_space<vmem>>, vector<128x128xf32>
      %cst_16 = arith.constant 1.000000e+00 : f32
      %17 = vector.broadcast %cst_16 : f32 to vector<128x128xf32>
      %18 = arith.cmpf ogt, %16, %17 : vector<128x128xf32>
      %cst_17 = arith.constant 1.000000e+00 : f32
      %cst_18 = arith.constant 0.000000e+00 : f32
      %19 = vector.broadcast %cst_17 : f32 to vector<128x128xf32>
      %20 = vector.broadcast %cst_18 : f32 to vector<128x128xf32>
      %21 = arith.select %18, %19, %20 : vector<128x128xi1>, vector<128x128xf32>
      %cst_19 = arith.constant 0.899999976 : f32
      %22 = vector.broadcast %cst_19 : f32 to vector<128x128xf32>
      %23 = arith.mulf %22, %16 : vector<128x128xf32>
      %24 = arith.addf %23, %15 : vector<128x128xf32>
      %25 = arith.subf %24, %21 : vector<128x128xf32>
      %cst_20 = arith.constant 1.000000e+00 : f32
      %26 = vector.broadcast %cst_20 : f32 to vector<128x128xf32>
      %27 = arith.cmpf ogt, %25, %26 : vector<128x128xf32>
      %cst_21 = arith.constant 1.000000e+00 : f32
      %cst_22 = arith.constant 0.000000e+00 : f32
      %28 = vector.broadcast %cst_21 : f32 to vector<128x128xf32>
      %29 = vector.broadcast %cst_22 : f32 to vector<128x128xf32>
      %30 = arith.select %27, %28, %29 : vector<128x128xi1>, vector<128x128xf32>
      %c0_23 = arith.constant 0 : index
      %c0_24 = arith.constant 0 : index
      %31 = vector.load %arg7[%c0_23, %c0_24] : memref<128x128xf32, #tpu.memory_space<vmem>>, vector<128x128xf32>
      tpu.vector_store %arg7[%c0_23, %c0_24], %30 {strides = array<i32>} : memref<128x128xf32, #tpu.memory_space<vmem>>, vector<128x128xf32>,
      %c0_25 = arith.constant 0 : index
      %c0_26 = arith.constant 0 : index
      %32 = vector.load %arg8[%c0_25, %c0_26] : memref<128x128xf32, #tpu.memory_space<vmem>>, vector<128x128xf32>
      tpu.vector_store %arg8[%c0_25, %c0_26], %25 {strides = array<i32>} : memref<128x128xf32, #tpu.memory_space<vmem>>, vector<128x128xf32>,
    } else {
    }
    return
  }
  func.func @transform_0(%arg0: i32, %arg1: i32, %arg2: i32) -> (i32, i32) {
    %c0_i32 = arith.constant 0 : i32
    return %arg0, %arg2 : i32, i32
  }
  func.func @transform_1(%arg0: i32, %arg1: i32, %arg2: i32) -> (i32, i32) {
    %c0_i32 = arith.constant 0 : i32
    return %arg2, %arg1 : i32, i32
  }
  func.func @transform_2(%arg0: i32, %arg1: i32, %arg2: i32) -> (i32, i32) {
    %c0_i32 = arith.constant 0 : i32
    %c0_i32_0 = arith.constant 0 : i32
    return %c0_i32, %arg1 : i32, i32
  }
  func.func @transform_3(%arg0: i32, %arg1: i32, %arg2: i32) -> (i32, i32) {
    %c0_i32 = arith.constant 0 : i32
    return %arg0, %arg1 : i32, i32
  }
  func.func @transform_4(%arg0: i32, %arg1: i32, %arg2: i32) -> (i32, i32) {
    %c0_i32 = arith.constant 0 : i32
    return %arg0, %arg1 : i32, i32
  }
  func.func @transform_5(%arg0: i32, %arg1: i32, %arg2: i32) -> (i32, i32) {
    %c0_i32 = arith.constant 0 : i32
    return %arg0, %arg1 : i32, i32
  }
}

module attributes {stable_mosaic.version = 11 : i64} {
  func.func @_conv_lif_kernel(%arg0: i32, %arg1: i32, %arg2: i32, %arg3: memref<128x640xbf16, #tpu.memory_space<vmem>>, %arg4: memref<640x128xbf16, #tpu.memory_space<vmem>>, %arg5: memref<1x128xf32, #tpu.memory_space<vmem>>, %arg6: memref<128x128xf32, #tpu.memory_space<vmem>>, %arg7: memref<128x128xf32, #tpu.memory_space<vmem>>, %arg8: memref<128x128xf32, #tpu.memory_space<vmem>>, %arg9: memref<128x128xf32, #tpu.memory_space<vmem>>) attributes {dimension_semantics = [#tpu.dimension_semantics<parallel>, #tpu.dimension_semantics<parallel>, #tpu.dimension_semantics<arbitrary>], iteration_bounds = array<i64: 1, 1, 1>, scalar_prefetch = 0 : i64, scratch_operands = 1 : i64, tpu.core_type = #tpu.core_type<tc>, window_params = [{transform_indices = @transform_0, window_bounds = array<i64: 128, 640>}, {transform_indices = @transform_1, window_bounds = array<i64: 640, 128>}, {transform_indices = @transform_2, window_bounds = array<i64: 1, 128>}, {transform_indices = @transform_3, window_bounds = array<i64: 128, 128>}, {transform_indices = @transform_4, window_bounds = array<i64: 128, 128>}, {transform_indices = @transform_5, window_bounds = array<i64: 128, 128>}]} {
    %c0_i32 = arith.constant 0 : i32
    %0 = arith.cmpi eq, %arg2, %c0_i32 : i32
    %1 = arith.extui %0 : i1 to i32
    %c0_i32_0 = arith.constant 0 : i32
    %2 = arith.cmpi ne, %1, %c0_i32_0 : i32
    scf.if %2 {
      %cst_10 = arith.constant 0.000000e+00 : f32
      %12 = vector.broadcast %cst_10 : f32 to vector<128x128xf32>
      %c0_11 = arith.constant 0 : index
      %c0_12 = arith.constant 0 : index
      %13 = vector.load %arg9[%c0_11, %c0_12] : memref<128x128xf32, #tpu.memory_space<vmem>>, vector<128x128xf32>
      tpu.vector_store %arg9[%c0_11, %c0_12], %12 {strides = array<i32>} : memref<128x128xf32, #tpu.memory_space<vmem>>, vector<128x128xf32>,
    } else {
    }
    %c0 = arith.constant 0 : index
    %c0_1 = arith.constant 0 : index
    %3 = vector.load %arg9[%c0, %c0_1] : memref<128x128xf32, #tpu.memory_space<vmem>>, vector<128x128xf32>
    %c0_2 = arith.constant 0 : index
    %c0_3 = arith.constant 0 : index
    %4 = vector.load %arg3[%c0_2, %c0_3] : memref<128x640xbf16, #tpu.memory_space<vmem>>, vector<128x640xbf16>
    %c0_4 = arith.constant 0 : index
    %c0_5 = arith.constant 0 : index
    %5 = vector.load %arg4[%c0_4, %c0_5] : memref<640x128xbf16, #tpu.memory_space<vmem>>, vector<640x128xbf16>
    %cst = arith.constant dense<0.000000e+00> : vector<128x128xf32>
    %6 = tpu.matmul %4, %5, %cst {dimension_numbers = #tpu.dot_dimension_numbers<[1], [0], [0], [1], [0, 0, 1, 1], [], []>} : vector<128x640xbf16>, vector<640x128xbf16>, vector<128x128xf32> -> vector<128x128xf32>
    %7 = arith.addf %3, %6 : vector<128x128xf32>
    %c0_6 = arith.constant 0 : index
    %c0_7 = arith.constant 0 : index
    %8 = vector.load %arg9[%c0_6, %c0_7] : memref<128x128xf32, #tpu.memory_space<vmem>>, vector<128x128xf32>
    tpu.vector_store %arg9[%c0_6, %c0_7], %7 {strides = array<i32>} : memref<128x128xf32, #tpu.memory_space<vmem>>, vector<128x128xf32>,
    %c0_i32_8 = arith.constant 0 : i32
    %9 = arith.cmpi eq, %arg2, %c0_i32_8 : i32
    %10 = arith.extui %9 : i1 to i32
    %c0_i32_9 = arith.constant 0 : i32
    %11 = arith.cmpi ne, %10, %c0_i32_9 : i32
    scf.if %11 {
      %c0_10 = arith.constant 0 : index
      %c0_11 = arith.constant 0 : index
      %12 = vector.load %arg9[%c0_10, %c0_11] : memref<128x128xf32, #tpu.memory_space<vmem>>, vector<128x128xf32>
      %c0_12 = arith.constant 0 : index
      %c0_13 = arith.constant 0 : index
      %13 = vector.load %arg5[%c0_12, %c0_13] : memref<1x128xf32, #tpu.memory_space<vmem>>, vector<1x128xf32>
      %14 = vector.broadcast %13 : vector<1x128xf32> to vector<128x128xf32>
      %15 = arith.addf %12, %14 : vector<128x128xf32>
      %c0_14 = arith.constant 0 : index
      %c0_15 = arith.constant 0 : index
      %16 = vector.load %arg6[%c0_14, %c0_15] : memref<128x128xf32, #tpu.memory_space<vmem>>, vector<128x128xf32>
      %cst_16 = arith.constant 1.000000e+00 : f32
      %17 = vector.broadcast %cst_16 : f32 to vector<128x128xf32>
      %18 = arith.cmpf ogt, %16, %17 : vector<128x128xf32>
      %cst_17 = arith.constant 1.000000e+00 : f32
      %cst_18 = arith.constant 0.000000e+00 : f32
      %19 = vector.broadcast %cst_17 : f32 to vector<128x128xf32>
      %20 = vector.broadcast %cst_18 : f32 to vector<128x128xf32>
      %21 = arith.select %18, %19, %20 : vector<128x128xi1>, vector<128x128xf32>
      %cst_19 = arith.constant 0.899999976 : f32
      %22 = vector.broadcast %cst_19 : f32 to vector<128x128xf32>
      %23 = arith.mulf %22, %16 : vector<128x128xf32>
      %24 = arith.addf %23, %15 : vector<128x128xf32>
      %25 = arith.subf %24, %21 : vector<128x128xf32>
      %cst_20 = arith.constant 1.000000e+00 : f32
      %26 = vector.broadcast %cst_20 : f32 to vector<128x128xf32>
      %27 = arith.cmpf ogt, %25, %26 : vector<128x128xf32>
      %cst_21 = arith.constant 1.000000e+00 : f32
      %cst_22 = arith.constant 0.000000e+00 : f32
      %28 = vector.broadcast %cst_21 : f32 to vector<128x128xf32>
      %29 = vector.broadcast %cst_22 : f32 to vector<128x128xf32>
      %30 = arith.select %27, %28, %29 : vector<128x128xi1>, vector<128x128xf32>
      %c0_23 = arith.constant 0 : index
      %c0_24 = arith.constant 0 : index
      %31 = vector.load %arg7[%c0_23, %c0_24] : memref<128x128xf32, #tpu.memory_space<vmem>>, vector<128x128xf32>
      tpu.vector_store %arg7[%c0_23, %c0_24], %30 {strides = array<i32>} : memref<128x128xf32, #tpu.memory_space<vmem>>, vector<128x128xf32>,
      %c0_25 = arith.constant 0 : index
      %c0_26 = arith.constant 0 : index
      %32 = vector.load %arg8[%c0_25, %c0_26] : memref<128x128xf32, #tpu.memory_space<vmem>>, vector<128x128xf32>
      tpu.vector_store %arg8[%c0_25, %c0_26], %25 {strides = array<i32>} : memref<128x128xf32, #tpu.memory_space<vmem>>, vector<128x128xf32>,
    } else {
    }
    return
  }
  func.func @transform_0(%arg0: i32, %arg1: i32, %arg2: i32) -> (i32, i32) {
    %c0_i32 = arith.constant 0 : i32
    return %arg0, %arg2 : i32, i32
  }
  func.func @transform_1(%arg0: i32, %arg1: i32, %arg2: i32) -> (i32, i32) {
    %c0_i32 = arith.constant 0 : i32
    return %arg2, %arg1 : i32, i32
  }
  func.func @transform_2(%arg0: i32, %arg1: i32, %arg2: i32) -> (i32, i32) {
    %c0_i32 = arith.constant 0 : i32
    %c0_i32_0 = arith.constant 0 : i32
    return %c0_i32, %arg1 : i32, i32
  }
  func.func @transform_3(%arg0: i32, %arg1: i32, %arg2: i32) -> (i32, i32) {
    %c0_i32 = arith.constant 0 : i32
    return %arg0, %arg1 : i32, i32
  }
  func.func @transform_4(%arg0: i32, %arg1: i32, %arg2: i32) -> (i32, i32) {
    %c0_i32 = arith.constant 0 : i32
    return %arg0, %arg1 : i32, i32
  }
  func.func @transform_5(%arg0: i32, %arg1: i32, %arg2: i32) -> (i32, i32) {
    %c0_i32 = arith.constant 0 : i32
    return %arg0, %arg1 : i32, i32
  }
}

module attributes {stable_mosaic.version = 11 : i64} {
  func.func @_conv_lif_kernel(%arg0: i32, %arg1: i32, %arg2: i32, %arg3: memref<32x640xbf16, #tpu.memory_space<vmem>>, %arg4: memref<640x128xbf16, #tpu.memory_space<vmem>>, %arg5: memref<1x128xf32, #tpu.memory_space<vmem>>, %arg6: memref<32x128xf32, #tpu.memory_space<vmem>>, %arg7: memref<32x128xf32, #tpu.memory_space<vmem>>, %arg8: memref<32x128xf32, #tpu.memory_space<vmem>>, %arg9: memref<32x128xf32, #tpu.memory_space<vmem>>, %arg10: memref<32x128xf32, #tpu.memory_space<vmem>>) attributes {dimension_semantics = [#tpu.dimension_semantics<parallel>, #tpu.dimension_semantics<parallel>, #tpu.dimension_semantics<arbitrary>], iteration_bounds = array<i64: 1, 1, 1>, scalar_prefetch = 0 : i64, scratch_operands = 1 : i64, tpu.core_type = #tpu.core_type<tc>, window_params = [{transform_indices = @transform_0, window_bounds = array<i64: 32, 640>}, {transform_indices = @transform_1, window_bounds = array<i64: 640, 128>}, {transform_indices = @transform_2, window_bounds = array<i64: 1, 128>}, {transform_indices = @transform_3, window_bounds = array<i64: 32, 128>}, {transform_indices = @transform_4, window_bounds = array<i64: 32, 128>}, {transform_indices = @transform_5, window_bounds = array<i64: 32, 128>}, {transform_indices = @transform_6, window_bounds = array<i64: 32, 128>}]} {
    %c0_i32 = arith.constant 0 : i32
    %0 = arith.cmpi eq, %arg2, %c0_i32 : i32
    %1 = arith.extui %0 : i1 to i32
    %c0_i32_0 = arith.constant 0 : i32
    %2 = arith.cmpi ne, %1, %c0_i32_0 : i32
    scf.if %2 {
      %cst_10 = arith.constant 0.000000e+00 : f32
      %12 = vector.broadcast %cst_10 : f32 to vector<32x128xf32>
      %c0_11 = arith.constant 0 : index
      %c0_12 = arith.constant 0 : index
      %13 = vector.load %arg10[%c0_11, %c0_12] : memref<32x128xf32, #tpu.memory_space<vmem>>, vector<32x128xf32>
      tpu.vector_store %arg10[%c0_11, %c0_12], %12 {strides = array<i32>} : memref<32x128xf32, #tpu.memory_space<vmem>>, vector<32x128xf32>,
    } else {
    }
    %c0 = arith.constant 0 : index
    %c0_1 = arith.constant 0 : index
    %3 = vector.load %arg10[%c0, %c0_1] : memref<32x128xf32, #tpu.memory_space<vmem>>, vector<32x128xf32>
    %c0_2 = arith.constant 0 : index
    %c0_3 = arith.constant 0 : index
    %4 = vector.load %arg3[%c0_2, %c0_3] : memref<32x640xbf16, #tpu.memory_space<vmem>>, vector<32x640xbf16>
    %c0_4 = arith.constant 0 : index
    %c0_5 = arith.constant 0 : index
    %5 = vector.load %arg4[%c0_4, %c0_5] : memref<640x128xbf16, #tpu.memory_space<vmem>>, vector<640x128xbf16>
    %cst = arith.constant dense<0.000000e+00> : vector<32x128xf32>
    %6 = tpu.matmul %4, %5, %cst {dimension_numbers = #tpu.dot_dimension_numbers<[1], [0], [0], [1], [0, 0, 1, 1], [], []>} : vector<32x640xbf16>, vector<640x128xbf16>, vector<32x128xf32> -> vector<32x128xf32>
    %7 = arith.addf %3, %6 : vector<32x128xf32>
    %c0_6 = arith.constant 0 : index
    %c0_7 = arith.constant 0 : index
    %8 = vector.load %arg10[%c0_6, %c0_7] : memref<32x128xf32, #tpu.memory_space<vmem>>, vector<32x128xf32>
    tpu.vector_store %arg10[%c0_6, %c0_7], %7 {strides = array<i32>} : memref<32x128xf32, #tpu.memory_space<vmem>>, vector<32x128xf32>,
    %c0_i32_8 = arith.constant 0 : i32
    %9 = arith.cmpi eq, %arg2, %c0_i32_8 : i32
    %10 = arith.extui %9 : i1 to i32
    %c0_i32_9 = arith.constant 0 : i32
    %11 = arith.cmpi ne, %10, %c0_i32_9 : i32
    scf.if %11 {
      %c0_10 = arith.constant 0 : index
      %c0_11 = arith.constant 0 : index
      %12 = vector.load %arg10[%c0_10, %c0_11] : memref<32x128xf32, #tpu.memory_space<vmem>>, vector<32x128xf32>
      %c0_12 = arith.constant 0 : index
      %c0_13 = arith.constant 0 : index
      %13 = vector.load %arg5[%c0_12, %c0_13] : memref<1x128xf32, #tpu.memory_space<vmem>>, vector<1x128xf32>
      %14 = vector.broadcast %13 : vector<1x128xf32> to vector<32x128xf32>
      %15 = arith.addf %12, %14 : vector<32x128xf32>
      %c0_14 = arith.constant 0 : index
      %c0_15 = arith.constant 0 : index
      %16 = vector.load %arg7[%c0_14, %c0_15] : memref<32x128xf32, #tpu.memory_space<vmem>>, vector<32x128xf32>
      %cst_16 = arith.constant 1.000000e+00 : f32
      %17 = vector.broadcast %cst_16 : f32 to vector<32x128xf32>
      %18 = arith.cmpf ogt, %16, %17 : vector<32x128xf32>
      %cst_17 = arith.constant 1.000000e+00 : f32
      %cst_18 = arith.constant 0.000000e+00 : f32
      %19 = vector.broadcast %cst_17 : f32 to vector<32x128xf32>
      %20 = vector.broadcast %cst_18 : f32 to vector<32x128xf32>
      %21 = arith.select %18, %19, %20 : vector<32x128xi1>, vector<32x128xf32>
      %cst_19 = arith.constant 0.899999976 : f32
      %22 = vector.broadcast %cst_19 : f32 to vector<32x128xf32>
      %23 = arith.mulf %22, %16 : vector<32x128xf32>
      %24 = arith.addf %23, %15 : vector<32x128xf32>
      %25 = arith.subf %24, %21 : vector<32x128xf32>
      %cst_20 = arith.constant 1.000000e+00 : f32
      %26 = vector.broadcast %cst_20 : f32 to vector<32x128xf32>
      %27 = arith.cmpf ogt, %25, %26 : vector<32x128xf32>
      %cst_21 = arith.constant 1.000000e+00 : f32
      %cst_22 = arith.constant 0.000000e+00 : f32
      %28 = vector.broadcast %cst_21 : f32 to vector<32x128xf32>
      %29 = vector.broadcast %cst_22 : f32 to vector<32x128xf32>
      %30 = arith.select %27, %28, %29 : vector<32x128xi1>, vector<32x128xf32>
      %c0_23 = arith.constant 0 : index
      %c0_24 = arith.constant 0 : index
      %31 = vector.load %arg6[%c0_23, %c0_24] : memref<32x128xf32, #tpu.memory_space<vmem>>, vector<32x128xf32>
      %32 = arith.addf %30, %31 : vector<32x128xf32>
      %c0_25 = arith.constant 0 : index
      %c0_26 = arith.constant 0 : index
      %33 = vector.load %arg8[%c0_25, %c0_26] : memref<32x128xf32, #tpu.memory_space<vmem>>, vector<32x128xf32>
      tpu.vector_store %arg8[%c0_25, %c0_26], %32 {strides = array<i32>} : memref<32x128xf32, #tpu.memory_space<vmem>>, vector<32x128xf32>,
      %c0_27 = arith.constant 0 : index
      %c0_28 = arith.constant 0 : index
      %34 = vector.load %arg9[%c0_27, %c0_28] : memref<32x128xf32, #tpu.memory_space<vmem>>, vector<32x128xf32>
      tpu.vector_store %arg9[%c0_27, %c0_28], %25 {strides = array<i32>} : memref<32x128xf32, #tpu.memory_space<vmem>>, vector<32x128xf32>,
    } else {
    }
    return
  }
  func.func @transform_0(%arg0: i32, %arg1: i32, %arg2: i32) -> (i32, i32) {
    %c0_i32 = arith.constant 0 : i32
    return %arg0, %arg2 : i32, i32
  }
  func.func @transform_1(%arg0: i32, %arg1: i32, %arg2: i32) -> (i32, i32) {
    %c0_i32 = arith.constant 0 : i32
    return %arg2, %arg1 : i32, i32
  }
  func.func @transform_2(%arg0: i32, %arg1: i32, %arg2: i32) -> (i32, i32) {
    %c0_i32 = arith.constant 0 : i32
    %c0_i32_0 = arith.constant 0 : i32
    return %c0_i32, %arg1 : i32, i32
  }
  func.func @transform_3(%arg0: i32, %arg1: i32, %arg2: i32) -> (i32, i32) {
    %c0_i32 = arith.constant 0 : i32
    return %arg0, %arg1 : i32, i32
  }
  func.func @transform_4(%arg0: i32, %arg1: i32, %arg2: i32) -> (i32, i32) {
    %c0_i32 = arith.constant 0 : i32
    return %arg0, %arg1 : i32, i32
  }
  func.func @transform_5(%arg0: i32, %arg1: i32, %arg2: i32) -> (i32, i32) {
    %c0_i32 = arith.constant 0 : i32
    return %arg0, %arg1 : i32, i32
  }
  func.func @transform_6(%arg0: i32, %arg1: i32, %arg2: i32) -> (i32, i32) {
    %c0_i32 = arith.constant 0 : i32
    return %arg0, %arg1 : i32, i32
  }
}

module attributes {stable_mosaic.version = 11 : i64} {
  func.func @_conv_lif_kernel(%arg0: i32, %arg1: i32, %arg2: i32, %arg3: memref<32x128xbf16, #tpu.memory_space<vmem>>, %arg4: memref<128x128xbf16, #tpu.memory_space<vmem>>, %arg5: memref<1x128xf32, #tpu.memory_space<vmem>>, %arg6: memref<32x128xf32, #tpu.memory_space<vmem>>, %arg7: memref<32x128xf32, #tpu.memory_space<vmem>>, %arg8: memref<32x128xf32, #tpu.memory_space<vmem>>, %arg9: memref<32x128xf32, #tpu.memory_space<vmem>>) attributes {dimension_semantics = [#tpu.dimension_semantics<parallel>, #tpu.dimension_semantics<parallel>, #tpu.dimension_semantics<arbitrary>], iteration_bounds = array<i64: 1, 1, 1>, scalar_prefetch = 0 : i64, scratch_operands = 1 : i64, tpu.core_type = #tpu.core_type<tc>, window_params = [{transform_indices = @transform_0, window_bounds = array<i64: 32, 128>}, {transform_indices = @transform_1, window_bounds = array<i64: 128, 128>}, {transform_indices = @transform_2, window_bounds = array<i64: 1, 128>}, {transform_indices = @transform_3, window_bounds = array<i64: 32, 128>}, {transform_indices = @transform_4, window_bounds = array<i64: 32, 128>}, {transform_indices = @transform_5, window_bounds = array<i64: 32, 128>}]} {
    %c0_i32 = arith.constant 0 : i32
    %0 = arith.cmpi eq, %arg2, %c0_i32 : i32
    %1 = arith.extui %0 : i1 to i32
    %c0_i32_0 = arith.constant 0 : i32
    %2 = arith.cmpi ne, %1, %c0_i32_0 : i32
    scf.if %2 {
      %cst_10 = arith.constant 0.000000e+00 : f32
      %12 = vector.broadcast %cst_10 : f32 to vector<32x128xf32>
      %c0_11 = arith.constant 0 : index
      %c0_12 = arith.constant 0 : index
      %13 = vector.load %arg9[%c0_11, %c0_12] : memref<32x128xf32, #tpu.memory_space<vmem>>, vector<32x128xf32>
      tpu.vector_store %arg9[%c0_11, %c0_12], %12 {strides = array<i32>} : memref<32x128xf32, #tpu.memory_space<vmem>>, vector<32x128xf32>,
    } else {
    }
    %c0 = arith.constant 0 : index
    %c0_1 = arith.constant 0 : index
    %3 = vector.load %arg9[%c0, %c0_1] : memref<32x128xf32, #tpu.memory_space<vmem>>, vector<32x128xf32>
    %c0_2 = arith.constant 0 : index
    %c0_3 = arith.constant 0 : index
    %4 = vector.load %arg3[%c0_2, %c0_3] : memref<32x128xbf16, #tpu.memory_space<vmem>>, vector<32x128xbf16>
    %c0_4 = arith.constant 0 : index
    %c0_5 = arith.constant 0 : index
    %5 = vector.load %arg4[%c0_4, %c0_5] : memref<128x128xbf16, #tpu.memory_space<vmem>>, vector<128x128xbf16>
    %cst = arith.constant dense<0.000000e+00> : vector<32x128xf32>
    %6 = tpu.matmul %4, %5, %cst {dimension_numbers = #tpu.dot_dimension_numbers<[1], [0], [0], [1], [0, 0, 1, 1], [], []>} : vector<32x128xbf16>, vector<128x128xbf16>, vector<32x128xf32> -> vector<32x128xf32>
    %7 = arith.addf %3, %6 : vector<32x128xf32>
    %c0_6 = arith.constant 0 : index
    %c0_7 = arith.constant 0 : index
    %8 = vector.load %arg9[%c0_6, %c0_7] : memref<32x128xf32, #tpu.memory_space<vmem>>, vector<32x128xf32>
    tpu.vector_store %arg9[%c0_6, %c0_7], %7 {strides = array<i32>} : memref<32x128xf32, #tpu.memory_space<vmem>>, vector<32x128xf32>,
    %c0_i32_8 = arith.constant 0 : i32
    %9 = arith.cmpi eq, %arg2, %c0_i32_8 : i32
    %10 = arith.extui %9 : i1 to i32
    %c0_i32_9 = arith.constant 0 : i32
    %11 = arith.cmpi ne, %10, %c0_i32_9 : i32
    scf.if %11 {
      %c0_10 = arith.constant 0 : index
      %c0_11 = arith.constant 0 : index
      %12 = vector.load %arg9[%c0_10, %c0_11] : memref<32x128xf32, #tpu.memory_space<vmem>>, vector<32x128xf32>
      %c0_12 = arith.constant 0 : index
      %c0_13 = arith.constant 0 : index
      %13 = vector.load %arg5[%c0_12, %c0_13] : memref<1x128xf32, #tpu.memory_space<vmem>>, vector<1x128xf32>
      %14 = vector.broadcast %13 : vector<1x128xf32> to vector<32x128xf32>
      %15 = arith.addf %12, %14 : vector<32x128xf32>
      %c0_14 = arith.constant 0 : index
      %c0_15 = arith.constant 0 : index
      %16 = vector.load %arg6[%c0_14, %c0_15] : memref<32x128xf32, #tpu.memory_space<vmem>>, vector<32x128xf32>
      %cst_16 = arith.constant 1.000000e+00 : f32
      %17 = vector.broadcast %cst_16 : f32 to vector<32x128xf32>
      %18 = arith.cmpf ogt, %16, %17 : vector<32x128xf32>
      %cst_17 = arith.constant 1.000000e+00 : f32
      %cst_18 = arith.constant 0.000000e+00 : f32
      %19 = vector.broadcast %cst_17 : f32 to vector<32x128xf32>
      %20 = vector.broadcast %cst_18 : f32 to vector<32x128xf32>
      %21 = arith.select %18, %19, %20 : vector<32x128xi1>, vector<32x128xf32>
      %cst_19 = arith.constant 0.899999976 : f32
      %22 = vector.broadcast %cst_19 : f32 to vector<32x128xf32>
      %23 = arith.mulf %22, %16 : vector<32x128xf32>
      %24 = arith.addf %23, %15 : vector<32x128xf32>
      %25 = arith.subf %24, %21 : vector<32x128xf32>
      %cst_20 = arith.constant 1.000000e+00 : f32
      %26 = vector.broadcast %cst_20 : f32 to vector<32x128xf32>
      %27 = arith.cmpf ogt, %25, %26 : vector<32x128xf32>
      %cst_21 = arith.constant 1.000000e+00 : f32
      %cst_22 = arith.constant 0.000000e+00 : f32
      %28 = vector.broadcast %cst_21 : f32 to vector<32x128xf32>
      %29 = vector.broadcast %cst_22 : f32 to vector<32x128xf32>
      %30 = arith.select %27, %28, %29 : vector<32x128xi1>, vector<32x128xf32>
      %c0_23 = arith.constant 0 : index
      %c0_24 = arith.constant 0 : index
      %31 = vector.load %arg7[%c0_23, %c0_24] : memref<32x128xf32, #tpu.memory_space<vmem>>, vector<32x128xf32>
      tpu.vector_store %arg7[%c0_23, %c0_24], %30 {strides = array<i32>} : memref<32x128xf32, #tpu.memory_space<vmem>>, vector<32x128xf32>,
      %c0_25 = arith.constant 0 : index
      %c0_26 = arith.constant 0 : index
      %32 = vector.load %arg8[%c0_25, %c0_26] : memref<32x128xf32, #tpu.memory_space<vmem>>, vector<32x128xf32>
      tpu.vector_store %arg8[%c0_25, %c0_26], %25 {strides = array<i32>} : memref<32x128xf32, #tpu.memory_space<vmem>>, vector<32x128xf32>,
    } else {
    }
    return
  }
  func.func @transform_0(%arg0: i32, %arg1: i32, %arg2: i32) -> (i32, i32) {
    %c0_i32 = arith.constant 0 : i32
    return %arg0, %arg2 : i32, i32
  }
  func.func @transform_1(%arg0: i32, %arg1: i32, %arg2: i32) -> (i32, i32) {
    %c0_i32 = arith.constant 0 : i32
    return %arg2, %arg1 : i32, i32
  }
  func.func @transform_2(%arg0: i32, %arg1: i32, %arg2: i32) -> (i32, i32) {
    %c0_i32 = arith.constant 0 : i32
    %c0_i32_0 = arith.constant 0 : i32
    return %c0_i32, %arg1 : i32, i32
  }
  func.func @transform_3(%arg0: i32, %arg1: i32, %arg2: i32) -> (i32, i32) {
    %c0_i32 = arith.constant 0 : i32
    return %arg0, %arg1 : i32, i32
  }
  func.func @transform_4(%arg0: i32, %arg1: i32, %arg2: i32) -> (i32, i32) {
    %c0_i32 = arith.constant 0 : i32
    return %arg0, %arg1 : i32, i32
  }
  func.func @transform_5(%arg0: i32, %arg1: i32, %arg2: i32) -> (i32, i32) {
    %c0_i32 = arith.constant 0 : i32
    return %arg0, %arg1 : i32, i32
  }
}

module attributes {stable_mosaic.version = 11 : i64} {
  func.func @_conv_lif_kernel(%arg0: i32, %arg1: i32, %arg2: i32, %arg3: memref<32x640xbf16, #tpu.memory_space<vmem>>, %arg4: memref<640x128xbf16, #tpu.memory_space<vmem>>, %arg5: memref<1x128xf32, #tpu.memory_space<vmem>>, %arg6: memref<32x128xf32, #tpu.memory_space<vmem>>, %arg7: memref<32x128xf32, #tpu.memory_space<vmem>>, %arg8: memref<32x128xf32, #tpu.memory_space<vmem>>, %arg9: memref<32x128xf32, #tpu.memory_space<vmem>>) attributes {dimension_semantics = [#tpu.dimension_semantics<parallel>, #tpu.dimension_semantics<parallel>, #tpu.dimension_semantics<arbitrary>], iteration_bounds = array<i64: 1, 1, 1>, scalar_prefetch = 0 : i64, scratch_operands = 1 : i64, tpu.core_type = #tpu.core_type<tc>, window_params = [{transform_indices = @transform_0, window_bounds = array<i64: 32, 640>}, {transform_indices = @transform_1, window_bounds = array<i64: 640, 128>}, {transform_indices = @transform_2, window_bounds = array<i64: 1, 128>}, {transform_indices = @transform_3, window_bounds = array<i64: 32, 128>}, {transform_indices = @transform_4, window_bounds = array<i64: 32, 128>}, {transform_indices = @transform_5, window_bounds = array<i64: 32, 128>}]} {
    %c0_i32 = arith.constant 0 : i32
    %0 = arith.cmpi eq, %arg2, %c0_i32 : i32
    %1 = arith.extui %0 : i1 to i32
    %c0_i32_0 = arith.constant 0 : i32
    %2 = arith.cmpi ne, %1, %c0_i32_0 : i32
    scf.if %2 {
      %cst_10 = arith.constant 0.000000e+00 : f32
      %12 = vector.broadcast %cst_10 : f32 to vector<32x128xf32>
      %c0_11 = arith.constant 0 : index
      %c0_12 = arith.constant 0 : index
      %13 = vector.load %arg9[%c0_11, %c0_12] : memref<32x128xf32, #tpu.memory_space<vmem>>, vector<32x128xf32>
      tpu.vector_store %arg9[%c0_11, %c0_12], %12 {strides = array<i32>} : memref<32x128xf32, #tpu.memory_space<vmem>>, vector<32x128xf32>,
    } else {
    }
    %c0 = arith.constant 0 : index
    %c0_1 = arith.constant 0 : index
    %3 = vector.load %arg9[%c0, %c0_1] : memref<32x128xf32, #tpu.memory_space<vmem>>, vector<32x128xf32>
    %c0_2 = arith.constant 0 : index
    %c0_3 = arith.constant 0 : index
    %4 = vector.load %arg3[%c0_2, %c0_3] : memref<32x640xbf16, #tpu.memory_space<vmem>>, vector<32x640xbf16>
    %c0_4 = arith.constant 0 : index
    %c0_5 = arith.constant 0 : index
    %5 = vector.load %arg4[%c0_4, %c0_5] : memref<640x128xbf16, #tpu.memory_space<vmem>>, vector<640x128xbf16>
    %cst = arith.constant dense<0.000000e+00> : vector<32x128xf32>
    %6 = tpu.matmul %4, %5, %cst {dimension_numbers = #tpu.dot_dimension_numbers<[1], [0], [0], [1], [0, 0, 1, 1], [], []>} : vector<32x640xbf16>, vector<640x128xbf16>, vector<32x128xf32> -> vector<32x128xf32>
    %7 = arith.addf %3, %6 : vector<32x128xf32>
    %c0_6 = arith.constant 0 : index
    %c0_7 = arith.constant 0 : index
    %8 = vector.load %arg9[%c0_6, %c0_7] : memref<32x128xf32, #tpu.memory_space<vmem>>, vector<32x128xf32>
    tpu.vector_store %arg9[%c0_6, %c0_7], %7 {strides = array<i32>} : memref<32x128xf32, #tpu.memory_space<vmem>>, vector<32x128xf32>,
    %c0_i32_8 = arith.constant 0 : i32
    %9 = arith.cmpi eq, %arg2, %c0_i32_8 : i32
    %10 = arith.extui %9 : i1 to i32
    %c0_i32_9 = arith.constant 0 : i32
    %11 = arith.cmpi ne, %10, %c0_i32_9 : i32
    scf.if %11 {
      %c0_10 = arith.constant 0 : index
      %c0_11 = arith.constant 0 : index
      %12 = vector.load %arg9[%c0_10, %c0_11] : memref<32x128xf32, #tpu.memory_space<vmem>>, vector<32x128xf32>
      %c0_12 = arith.constant 0 : index
      %c0_13 = arith.constant 0 : index
      %13 = vector.load %arg5[%c0_12, %c0_13] : memref<1x128xf32, #tpu.memory_space<vmem>>, vector<1x128xf32>
      %14 = vector.broadcast %13 : vector<1x128xf32> to vector<32x128xf32>
      %15 = arith.addf %12, %14 : vector<32x128xf32>
      %c0_14 = arith.constant 0 : index
      %c0_15 = arith.constant 0 : index
      %16 = vector.load %arg6[%c0_14, %c0_15] : memref<32x128xf32, #tpu.memory_space<vmem>>, vector<32x128xf32>
      %cst_16 = arith.constant 1.000000e+00 : f32
      %17 = vector.broadcast %cst_16 : f32 to vector<32x128xf32>
      %18 = arith.cmpf ogt, %16, %17 : vector<32x128xf32>
      %cst_17 = arith.constant 1.000000e+00 : f32
      %cst_18 = arith.constant 0.000000e+00 : f32
      %19 = vector.broadcast %cst_17 : f32 to vector<32x128xf32>
      %20 = vector.broadcast %cst_18 : f32 to vector<32x128xf32>
      %21 = arith.select %18, %19, %20 : vector<32x128xi1>, vector<32x128xf32>
      %cst_19 = arith.constant 0.899999976 : f32
      %22 = vector.broadcast %cst_19 : f32 to vector<32x128xf32>
      %23 = arith.mulf %22, %16 : vector<32x128xf32>
      %24 = arith.addf %23, %15 : vector<32x128xf32>
      %25 = arith.subf %24, %21 : vector<32x128xf32>
      %cst_20 = arith.constant 1.000000e+00 : f32
      %26 = vector.broadcast %cst_20 : f32 to vector<32x128xf32>
      %27 = arith.cmpf ogt, %25, %26 : vector<32x128xf32>
      %cst_21 = arith.constant 1.000000e+00 : f32
      %cst_22 = arith.constant 0.000000e+00 : f32
      %28 = vector.broadcast %cst_21 : f32 to vector<32x128xf32>
      %29 = vector.broadcast %cst_22 : f32 to vector<32x128xf32>
      %30 = arith.select %27, %28, %29 : vector<32x128xi1>, vector<32x128xf32>
      %c0_23 = arith.constant 0 : index
      %c0_24 = arith.constant 0 : index
      %31 = vector.load %arg7[%c0_23, %c0_24] : memref<32x128xf32, #tpu.memory_space<vmem>>, vector<32x128xf32>
      tpu.vector_store %arg7[%c0_23, %c0_24], %30 {strides = array<i32>} : memref<32x128xf32, #tpu.memory_space<vmem>>, vector<32x128xf32>,
      %c0_25 = arith.constant 0 : index
      %c0_26 = arith.constant 0 : index
      %32 = vector.load %arg8[%c0_25, %c0_26] : memref<32x128xf32, #tpu.memory_space<vmem>>, vector<32x128xf32>
      tpu.vector_store %arg8[%c0_25, %c0_26], %25 {strides = array<i32>} : memref<32x128xf32, #tpu.memory_space<vmem>>, vector<32x128xf32>,
    } else {
    }
    return
  }
  func.func @transform_0(%arg0: i32, %arg1: i32, %arg2: i32) -> (i32, i32) {
    %c0_i32 = arith.constant 0 : i32
    return %arg0, %arg2 : i32, i32
  }
  func.func @transform_1(%arg0: i32, %arg1: i32, %arg2: i32) -> (i32, i32) {
    %c0_i32 = arith.constant 0 : i32
    return %arg2, %arg1 : i32, i32
  }
  func.func @transform_2(%arg0: i32, %arg1: i32, %arg2: i32) -> (i32, i32) {
    %c0_i32 = arith.constant 0 : i32
    %c0_i32_0 = arith.constant 0 : i32
    return %c0_i32, %arg1 : i32, i32
  }
  func.func @transform_3(%arg0: i32, %arg1: i32, %arg2: i32) -> (i32, i32) {
    %c0_i32 = arith.constant 0 : i32
    return %arg0, %arg1 : i32, i32
  }
  func.func @transform_4(%arg0: i32, %arg1: i32, %arg2: i32) -> (i32, i32) {
    %c0_i32 = arith.constant 0 : i32
    return %arg0, %arg1 : i32, i32
  }
  func.func @transform_5(%arg0: i32, %arg1: i32, %arg2: i32) -> (i32, i32) {
    %c0_i32 = arith.constant 0 : i32
    return %arg0, %arg1 : i32, i32
  }
}

module attributes {stable_mosaic.version = 11 : i64} {
  func.func @_conv_lif_kernel(%arg0: i32, %arg1: i32, %arg2: i32, %arg3: memref<8x128xbf16, #tpu.memory_space<vmem>>, %arg4: memref<128x128xbf16, #tpu.memory_space<vmem>>, %arg5: memref<1x128xf32, #tpu.memory_space<vmem>>, %arg6: memref<8x128xf32, #tpu.memory_space<vmem>>, %arg7: memref<8x128xf32, #tpu.memory_space<vmem>>, %arg8: memref<8x128xf32, #tpu.memory_space<vmem>>, %arg9: memref<8x128xf32, #tpu.memory_space<vmem>>) attributes {dimension_semantics = [#tpu.dimension_semantics<parallel>, #tpu.dimension_semantics<parallel>, #tpu.dimension_semantics<arbitrary>], iteration_bounds = array<i64: 1, 1, 1>, scalar_prefetch = 0 : i64, scratch_operands = 1 : i64, tpu.core_type = #tpu.core_type<tc>, window_params = [{transform_indices = @transform_0, window_bounds = array<i64: 8, 128>}, {transform_indices = @transform_1, window_bounds = array<i64: 128, 128>}, {transform_indices = @transform_2, window_bounds = array<i64: 1, 128>}, {transform_indices = @transform_3, window_bounds = array<i64: 8, 128>}, {transform_indices = @transform_4, window_bounds = array<i64: 8, 128>}, {transform_indices = @transform_5, window_bounds = array<i64: 8, 128>}]} {
    %c0_i32 = arith.constant 0 : i32
    %0 = arith.cmpi eq, %arg2, %c0_i32 : i32
    %1 = arith.extui %0 : i1 to i32
    %c0_i32_0 = arith.constant 0 : i32
    %2 = arith.cmpi ne, %1, %c0_i32_0 : i32
    scf.if %2 {
      %cst_10 = arith.constant 0.000000e+00 : f32
      %12 = vector.broadcast %cst_10 : f32 to vector<8x128xf32>
      %c0_11 = arith.constant 0 : index
      %c0_12 = arith.constant 0 : index
      %13 = vector.load %arg9[%c0_11, %c0_12] : memref<8x128xf32, #tpu.memory_space<vmem>>, vector<8x128xf32>
      tpu.vector_store %arg9[%c0_11, %c0_12], %12 {strides = array<i32>} : memref<8x128xf32, #tpu.memory_space<vmem>>, vector<8x128xf32>,
    } else {
    }
    %c0 = arith.constant 0 : index
    %c0_1 = arith.constant 0 : index
    %3 = vector.load %arg9[%c0, %c0_1] : memref<8x128xf32, #tpu.memory_space<vmem>>, vector<8x128xf32>
    %c0_2 = arith.constant 0 : index
    %c0_3 = arith.constant 0 : index
    %4 = vector.load %arg3[%c0_2, %c0_3] : memref<8x128xbf16, #tpu.memory_space<vmem>>, vector<8x128xbf16>
    %c0_4 = arith.constant 0 : index
    %c0_5 = arith.constant 0 : index
    %5 = vector.load %arg4[%c0_4, %c0_5] : memref<128x128xbf16, #tpu.memory_space<vmem>>, vector<128x128xbf16>
    %cst = arith.constant dense<0.000000e+00> : vector<8x128xf32>
    %6 = tpu.matmul %4, %5, %cst {dimension_numbers = #tpu.dot_dimension_numbers<[1], [0], [0], [1], [0, 0, 1, 1], [], []>} : vector<8x128xbf16>, vector<128x128xbf16>, vector<8x128xf32> -> vector<8x128xf32>
    %7 = arith.addf %3, %6 : vector<8x128xf32>
    %c0_6 = arith.constant 0 : index
    %c0_7 = arith.constant 0 : index
    %8 = vector.load %arg9[%c0_6, %c0_7] : memref<8x128xf32, #tpu.memory_space<vmem>>, vector<8x128xf32>
    tpu.vector_store %arg9[%c0_6, %c0_7], %7 {strides = array<i32>} : memref<8x128xf32, #tpu.memory_space<vmem>>, vector<8x128xf32>,
    %c0_i32_8 = arith.constant 0 : i32
    %9 = arith.cmpi eq, %arg2, %c0_i32_8 : i32
    %10 = arith.extui %9 : i1 to i32
    %c0_i32_9 = arith.constant 0 : i32
    %11 = arith.cmpi ne, %10, %c0_i32_9 : i32
    scf.if %11 {
      %c0_10 = arith.constant 0 : index
      %c0_11 = arith.constant 0 : index
      %12 = vector.load %arg9[%c0_10, %c0_11] : memref<8x128xf32, #tpu.memory_space<vmem>>, vector<8x128xf32>
      %c0_12 = arith.constant 0 : index
      %c0_13 = arith.constant 0 : index
      %13 = vector.load %arg5[%c0_12, %c0_13] : memref<1x128xf32, #tpu.memory_space<vmem>>, vector<1x128xf32>
      %14 = vector.broadcast %13 : vector<1x128xf32> to vector<8x128xf32>
      %15 = arith.addf %12, %14 : vector<8x128xf32>
      %c0_14 = arith.constant 0 : index
      %c0_15 = arith.constant 0 : index
      %16 = vector.load %arg6[%c0_14, %c0_15] : memref<8x128xf32, #tpu.memory_space<vmem>>, vector<8x128xf32>
      %cst_16 = arith.constant 1.000000e+00 : f32
      %17 = vector.broadcast %cst_16 : f32 to vector<8x128xf32>
      %18 = arith.cmpf ogt, %16, %17 : vector<8x128xf32>
      %cst_17 = arith.constant 1.000000e+00 : f32
      %cst_18 = arith.constant 0.000000e+00 : f32
      %19 = vector.broadcast %cst_17 : f32 to vector<8x128xf32>
      %20 = vector.broadcast %cst_18 : f32 to vector<8x128xf32>
      %21 = arith.select %18, %19, %20 : vector<8x128xi1>, vector<8x128xf32>
      %cst_19 = arith.constant 0.899999976 : f32
      %22 = vector.broadcast %cst_19 : f32 to vector<8x128xf32>
      %23 = arith.mulf %22, %16 : vector<8x128xf32>
      %24 = arith.addf %23, %15 : vector<8x128xf32>
      %25 = arith.subf %24, %21 : vector<8x128xf32>
      %cst_20 = arith.constant 1.000000e+00 : f32
      %26 = vector.broadcast %cst_20 : f32 to vector<8x128xf32>
      %27 = arith.cmpf ogt, %25, %26 : vector<8x128xf32>
      %cst_21 = arith.constant 1.000000e+00 : f32
      %cst_22 = arith.constant 0.000000e+00 : f32
      %28 = vector.broadcast %cst_21 : f32 to vector<8x128xf32>
      %29 = vector.broadcast %cst_22 : f32 to vector<8x128xf32>
      %30 = arith.select %27, %28, %29 : vector<8x128xi1>, vector<8x128xf32>
      %c0_23 = arith.constant 0 : index
      %c0_24 = arith.constant 0 : index
      %31 = vector.load %arg7[%c0_23, %c0_24] : memref<8x128xf32, #tpu.memory_space<vmem>>, vector<8x128xf32>
      tpu.vector_store %arg7[%c0_23, %c0_24], %30 {strides = array<i32>} : memref<8x128xf32, #tpu.memory_space<vmem>>, vector<8x128xf32>,
      %c0_25 = arith.constant 0 : index
      %c0_26 = arith.constant 0 : index
      %32 = vector.load %arg8[%c0_25, %c0_26] : memref<8x128xf32, #tpu.memory_space<vmem>>, vector<8x128xf32>
      tpu.vector_store %arg8[%c0_25, %c0_26], %25 {strides = array<i32>} : memref<8x128xf32, #tpu.memory_space<vmem>>, vector<8x128xf32>,
    } else {
    }
    return
  }
  func.func @transform_0(%arg0: i32, %arg1: i32, %arg2: i32) -> (i32, i32) {
    %c0_i32 = arith.constant 0 : i32
    return %arg0, %arg2 : i32, i32
  }
  func.func @transform_1(%arg0: i32, %arg1: i32, %arg2: i32) -> (i32, i32) {
    %c0_i32 = arith.constant 0 : i32
    return %arg2, %arg1 : i32, i32
  }
  func.func @transform_2(%arg0: i32, %arg1: i32, %arg2: i32) -> (i32, i32) {
    %c0_i32 = arith.constant 0 : i32
    %c0_i32_0 = arith.constant 0 : i32
    return %c0_i32, %arg1 : i32, i32
  }
  func.func @transform_3(%arg0: i32, %arg1: i32, %arg2: i32) -> (i32, i32) {
    %c0_i32 = arith.constant 0 : i32
    return %arg0, %arg1 : i32, i32
  }
  func.func @transform_4(%arg0: i32, %arg1: i32, %arg2: i32) -> (i32, i32) {
    %c0_i32 = arith.constant 0 : i32
    return %arg0, %arg1 : i32, i32
  }
  func.func @transform_5(%arg0: i32, %arg1: i32, %arg2: i32) -> (i32, i32) {
    %c0_i32 = arith.constant 0 : i32
    return %arg0, %arg1 : i32, i32
  }
}

module attributes {stable_mosaic.version = 11 : i64} {
  func.func @_conv_lif_kernel(%arg0: i32, %arg1: i32, %arg2: i32, %arg3: memref<8x1152xbf16, #tpu.memory_space<vmem>>, %arg4: memref<1152x128xbf16, #tpu.memory_space<vmem>>, %arg5: memref<1x128xf32, #tpu.memory_space<vmem>>, %arg6: memref<8x128xf32, #tpu.memory_space<vmem>>, %arg7: memref<8x128xf32, #tpu.memory_space<vmem>>, %arg8: memref<8x128xf32, #tpu.memory_space<vmem>>, %arg9: memref<8x128xf32, #tpu.memory_space<vmem>>, %arg10: memref<8x128xf32, #tpu.memory_space<vmem>>) attributes {dimension_semantics = [#tpu.dimension_semantics<parallel>, #tpu.dimension_semantics<parallel>, #tpu.dimension_semantics<arbitrary>], iteration_bounds = array<i64: 1, 1, 1>, scalar_prefetch = 0 : i64, scratch_operands = 1 : i64, tpu.core_type = #tpu.core_type<tc>, window_params = [{transform_indices = @transform_0, window_bounds = array<i64: 8, 1152>}, {transform_indices = @transform_1, window_bounds = array<i64: 1152, 128>}, {transform_indices = @transform_2, window_bounds = array<i64: 1, 128>}, {transform_indices = @transform_3, window_bounds = array<i64: 8, 128>}, {transform_indices = @transform_4, window_bounds = array<i64: 8, 128>}, {transform_indices = @transform_5, window_bounds = array<i64: 8, 128>}, {transform_indices = @transform_6, window_bounds = array<i64: 8, 128>}]} {
    %c0_i32 = arith.constant 0 : i32
    %0 = arith.cmpi eq, %arg2, %c0_i32 : i32
    %1 = arith.extui %0 : i1 to i32
    %c0_i32_0 = arith.constant 0 : i32
    %2 = arith.cmpi ne, %1, %c0_i32_0 : i32
    scf.if %2 {
      %cst_10 = arith.constant 0.000000e+00 : f32
      %12 = vector.broadcast %cst_10 : f32 to vector<8x128xf32>
      %c0_11 = arith.constant 0 : index
      %c0_12 = arith.constant 0 : index
      %13 = vector.load %arg10[%c0_11, %c0_12] : memref<8x128xf32, #tpu.memory_space<vmem>>, vector<8x128xf32>
      tpu.vector_store %arg10[%c0_11, %c0_12], %12 {strides = array<i32>} : memref<8x128xf32, #tpu.memory_space<vmem>>, vector<8x128xf32>,
    } else {
    }
    %c0 = arith.constant 0 : index
    %c0_1 = arith.constant 0 : index
    %3 = vector.load %arg10[%c0, %c0_1] : memref<8x128xf32, #tpu.memory_space<vmem>>, vector<8x128xf32>
    %c0_2 = arith.constant 0 : index
    %c0_3 = arith.constant 0 : index
    %4 = vector.load %arg3[%c0_2, %c0_3] : memref<8x1152xbf16, #tpu.memory_space<vmem>>, vector<8x1152xbf16>
    %c0_4 = arith.constant 0 : index
    %c0_5 = arith.constant 0 : index
    %5 = vector.load %arg4[%c0_4, %c0_5] : memref<1152x128xbf16, #tpu.memory_space<vmem>>, vector<1152x128xbf16>
    %cst = arith.constant dense<0.000000e+00> : vector<8x128xf32>
    %6 = tpu.matmul %4, %5, %cst {dimension_numbers = #tpu.dot_dimension_numbers<[1], [0], [0], [1], [0, 0, 1, 1], [], []>} : vector<8x1152xbf16>, vector<1152x128xbf16>, vector<8x128xf32> -> vector<8x128xf32>
    %7 = arith.addf %3, %6 : vector<8x128xf32>
    %c0_6 = arith.constant 0 : index
    %c0_7 = arith.constant 0 : index
    %8 = vector.load %arg10[%c0_6, %c0_7] : memref<8x128xf32, #tpu.memory_space<vmem>>, vector<8x128xf32>
    tpu.vector_store %arg10[%c0_6, %c0_7], %7 {strides = array<i32>} : memref<8x128xf32, #tpu.memory_space<vmem>>, vector<8x128xf32>,
    %c0_i32_8 = arith.constant 0 : i32
    %9 = arith.cmpi eq, %arg2, %c0_i32_8 : i32
    %10 = arith.extui %9 : i1 to i32
    %c0_i32_9 = arith.constant 0 : i32
    %11 = arith.cmpi ne, %10, %c0_i32_9 : i32
    scf.if %11 {
      %c0_10 = arith.constant 0 : index
      %c0_11 = arith.constant 0 : index
      %12 = vector.load %arg10[%c0_10, %c0_11] : memref<8x128xf32, #tpu.memory_space<vmem>>, vector<8x128xf32>
      %c0_12 = arith.constant 0 : index
      %c0_13 = arith.constant 0 : index
      %13 = vector.load %arg5[%c0_12, %c0_13] : memref<1x128xf32, #tpu.memory_space<vmem>>, vector<1x128xf32>
      %14 = vector.broadcast %13 : vector<1x128xf32> to vector<8x128xf32>
      %15 = arith.addf %12, %14 : vector<8x128xf32>
      %c0_14 = arith.constant 0 : index
      %c0_15 = arith.constant 0 : index
      %16 = vector.load %arg7[%c0_14, %c0_15] : memref<8x128xf32, #tpu.memory_space<vmem>>, vector<8x128xf32>
      %cst_16 = arith.constant 1.000000e+00 : f32
      %17 = vector.broadcast %cst_16 : f32 to vector<8x128xf32>
      %18 = arith.cmpf ogt, %16, %17 : vector<8x128xf32>
      %cst_17 = arith.constant 1.000000e+00 : f32
      %cst_18 = arith.constant 0.000000e+00 : f32
      %19 = vector.broadcast %cst_17 : f32 to vector<8x128xf32>
      %20 = vector.broadcast %cst_18 : f32 to vector<8x128xf32>
      %21 = arith.select %18, %19, %20 : vector<8x128xi1>, vector<8x128xf32>
      %cst_19 = arith.constant 0.899999976 : f32
      %22 = vector.broadcast %cst_19 : f32 to vector<8x128xf32>
      %23 = arith.mulf %22, %16 : vector<8x128xf32>
      %24 = arith.addf %23, %15 : vector<8x128xf32>
      %25 = arith.subf %24, %21 : vector<8x128xf32>
      %cst_20 = arith.constant 1.000000e+00 : f32
      %26 = vector.broadcast %cst_20 : f32 to vector<8x128xf32>
      %27 = arith.cmpf ogt, %25, %26 : vector<8x128xf32>
      %cst_21 = arith.constant 1.000000e+00 : f32
      %cst_22 = arith.constant 0.000000e+00 : f32
      %28 = vector.broadcast %cst_21 : f32 to vector<8x128xf32>
      %29 = vector.broadcast %cst_22 : f32 to vector<8x128xf32>
      %30 = arith.select %27, %28, %29 : vector<8x128xi1>, vector<8x128xf32>
      %c0_23 = arith.constant 0 : index
      %c0_24 = arith.constant 0 : index
      %31 = vector.load %arg6[%c0_23, %c0_24] : memref<8x128xf32, #tpu.memory_space<vmem>>, vector<8x128xf32>
      %32 = arith.addf %30, %31 : vector<8x128xf32>
      %c0_25 = arith.constant 0 : index
      %c0_26 = arith.constant 0 : index
      %33 = vector.load %arg8[%c0_25, %c0_26] : memref<8x128xf32, #tpu.memory_space<vmem>>, vector<8x128xf32>
      tpu.vector_store %arg8[%c0_25, %c0_26], %32 {strides = array<i32>} : memref<8x128xf32, #tpu.memory_space<vmem>>, vector<8x128xf32>,
      %c0_27 = arith.constant 0 : index
      %c0_28 = arith.constant 0 : index
      %34 = vector.load %arg9[%c0_27, %c0_28] : memref<8x128xf32, #tpu.memory_space<vmem>>, vector<8x128xf32>
      tpu.vector_store %arg9[%c0_27, %c0_28], %25 {strides = array<i32>} : memref<8x128xf32, #tpu.memory_space<vmem>>, vector<8x128xf32>,
    } else {
    }
    return
  }
  func.func @transform_0(%arg0: i32, %arg1: i32, %arg2: i32) -> (i32, i32) {
    %c0_i32 = arith.constant 0 : i32
    return %arg0, %arg2 : i32, i32
  }
  func.func @transform_1(%arg0: i32, %arg1: i32, %arg2: i32) -> (i32, i32) {
    %c0_i32 = arith.constant 0 : i32
    return %arg2, %arg1 : i32, i32
  }
  func.func @transform_2(%arg0: i32, %arg1: i32, %arg2: i32) -> (i32, i32) {
    %c0_i32 = arith.constant 0 : i32
    %c0_i32_0 = arith.constant 0 : i32
    return %c0_i32, %arg1 : i32, i32
  }
  func.func @transform_3(%arg0: i32, %arg1: i32, %arg2: i32) -> (i32, i32) {
    %c0_i32 = arith.constant 0 : i32
    return %arg0, %arg1 : i32, i32
  }
  func.func @transform_4(%arg0: i32, %arg1: i32, %arg2: i32) -> (i32, i32) {
    %c0_i32 = arith.constant 0 : i32
    return %arg0, %arg1 : i32, i32
  }
  func.func @transform_5(%arg0: i32, %arg1: i32, %arg2: i32) -> (i32, i32) {
    %c0_i32 = arith.constant 0 : i32
    return %arg0, %arg1 : i32, i32
  }
  func.func @transform_6(%arg0: i32, %arg1: i32, %arg2: i32) -> (i32, i32) {
    %c0_i32 = arith.constant 0 : i32
    return %arg0, %arg1 : i32, i32
  }
}

module attributes {stable_mosaic.version = 11 : i64} {
  func.func @_tail_kernel(%arg0: memref<2x4x128xf32, #tpu.memory_space<vmem>>, %arg1: memref<128x32xf32, #tpu.memory_space<vmem>>, %arg2: memref<1x32xf32, #tpu.memory_space<vmem>>, %arg3: memref<32x10xf32, #tpu.memory_space<vmem>>, %arg4: memref<2x32xf32, #tpu.memory_space<vmem>>, %arg5: memref<2x10xf32, #tpu.memory_space<vmem>>, %arg6: memref<2x10xf32, #tpu.memory_space<vmem>>, %arg7: memref<2x32xf32, #tpu.memory_space<vmem>>) attributes {dimension_semantics = [], scalar_prefetch = 0 : i64, scratch_operands = 0 : i64, tpu.core_type = #tpu.core_type<tc>} {
    %c0 = arith.constant 0 : index
    %c0_0 = arith.constant 0 : index
    %c0_1 = arith.constant 0 : index
    %0 = vector.load %arg0[%c0, %c0_0, %c0_1] : memref<2x4x128xf32, #tpu.memory_space<vmem>>, vector<2x4x128xf32>
    %cst = arith.constant dense<0.000000e+00> : vector<2x128xf32>
    %1 = vector.multi_reduction <add>, %0, %cst [1] : vector<2x4x128xf32> to vector<2x128xf32>
    %cst_2 = arith.constant 4.000000e+00 : f32
    %2 = vector.broadcast %cst_2 : f32 to vector<2x128xf32>
    %3 = arith.divf %1, %2 : vector<2x128xf32>
    %c0_3 = arith.constant 0 : index
    %c0_4 = arith.constant 0 : index
    %4 = vector.load %arg1[%c0_3, %c0_4] : memref<128x32xf32, #tpu.memory_space<vmem>>, vector<128x32xf32>
    %cst_5 = arith.constant dense<0.000000e+00> : vector<2x32xf32>
    %5 = tpu.matmul %3, %4, %cst_5 {dimension_numbers = #tpu.dot_dimension_numbers<[1], [0], [0], [1], [0, 0, 1, 1], [], []>} : vector<2x128xf32>, vector<128x32xf32>, vector<2x32xf32> -> vector<2x32xf32>
    %c0_6 = arith.constant 0 : index
    %c0_7 = arith.constant 0 : index
    %6 = vector.load %arg2[%c0_6, %c0_7] : memref<1x32xf32, #tpu.memory_space<vmem>>, vector<1x32xf32>
    %7 = vector.broadcast %6 : vector<1x32xf32> to vector<2x32xf32>
    %8 = arith.addf %5, %7 : vector<2x32xf32>
    %c0_8 = arith.constant 0 : index
    %c0_9 = arith.constant 0 : index
    %9 = vector.load %arg4[%c0_8, %c0_9] : memref<2x32xf32, #tpu.memory_space<vmem>>, vector<2x32xf32>
    %cst_10 = arith.constant 1.000000e+00 : f32
    %10 = vector.broadcast %cst_10 : f32 to vector<2x32xf32>
    %11 = arith.cmpf ogt, %9, %10 : vector<2x32xf32>
    %cst_11 = arith.constant 1.000000e+00 : f32
    %cst_12 = arith.constant 0.000000e+00 : f32
    %12 = vector.broadcast %cst_11 : f32 to vector<2x32xf32>
    %13 = vector.broadcast %cst_12 : f32 to vector<2x32xf32>
    %14 = arith.select %11, %12, %13 : vector<2x32xi1>, vector<2x32xf32>
    %cst_13 = arith.constant 0.899999976 : f32
    %15 = vector.broadcast %cst_13 : f32 to vector<2x32xf32>
    %16 = arith.mulf %15, %9 : vector<2x32xf32>
    %17 = arith.addf %16, %8 : vector<2x32xf32>
    %18 = arith.subf %17, %14 : vector<2x32xf32>
    %cst_14 = arith.constant 1.000000e+00 : f32
    %19 = vector.broadcast %cst_14 : f32 to vector<2x32xf32>
    %20 = arith.cmpf ogt, %18, %19 : vector<2x32xf32>
    %cst_15 = arith.constant 1.000000e+00 : f32
    %cst_16 = arith.constant 0.000000e+00 : f32
    %21 = vector.broadcast %cst_15 : f32 to vector<2x32xf32>
    %22 = vector.broadcast %cst_16 : f32 to vector<2x32xf32>
    %23 = arith.select %20, %21, %22 : vector<2x32xi1>, vector<2x32xf32>
    %c0_17 = arith.constant 0 : index
    %c0_18 = arith.constant 0 : index
    %24 = vector.load %arg7[%c0_17, %c0_18] : memref<2x32xf32, #tpu.memory_space<vmem>>, vector<2x32xf32>
    tpu.vector_store %arg7[%c0_17, %c0_18], %18 {strides = array<i32>} : memref<2x32xf32, #tpu.memory_space<vmem>>, vector<2x32xf32>,
    %c0_19 = arith.constant 0 : index
    %c0_20 = arith.constant 0 : index
    %25 = vector.load %arg5[%c0_19, %c0_20] : memref<2x10xf32, #tpu.memory_space<vmem>>, vector<2x10xf32>
    %c0_21 = arith.constant 0 : index
    %c0_22 = arith.constant 0 : index
    %26 = vector.load %arg3[%c0_21, %c0_22] : memref<32x10xf32, #tpu.memory_space<vmem>>, vector<32x10xf32>
    %cst_23 = arith.constant dense<0.000000e+00> : vector<2x10xf32>
    %27 = tpu.matmul %23, %26, %cst_23 {dimension_numbers = #tpu.dot_dimension_numbers<[1], [0], [0], [1], [0, 0, 1, 1], [], []>} : vector<2x32xf32>, vector<32x10xf32>, vector<2x10xf32> -> vector<2x10xf32>
    %28 = arith.addf %25, %27 : vector<2x10xf32>
    %c0_24 = arith.constant 0 : index
    %c0_25 = arith.constant 0 : index
    %29 = vector.load %arg6[%c0_24, %c0_25] : memref<2x10xf32, #tpu.memory_space<vmem>>, vector<2x10xf32>
    tpu.vector_store %arg6[%c0_24, %c0_25], %28 {strides = array<i32>} : memref<2x10xf32, #tpu.memory_space<vmem>>, vector<2x10xf32>,
    return
  }
}

</mosaic_0001>

<llo_original>
// kernel: _lambda_.24
$region0: #{_lambda_.24}
  #allocation0 [shape = 'u32[]', space=smem, size = 0x4, offset = 0x4, fixed_abs, tag = 'smem constant byte address 0x4 - core index']
  #allocation1 [shape = 'u32[144,128]{1,0:T(1,128)}', space=vmem, size = 0x12000, scoped, tag = 'internal scratch']
  #allocation2 [shape = 'f32[128,128]{1,0:T(8,128)}', space=vmem, size = 0x10000, scoped, tag = 'scratch operand']
  %s0 = inlined_call_operand.vmem [shape: bf16[128,256], index: 0, kind: input, shape index: {}]
  %s1 = inlined_call_operand.vmem [shape: bf16[256,128], index: 1, kind: input, shape index: {}]
  %s2 = inlined_call_operand.vmem [shape: f32[1,128], index: 2, kind: input, shape index: {}]
  %s3 = inlined_call_operand.vmem [shape: f32[128,128], index: 3, kind: input, shape index: {}, may-alias: {3,5}]
  %s4 = inlined_call_operand.vmem [shape: f32[128,128], index: 4, kind: output, shape index: {0}]
  %s5 = inlined_call_operand.vmem [shape: f32[128,128], index: 5, kind: output, shape index: {1}, may-alias: {3,5}]
  %6 = xla_tuple %s4, %s5
  %s7 = sld [smem:[#allocation0]]
  $region42: #{_lambda_.24} parent=0
    _
  %s9 = ssub.s32 1, %s7
  %s10 = scalar_select 0, %s9, %s7
  // Predicated region
  $region2: #{_lambda_.24} parent=0 // pred_check
    _
  $region3: #{_lambda_.24} parent=0 // pred_check_branch
    %12 = sbr.rel (0) target = $region5
  $region4: #{_lambda_.24} parent=0 // pred_region
    _
  $region5: #{_lambda_.24} parent=0 // pred_fallthru
    _
  // Predicated region
  $region6: #{_lambda_.24} parent=0 // pred_check
    _
  $region7: #{_lambda_.24} parent=0 // pred_check_branch
    %14 = sbr.rel (0) target = $region9
  $region8: #{_lambda_.24} parent=0 // pred_region
    _
  $region9: #{_lambda_.24} parent=0 // pred_fallthru
    _
  // Predicated region
  $region10: #{_lambda_.24} parent=0 // pred_check
    _
  $region11: #{_lambda_.24} parent=0 // pred_check_branch
    %16 = sbr.rel (0) target = $region13
  $region12: #{_lambda_.24} parent=0 // pred_region
    _
  $region13: #{_lambda_.24} parent=0 // pred_fallthru
    _
  // Predicated region
  $region14: #{_lambda_.24} parent=0 // pred_check
    _
  $region15: #{_lambda_.24} parent=0 // pred_check_branch
    %18 = sbr.rel (0) target = $region17
  $region16: #{_lambda_.24} parent=0 // pred_region
    _
  $region17: #{_lambda_.24} parent=0 // pred_fallthru
    _
  %p20 = scmp.eq.s32.totalorder 0, 0
  // Predicated region
  $region18: #{_lambda_.24} parent=0 // pred_check
    %p21 = pneg %p20
  $region19: #{_lambda_.24} parent=0 // pred_check_branch
    %23 = sbr.rel (%p21) target = $region21
  $region20: #{_lambda_.24} parent=0 // pred_region
    %24 = vst [vmem:[#allocation2] sm:$0xff] 0.0
    %25 = vst [vmem:[#allocation2 + $0x8] sm:$0xff] 0.0
    %26 = vst [vmem:[#allocation2 + $0x10] sm:$0xff] 0.0
    %27 = vst [vmem:[#allocation2 + $0x18] sm:$0xff] 0.0
    %28 = vst [vmem:[#allocation2 + $0x20] sm:$0xff] 0.0
    %29 = vst [vmem:[#allocation2 + $0x28] sm:$0xff] 0.0
    %30 = vst [vmem:[#allocation2 + $0x30] sm:$0xff] 0.0
    %31 = vst [vmem:[#allocation2 + $0x38] sm:$0xff] 0.0
    %32 = vst [vmem:[#allocation2 + $0x40] sm:$0xff] 0.0
    %33 = vst [vmem:[#allocation2 + $0x48] sm:$0xff] 0.0
    %34 = vst [vmem:[#allocation2 + $0x50] sm:$0xff] 0.0
    %35 = vst [vmem:[#allocation2 + $0x58] sm:$0xff] 0.0
    %36 = vst [vmem:[#allocation2 + $0x60] sm:$0xff] 0.0
    %37 = vst [vmem:[#allocation2 + $0x68] sm:$0xff] 0.0
    %38 = vst [vmem:[#allocation2 + $0x70] sm:$0xff] 0.0
    %39 = vst [vmem:[#allocation2 + $0x78] sm:$0xff] 0.0
  $region21: #{_lambda_.24} parent=0 // pred_fallthru
    _
  %v40 = vld [vmem:[#allocation2] sm:$0xff]
  %v41 = vld [vmem:[#allocation2 + $0x8] sm:$0xff]
  %v42 = vld [vmem:[#allocation2 + $0x10] sm:$0xff]
  %v43 = vld [vmem:[#allocation2 + $0x18] sm:$0xff]
  %v44 = vld [vmem:[#allocation2 + $0x20] sm:$0xff]
  %v45 = vld [vmem:[#allocation2 + $0x28] sm:$0xff]
  %v46 = vld [vmem:[#allocation2 + $0x30] sm:$0xff]
  %v47 = vld [vmem:[#allocation2 + $0x38] sm:$0xff]
  %v48 = vld [vmem:[#allocation2 + $0x40] sm:$0xff]
  %v49 = vld [vmem:[#allocation2 + $0x48] sm:$0xff]
  %v50 = vld [vmem:[#allocation2 + $0x50] sm:$0xff]
  %v51 = vld [vmem:[#allocation2 + $0x58] sm:$0xff]
  %v52 = vld [vmem:[#allocation2 + $0x60] sm:$0xff]
  %v53 = vld [vmem:[#allocation2 + $0x68] sm:$0xff]
  %v54 = vld [vmem:[#allocation2 + $0x70] sm:$0xff]
  %v55 = vld [vmem:[#allocation2 + $0x78] sm:$0xff]
  %v56 = vld [vmem:[%s0] sm:$0xff]
  %v57 = vld [vmem:[%s0 + $0x8] sm:$0xff]
  %v58 = vld [vmem:[%s0 + $0x10] sm:$0xff]
  %v59 = vld [vmem:[%s0 + $0x18] sm:$0xff]
  %v60 = vld [vmem:[%s0 + $0x20] sm:$0xff]
  %v61 = vld [vmem:[%s0 + $0x28] sm:$0xff]
  %v62 = vld [vmem:[%s0 + $0x30] sm:$0xff]
  %v63 = vld [vmem:[%s0 + $0x38] sm:$0xff]
  %v64 = vld [vmem:[%s0 + $0x40] sm:$0xff]
  %v65 = vld [vmem:[%s0 + $0x48] sm:$0xff]
  %v66 = vld [vmem:[%s0 + $0x50] sm:$0xff]
  %v67 = vld [vmem:[%s0 + $0x58] sm:$0xff]
  %v68 = vld [vmem:[%s0 + $0x60] sm:$0xff]
  %v69 = vld [vmem:[%s0 + $0x68] sm:$0xff]
  %v70 = vld [vmem:[%s0 + $0x70] sm:$0xff]
  %v71 = vld [vmem:[%s0 + $0x78] sm:$0xff]
  %v72 = vld [vmem:[%s1] sm:$0xf]
  %v73 = vld [vmem:[%s1 + $0x4] sm:$0xf]
  %v74 = vld [vmem:[%s1 + $0x8] sm:$0xf]
  %v75 = vld [vmem:[%s1 + $0xc] sm:$0xf]
  %v76 = vld [vmem:[%s1 + $0x10] sm:$0xf]
  %v77 = vld [vmem:[%s1 + $0x14] sm:$0xf]
  %v78 = vld [vmem:[%s1 + $0x18] sm:$0xf]
  %v79 = vld [vmem:[%s1 + $0x1c] sm:$0xf]
  %v80 = vld [vmem:[%s1 + $0x20] sm:$0xf]
  %v81 = vld [vmem:[%s1 + $0x24] sm:$0xf]
  %v82 = vld [vmem:[%s1 + $0x28] sm:$0xf]
  %v83 = vld [vmem:[%s1 + $0x2c] sm:$0xf]
  %v84 = vld [vmem:[%s1 + $0x30] sm:$0xf]
  %v85 = vld [vmem:[%s1 + $0x34] sm:$0xf]
  %v86 = vld [vmem:[%s1 + $0x38] sm:$0xf]
  %v87 = vld [vmem:[%s1 + $0x3c] sm:$0xf]
  %v88 = vld [vmem:[%s1 + $0x40] sm:$0xf]
  %v89 = vld [vmem:[%s1 + $0x44] sm:$0xf]
  %v90 = vld [vmem:[%s1 + $0x48] sm:$0xf]
  %v91 = vld [vmem:[%s1 + $0x4c] sm:$0xf]
  %v92 = vld [vmem:[%s1 + $0x50] sm:$0xf]
  %v93 = vld [vmem:[%s1 + $0x54] sm:$0xf]
  %v94 = vld [vmem:[%s1 + $0x58] sm:$0xf]
  %v95 = vld [vmem:[%s1 + $0x5c] sm:$0xf]
  %v96 = vld [vmem:[%s1 + $0x60] sm:$0xf]
  %v97 = vld [vmem:[%s1 + $0x64] sm:$0xf]
  %v98 = vld [vmem:[%s1 + $0x68] sm:$0xf]
  %v99 = vld [vmem:[%s1 + $0x6c] sm:$0xf]
  %v100 = vld [vmem:[%s1 + $0x70] sm:$0xf]
  %v101 = vld [vmem:[%s1 + $0x74] sm:$0xf]
  %v102 = vld [vmem:[%s1 + $0x78] sm:$0xf]
  %v103 = vld [vmem:[%s1 + $0x7c] sm:$0xf]
  %v120 = vunpack.c.l.b16 %v56
  %v121 = vunpack.c.h.b16 %v56
  %v122 = vunpack.c.l.b16 %v57
  %v123 = vunpack.c.h.b16 %v57
  %v124 = vunpack.c.l.b16 %v58
  %v125 = vunpack.c.h.b16 %v58
  %v126 = vunpack.c.l.b16 %v59
  %v127 = vunpack.c.h.b16 %v59
  %v128 = vunpack.c.l.b16 %v60
  %v129 = vunpack.c.h.b16 %v60
  %v130 = vunpack.c.l.b16 %v61
  %v131 = vunpack.c.h.b16 %v61
  %v132 = vunpack.c.l.b16 %v62
  %v133 = vunpack.c.h.b16 %v62
  %v134 = vunpack.c.l.b16 %v63
  %v135 = vunpack.c.h.b16 %v63
  %v136 = vunpack.c.l.b16 %v64
  %v137 = vunpack.c.h.b16 %v64
  %v138 = vunpack.c.l.b16 %v65
  %v139 = vunpack.c.h.b16 %v65
  %v140 = vunpack.c.l.b16 %v66
  %v141 = vunpack.c.h.b16 %v66
  %v142 = vunpack.c.l.b16 %v67
  %v143 = vunpack.c.h.b16 %v67
  %v144 = vunpack.c.l.b16 %v68
  %v145 = vunpack.c.h.b16 %v68
  %v146 = vunpack.c.l.b16 %v69
  %v147 = vunpack.c.h.b16 %v69
  %v148 = vunpack.c.l.b16 %v70
  %v149 = vunpack.c.h.b16 %v70
  %v150 = vunpack.c.l.b16 %v71
  %v151 = vunpack.c.h.b16 %v71
  %v152 = vpack.c.b16 %v122, %v120
  %v153 = vpack.c.b16 %v123, %v121
  %v154 = vpack.c.b16 %v126, %v124
  %v155 = vpack.c.b16 %v127, %v125
  %v156 = vpack.c.b16 %v130, %v128
  %v157 = vpack.c.b16 %v131, %v129
  %v158 = vpack.c.b16 %v134, %v132
  %v159 = vpack.c.b16 %v135, %v133
  %v160 = vpack.c.b16 %v138, %v136
  %v161 = vpack.c.b16 %v139, %v137
  %v162 = vpack.c.b16 %v142, %v140
  %v163 = vpack.c.b16 %v143, %v141
  %v164 = vpack.c.b16 %v146, %v144
  %v165 = vpack.c.b16 %v147, %v145
  %v166 = vpack.c.b16 %v150, %v148
  %v167 = vpack.c.b16 %v151, %v149
  %v216 = vunpack.c.l.b16 %v72
  %v217 = vunpack.c.l.b16 %v73
  %v218 = vunpack.c.l.b16 %v74
  %v219 = vunpack.c.l.b16 %v75
  %v220 = vunpack.c.l.b16 %v76
  %v221 = vunpack.c.l.b16 %v77
  %v222 = vunpack.c.l.b16 %v78
  %v223 = vunpack.c.l.b16 %v79
  %v224 = vunpack.c.l.b16 %v80
  %v225 = vunpack.c.l.b16 %v81
  %v226 = vunpack.c.l.b16 %v82
  %v227 = vunpack.c.l.b16 %v83
  %v228 = vunpack.c.l.b16 %v84
  %v229 = vunpack.c.l.b16 %v85
  %v230 = vunpack.c.l.b16 %v86
  %v231 = vunpack.c.l.b16 %v87
  %v232 = vunpack.c.l.b16 %v88
  %v233 = vunpack.c.l.b16 %v89
  %v234 = vunpack.c.l.b16 %v90
  %v235 = vunpack.c.l.b16 %v91
  %v236 = vunpack.c.l.b16 %v92
  %v237 = vunpack.c.l.b16 %v93
  %v238 = vunpack.c.l.b16 %v94
  %v239 = vunpack.c.l.b16 %v95
  %v240 = vunpack.c.l.b16 %v96
  %v241 = vunpack.c.l.b16 %v97
  %v242 = vunpack.c.l.b16 %v98
  %v243 = vunpack.c.l.b16 %v99
  %v244 = vunpack.c.l.b16 %v100
  %v245 = vunpack.c.l.b16 %v101
  %v246 = vunpack.c.l.b16 %v102
  %v247 = vunpack.c.l.b16 %v103
  %v248 = vpack.c.b16 %v217, %v216
  %v249 = vpack.c.b16 %v219, %v218
  %v250 = vpack.c.b16 %v221, %v220
  %v251 = vpack.c.b16 %v223, %v222
  %v252 = vpack.c.b16 %v225, %v224
  %v253 = vpack.c.b16 %v227, %v226
  %v254 = vpack.c.b16 %v229, %v228
  %v255 = vpack.c.b16 %v231, %v230
  %v256 = vpack.c.b16 %v233, %v232
  %v257 = vpack.c.b16 %v235, %v234
  %v258 = vpack.c.b16 %v237, %v236
  %v259 = vpack.c.b16 %v239, %v238
  %v260 = vpack.c.b16 %v241, %v240
  %v261 = vpack.c.b16 %v243, %v242
  %v262 = vpack.c.b16 %v245, %v244
  %v263 = vpack.c.b16 %v247, %v246
  %280 = vmatprep.subr.bf16.mxu0 0
  %281 = vmatpush1.bf16.msra.mxu0 %v255
  %282 = vmatprep.subr.bf16.mxu0 0
  %283 = vmatpush1.bf16.msra.mxu0 %v254
  %284 = vmatprep.subr.bf16.mxu0 0
  %285 = vmatpush1.bf16.msra.mxu0 %v253
  %286 = vmatprep.subr.bf16.mxu0 0
  %287 = vmatpush1.bf16.msra.mxu0 %v252
  %288 = vmatprep.subr.bf16.mxu0 0
  %289 = vmatpush1.bf16.msra.mxu0 %v251
  %290 = vmatprep.subr.bf16.mxu0 0
  %291 = vmatpush1.bf16.msra.mxu0 %v250
  %292 = vmatprep.subr.bf16.mxu0 0
  %293 = vmatpush1.bf16.msra.mxu0 %v249
  %294 = vmatprep.subr.bf16.mxu0 0
  %295 = vmatpush1.bf16.msra.mxu0 %v248
  %296 = vmatprep.subr.bf16.mxu0 0
  %297 = vmatpush2.bf16.msra.mxu0 %v263
  %298 = vmatprep.subr.bf16.mxu0 0
  %299 = vmatpush2.bf16.msra.mxu0 %v262
  %300 = vmatprep.subr.bf16.mxu0 0
  %301 = vmatpush2.bf16.msra.mxu0 %v261
  %302 = vmatprep.subr.bf16.mxu0 0
  %303 = vmatpush2.bf16.msra.mxu0 %v260
  %304 = vmatprep.subr.bf16.mxu0 0
  %305 = vmatpush2.bf16.msra.mxu0 %v259
  %306 = vmatprep.subr.bf16.mxu0 0
  %307 = vmatpush2.bf16.msra.mxu0 %v258
  %308 = vmatprep.subr.bf16.mxu0 0
  %309 = vmatpush2.bf16.msra.mxu0 %v257
  %310 = vmatprep.subr.bf16.mxu0 0
  %311 = vmatpush2.bf16.msra.mxu0 %v256
  %312 = vmatprep.mubr.bf16.mxu0 %v153
  %313 = vmatmul.mubr.bf16.gmra.mxu0 %v152
  %v314 = vpop.f32.mrf.mxu0
  %v315 = vadd.f32 0.0, %v314
  %v316 = vpop.f32.mrf.mxu0
  %v317 = vpop.f32.mrf.mxu0
  %v318 = vadd.f32 0.0, %v317
  %v319 = vpop.f32.mrf.mxu0
  %320 = vmatprep.mubr.bf16.mxu0 %v155
  %321 = vmatmul.mubr.bf16.gmra.mxu0 %v154
  %v322 = vpop.f32.mrf.mxu0
  %v323 = vadd.f32 0.0, %v322
  %v324 = vpop.f32.mrf.mxu0
  %v325 = vpop.f32.mrf.mxu0
  %v326 = vadd.f32 0.0, %v325
  %v327 = vpop.f32.mrf.mxu0
  %328 = vmatprep.mubr.bf16.mxu0 %v157
  %329 = vmatmul.mubr.bf16.gmra.mxu0 %v156
  %v330 = vpop.f32.mrf.mxu0
  %v331 = vadd.f32 0.0, %v330
  %v332 = vpop.f32.mrf.mxu0
  %v333 = vpop.f32.mrf.mxu0
  %v334 = vadd.f32 0.0, %v333
  %v335 = vpop.f32.mrf.mxu0
  %336 = vmatprep.mubr.bf16.mxu0 %v159
  %337 = vmatmul.mubr.bf16.gmra.mxu0 %v158
  %v338 = vpop.f32.mrf.mxu0
  %v339 = vadd.f32 0.0, %v338
  %v340 = vpop.f32.mrf.mxu0
  %v341 = vpop.f32.mrf.mxu0
  %v342 = vadd.f32 0.0, %v341
  %v343 = vpop.f32.mrf.mxu0
  %344 = vmatprep.mubr.bf16.mxu0 %v161
  %345 = vmatmul.mubr.bf16.gmra.mxu0 %v160
  %v346 = vpop.f32.mrf.mxu0
  %v347 = vadd.f32 0.0, %v346
  %v348 = vpop.f32.mrf.mxu0
  %v349 = vpop.f32.mrf.mxu0
  %v350 = vadd.f32 0.0, %v349
  %v351 = vpop.f32.mrf.mxu0
  %352 = vmatprep.mubr.bf16.mxu0 %v163
  %353 = vmatmul.mubr.bf16.gmra.mxu0 %v162
  %v354 = vpop.f32.mrf.mxu0
  %v355 = vadd.f32 0.0, %v354
  %v356 = vpop.f32.mrf.mxu0
  %v357 = vpop.f32.mrf.mxu0
  %v358 = vadd.f32 0.0, %v357
  %v359 = vpop.f32.mrf.mxu0
  %360 = vmatprep.mubr.bf16.mxu0 %v165
  %361 = vmatmul.mubr.bf16.gmra.mxu0 %v164
  %v362 = vpop.f32.mrf.mxu0
  %v363 = vadd.f32 0.0, %v362
  %v364 = vpop.f32.mrf.mxu0
  %v365 = vpop.f32.mrf.mxu0
  %v366 = vadd.f32 0.0, %v365
  %v367 = vpop.f32.mrf.mxu0
  %368 = vmatprep.mubr.bf16.mxu0 %v167
  %369 = vmatmul.mubr.bf16.gmra.mxu0 %v166
  %v370 = vpop.f32.mrf.mxu0
  %v371 = vadd.f32 0.0, %v370
  %v372 = vpop.f32.mrf.mxu0
  %v373 = vpop.f32.mrf.mxu0
  %v374 = vadd.f32 0.0, %v373
  %v375 = vpop.f32.mrf.mxu0
  %376 = vdwg.mxu0
  %v377 = vadd.f32 %v40, %v315
  %v378 = vadd.f32 %v41, %v318
  %v379 = vadd.f32 %v42, %v323
  %v380 = vadd.f32 %v43, %v326
  %v381 = vadd.f32 %v44, %v331
  %v382 = vadd.f32 %v45, %v334
  %v383 = vadd.f32 %v46, %v339
  %v384 = vadd.f32 %v47, %v342
  %v385 = vadd.f32 %v48, %v347
  %v386 = vadd.f32 %v49, %v350
  %v387 = vadd.f32 %v50, %v355
  %v388 = vadd.f32 %v51, %v358
  %v389 = vadd.f32 %v52, %v363
  %v390 = vadd.f32 %v53, %v366
  %v391 = vadd.f32 %v54, %v371
  %v392 = vadd.f32 %v55, %v374
  %393 = vst [vmem:[#allocation2] sm:$0xff] %v377
  %394 = vst [vmem:[#allocation2 + $0x8] sm:$0xff] %v378
  %395 = vst [vmem:[#allocation2 + $0x10] sm:$0xff] %v379
  %396 = vst [vmem:[#allocation2 + $0x18] sm:$0xff] %v380
  %397 = vst [vmem:[#allocation2 + $0x20] sm:$0xff] %v381
  %398 = vst [vmem:[#allocation2 + $0x28] sm:$0xff] %v382
  %399 = vst [vmem:[#allocation2 + $0x30] sm:$0xff] %v383
  %400 = vst [vmem:[#allocation2 + $0x38] sm:$0xff] %v384
  %401 = vst [vmem:[#allocation2 + $0x40] sm:$0xff] %v385
  %402 = vst [vmem:[#allocation2 + $0x48] sm:$0xff] %v386
  %403 = vst [vmem:[#allocation2 + $0x50] sm:$0xff] %v387
  %404 = vst [vmem:[#allocation2 + $0x58] sm:$0xff] %v388
  %405 = vst [vmem:[#allocation2 + $0x60] sm:$0xff] %v389
  %406 = vst [vmem:[#allocation2 + $0x68] sm:$0xff] %v390
  %407 = vst [vmem:[#allocation2 + $0x70] sm:$0xff] %v391
  %408 = vst [vmem:[#allocation2 + $0x78] sm:$0xff] %v392
  // Predicated region
  $region22: #{_lambda_.24} parent=0 // pred_check
    %p409 = pneg %p20
  $region23: #{_lambda_.24} parent=0 // pred_check_branch
    %411 = sbr.rel (%p409) target = $region25
  $region24: #{_lambda_.24} parent=0 // pred_region
    %v412 = vld [vmem:[#allocation2] sm:$0xff]
    %v413 = vld [vmem:[#allocation2 + $0x8] sm:$0xff]
    %v414 = vld [vmem:[#allocation2 + $0x10] sm:$0xff]
    %v415 = vld [vmem:[#allocation2 + $0x18] sm:$0xff]
    %v416 = vld [vmem:[#allocation2 + $0x20] sm:$0xff]
    %v417 = vld [vmem:[#allocation2 + $0x28] sm:$0xff]
    %v418 = vld [vmem:[#allocation2 + $0x30] sm:$0xff]
    %v419 = vld [vmem:[#allocation2 + $0x38] sm:$0xff]
    %v420 = vld [vmem:[#allocation2 + $0x40] sm:$0xff]
    %v421 = vld [vmem:[#allocation2 + $0x48] sm:$0xff]
    %v422 = vld [vmem:[#allocation2 + $0x50] sm:$0xff]
    %v423 = vld [vmem:[#allocation2 + $0x58] sm:$0xff]
    %v424 = vld [vmem:[#allocation2 + $0x60] sm:$0xff]
    %v425 = vld [vmem:[#allocation2 + $0x68] sm:$0xff]
    %v426 = vld [vmem:[#allocation2 + $0x70] sm:$0xff]
    %v427 = vld [vmem:[#allocation2 + $0x78] sm:$0xff]
    %v428 = vld [vmem:[%s2] sm:$0x1]
    %v430 = vlaneseq
    %v431 = vshrl.u32 %v430, 7
    %v432 = vsub.s32 0, %v431
    %v433 = vrot.slane %v428, %v432
    %v435 = vadd.f32 %v412, %v433
    %v436 = vadd.f32 %v413, %v433
    %v437 = vadd.f32 %v414, %v433
    %v438 = vadd.f32 %v415, %v433
    %v439 = vadd.f32 %v416, %v433
    %v440 = vadd.f32 %v417, %v433
    %v441 = vadd.f32 %v418, %v433
    %v442 = vadd.f32 %v419, %v433
    %v443 = vadd.f32 %v420, %v433
    %v444 = vadd.f32 %v421, %v433
    %v445 = vadd.f32 %v422, %v433
    %v446 = vadd.f32 %v423, %v433
    %v447 = vadd.f32 %v424, %v433
    %v448 = vadd.f32 %v425, %v433
    %v449 = vadd.f32 %v426, %v433
    %v450 = vadd.f32 %v427, %v433
    %v451 = vld [vmem:[%s3] sm:$0xff]
    %v452 = vld [vmem:[%s3 + $0x8] sm:$0xff]
    %v453 = vld [vmem:[%s3 + $0x10] sm:$0xff]
    %v454 = vld [vmem:[%s3 + $0x18] sm:$0xff]
    %v455 = vld [vmem:[%s3 + $0x20] sm:$0xff]
    %v456 = vld [vmem:[%s3 + $0x28] sm:$0xff]
    %v457 = vld [vmem:[%s3 + $0x30] sm:$0xff]
    %v458 = vld [vmem:[%s3 + $0x38] sm:$0xff]
    %v459 = vld [vmem:[%s3 + $0x40] sm:$0xff]
    %v460 = vld [vmem:[%s3 + $0x48] sm:$0xff]
    %v461 = vld [vmem:[%s3 + $0x50] sm:$0xff]
    %v462 = vld [vmem:[%s3 + $0x58] sm:$0xff]
    %v463 = vld [vmem:[%s3 + $0x60] sm:$0xff]
    %v464 = vld [vmem:[%s3 + $0x68] sm:$0xff]
    %v465 = vld [vmem:[%s3 + $0x70] sm:$0xff]
    %v466 = vld [vmem:[%s3 + $0x78] sm:$0xff]
    %vm467 = vcmp.gt.f32.partialorder %v451, 1.0
    %vm468 = vcmp.gt.f32.partialorder %v452, 1.0
    %vm469 = vcmp.gt.f32.partialorder %v453, 1.0
    %vm470 = vcmp.gt.f32.partialorder %v454, 1.0
    %vm471 = vcmp.gt.f32.partialorder %v455, 1.0
    %vm472 = vcmp.gt.f32.partialorder %v456, 1.0
    %vm473 = vcmp.gt.f32.partialorder %v457, 1.0
    %vm474 = vcmp.gt.f32.partialorder %v458, 1.0
    %vm475 = vcmp.gt.f32.partialorder %v459, 1.0
    %vm476 = vcmp.gt.f32.partialorder %v460, 1.0
    %vm477 = vcmp.gt.f32.partialorder %v461, 1.0
    %vm478 = vcmp.gt.f32.partialorder %v462, 1.0
    %vm479 = vcmp.gt.f32.partialorder %v463, 1.0
    %vm480 = vcmp.gt.f32.partialorder %v464, 1.0
    %vm481 = vcmp.gt.f32.partialorder %v465, 1.0
    %vm482 = vcmp.gt.f32.partialorder %v466, 1.0
    %v483 = vsel %vm467, 1.0, 0.0
    %v484 = vsel %vm468, 1.0, 0.0
    %v485 = vsel %vm469, 1.0, 0.0
    %v486 = vsel %vm470, 1.0, 0.0
    %v487 = vsel %vm471, 1.0, 0.0
    %v488 = vsel %vm472, 1.0, 0.0
    %v489 = vsel %vm473, 1.0, 0.0
    %v490 = vsel %vm474, 1.0, 0.0
    %v491 = vsel %vm475, 1.0, 0.0
    %v492 = vsel %vm476, 1.0, 0.0
    %v493 = vsel %vm477, 1.0, 0.0
    %v494 = vsel %vm478, 1.0, 0.0
    %v495 = vsel %vm479, 1.0, 0.0
    %v496 = vsel %vm480, 1.0, 0.0
    %v497 = vsel %vm481, 1.0, 0.0
    %v498 = vsel %vm482, 1.0, 0.0
    %v499 = vmul.f32 %v451, 0.9
    %v500 = vmul.f32 %v452, 0.9
    %v501 = vmul.f32 %v453, 0.9
    %v502 = vmul.f32 %v454, 0.9
    %v503 = vmul.f32 %v455, 0.9
    %v504 = vmul.f32 %v456, 0.9
    %v505 = vmul.f32 %v457, 0.9
    %v506 = vmul.f32 %v458, 0.9
    %v507 = vmul.f32 %v459, 0.9
    %v508 = vmul.f32 %v460, 0.9
    %v509 = vmul.f32 %v461, 0.9
    %v510 = vmul.f32 %v462, 0.9
    %v511 = vmul.f32 %v463, 0.9
    %v512 = vmul.f32 %v464, 0.9
    %v513 = vmul.f32 %v465, 0.9
    %v514 = vmul.f32 %v466, 0.9
    %v515 = vadd.f32 %v499, %v435
    %v516 = vadd.f32 %v500, %v436
    %v517 = vadd.f32 %v501, %v437
    %v518 = vadd.f32 %v502, %v438
    %v519 = vadd.f32 %v503, %v439
    %v520 = vadd.f32 %v504, %v440
    %v521 = vadd.f32 %v505, %v441
    %v522 = vadd.f32 %v506, %v442
    %v523 = vadd.f32 %v507, %v443
    %v524 = vadd.f32 %v508, %v444
    %v525 = vadd.f32 %v509, %v445
    %v526 = vadd.f32 %v510, %v446
    %v527 = vadd.f32 %v511, %v447
    %v528 = vadd.f32 %v512, %v448
    %v529 = vadd.f32 %v513, %v449
    %v530 = vadd.f32 %v514, %v450
    %v531 = vsub.f32 %v515, %v483
    %v532 = vsub.f32 %v516, %v484
    %v533 = vsub.f32 %v517, %v485
    %v534 = vsub.f32 %v518, %v486
    %v535 = vsub.f32 %v519, %v487
    %v536 = vsub.f32 %v520, %v488
    %v537 = vsub.f32 %v521, %v489
    %v538 = vsub.f32 %v522, %v490
    %v539 = vsub.f32 %v523, %v491
    %v540 = vsub.f32 %v524, %v492
    %v541 = vsub.f32 %v525, %v493
    %v542 = vsub.f32 %v526, %v494
    %v543 = vsub.f32 %v527, %v495
    %v544 = vsub.f32 %v528, %v496
    %v545 = vsub.f32 %v529, %v497
    %v546 = vsub.f32 %v530, %v498
    %vm547 = vcmp.gt.f32.partialorder %v531, 1.0
    %vm548 = vcmp.gt.f32.partialorder %v532, 1.0
    %vm549 = vcmp.gt.f32.partialorder %v533, 1.0
    %vm550 = vcmp.gt.f32.partialorder %v534, 1.0
    %vm551 = vcmp.gt.f32.partialorder %v535, 1.0
    %vm552 = vcmp.gt.f32.partialorder %v536, 1.0
    %vm553 = vcmp.gt.f32.partialorder %v537, 1.0
    %vm554 = vcmp.gt.f32.partialorder %v538, 1.0
    %vm555 = vcmp.gt.f32.partialorder %v539, 1.0
    %vm556 = vcmp.gt.f32.partialorder %v540, 1.0
    %vm557 = vcmp.gt.f32.partialorder %v541, 1.0
    %vm558 = vcmp.gt.f32.partialorder %v542, 1.0
    %vm559 = vcmp.gt.f32.partialorder %v543, 1.0
    %vm560 = vcmp.gt.f32.partialorder %v544, 1.0
    %vm561 = vcmp.gt.f32.partialorder %v545, 1.0
    %vm562 = vcmp.gt.f32.partialorder %v546, 1.0
    %v563 = vsel %vm547, 1.0, 0.0
    %v564 = vsel %vm548, 1.0, 0.0
    %v565 = vsel %vm549, 1.0, 0.0
    %v566 = vsel %vm550, 1.0, 0.0
    %v567 = vsel %vm551, 1.0, 0.0
    %v568 = vsel %vm552, 1.0, 0.0
    %v569 = vsel %vm553, 1.0, 0.0
    %v570 = vsel %vm554, 1.0, 0.0
    %v571 = vsel %vm555, 1.0, 0.0
    %v572 = vsel %vm556, 1.0, 0.0
    %v573 = vsel %vm557, 1.0, 0.0
    %v574 = vsel %vm558, 1.0, 0.0
    %v575 = vsel %vm559, 1.0, 0.0
    %v576 = vsel %vm560, 1.0, 0.0
    %v577 = vsel %vm561, 1.0, 0.0
    %v578 = vsel %vm562, 1.0, 0.0
    %579 = vst [vmem:[%s4] sm:$0xff] %v563
    %580 = vst [vmem:[%s4 + $0x8] sm:$0xff] %v564
    %581 = vst [vmem:[%s4 + $0x10] sm:$0xff] %v565
    %582 = vst [vmem:[%s4 + $0x18] sm:$0xff] %v566
    %583 = vst [vmem:[%s4 + $0x20] sm:$0xff] %v567
    %584 = vst [vmem:[%s4 + $0x28] sm:$0xff] %v568
    %585 = vst [vmem:[%s4 + $0x30] sm:$0xff] %v569
    %586 = vst [vmem:[%s4 + $0x38] sm:$0xff] %v570
    %587 = vst [vmem:[%s4 + $0x40] sm:$0xff] %v571
    %588 = vst [vmem:[%s4 + $0x48] sm:$0xff] %v572
    %589 = vst [vmem:[%s4 + $0x50] sm:$0xff] %v573
    %590 = vst [vmem:[%s4 + $0x58] sm:$0xff] %v574
    %591 = vst [vmem:[%s4 + $0x60] sm:$0xff] %v575
    %592 = vst [vmem:[%s4 + $0x68] sm:$0xff] %v576
    %593 = vst [vmem:[%s4 + $0x70] sm:$0xff] %v577
    %594 = vst [vmem:[%s4 + $0x78] sm:$0xff] %v578
    %595 = vst [vmem:[%s5] sm:$0xff] %v531
    %596 = vst [vmem:[%s5 + $0x8] sm:$0xff] %v532
    %597 = vst [vmem:[%s5 + $0x10] sm:$0xff] %v533
    %598 = vst [vmem:[%s5 + $0x18] sm:$0xff] %v534
    %599 = vst [vmem:[%s5 + $0x20] sm:$0xff] %v535
    %600 = vst [vmem:[%s5 + $0x28] sm:$0xff] %v536
    %601 = vst [vmem:[%s5 + $0x30] sm:$0xff] %v537
    %602 = vst [vmem:[%s5 + $0x38] sm:$0xff] %v538
    %603 = vst [vmem:[%s5 + $0x40] sm:$0xff] %v539
    %604 = vst [vmem:[%s5 + $0x48] sm:$0xff] %v540
    %605 = vst [vmem:[%s5 + $0x50] sm:$0xff] %v541
    %606 = vst [vmem:[%s5 + $0x58] sm:$0xff] %v542
    %607 = vst [vmem:[%s5 + $0x60] sm:$0xff] %v543
    %608 = vst [vmem:[%s5 + $0x68] sm:$0xff] %v544
    %609 = vst [vmem:[%s5 + $0x70] sm:$0xff] %v545
    %610 = vst [vmem:[%s5 + $0x78] sm:$0xff] %v546
  $region25: #{_lambda_.24} parent=0 // pred_fallthru
    _
  // Predicated region
  $region26: #{_lambda_.24} parent=0 // pred_check
    _
  $region27: #{_lambda_.24} parent=0 // pred_check_branch
    %612 = sbr.rel (0) target = $region29
  $region28: #{_lambda_.24} parent=0 // pred_region
    _
  $region29: #{_lambda_.24} parent=0 // pred_fallthru
    _
  // Predicated region
  $region30: #{_lambda_.24} parent=0 // pred_check
    _
  $region31: #{_lambda_.24} parent=0 // pred_check_branch
    %614 = sbr.rel (0) target = $region33
  $region32: #{_lambda_.24} parent=0 // pred_region
    _
  $region33: #{_lambda_.24} parent=0 // pred_fallthru
    _
  // Predicated region
  $region34: #{_lambda_.24} parent=0 // pred_check
    _
  $region35: #{_lambda_.24} parent=0 // pred_check_branch
    %616 = sbr.rel (0) target = $region37
  $region36: #{_lambda_.24} parent=0 // pred_region
    _
  $region37: #{_lambda_.24} parent=0 // pred_fallthru
    _
  // Predicated region
  $region38: #{_lambda_.24} parent=0 // pred_check
    _
  $region39: #{_lambda_.24} parent=0 // pred_check_branch
    %618 = sbr.rel (0) target = $region41
  $region40: #{_lambda_.24} parent=0 // pred_region
    _
  $region41: #{_lambda_.24} parent=0 // pred_fallthru
    _

// kernel: _lambda_.26
$region0: #{_lambda_.26}
  #allocation0 [shape = 'u32[]', space=smem, size = 0x4, offset = 0x4, fixed_abs, tag = 'smem constant byte address 0x4 - core index']
  #allocation1 [shape = 'u32[144,128]{1,0:T(1,128)}', space=vmem, size = 0x12000, scoped, tag = 'internal scratch']
  #allocation2 [shape = 'f32[128,128]{1,0:T(8,128)}', space=vmem, size = 0x10000, scoped, tag = 'scratch operand']
  %s0 = inlined_call_operand.vmem [shape: bf16[128,640], index: 0, kind: input, shape index: {}]
  %s1 = inlined_call_operand.vmem [shape: bf16[640,128], index: 1, kind: input, shape index: {}]
  %s2 = inlined_call_operand.vmem [shape: f32[1,128], index: 2, kind: input, shape index: {}]
  %s3 = inlined_call_operand.vmem [shape: f32[128,128], index: 3, kind: input, shape index: {}, may-alias: {3,5}]
  %s4 = inlined_call_operand.vmem [shape: f32[128,128], index: 4, kind: output, shape index: {0}]
  %s5 = inlined_call_operand.vmem [shape: f32[128,128], index: 5, kind: output, shape index: {1}, may-alias: {3,5}]
  %6 = xla_tuple %s4, %s5
  %s7 = sld [smem:[#allocation0]]
  $region42: #{_lambda_.26} parent=0
    _
  %s9 = ssub.s32 1, %s7
  %s10 = scalar_select 0, %s9, %s7
  // Predicated region
  $region2: #{_lambda_.26} parent=0 // pred_check
    _
  $region3: #{_lambda_.26} parent=0 // pred_check_branch
    %12 = sbr.rel (0) target = $region5
  $region4: #{_lambda_.26} parent=0 // pred_region
    _
  $region5: #{_lambda_.26} parent=0 // pred_fallthru
    _
  // Predicated region
  $region6: #{_lambda_.26} parent=0 // pred_check
    _
  $region7: #{_lambda_.26} parent=0 // pred_check_branch
    %14 = sbr.rel (0) target = $region9
  $region8: #{_lambda_.26} parent=0 // pred_region
    _
  $region9: #{_lambda_.26} parent=0 // pred_fallthru
    _
  // Predicated region
  $region10: #{_lambda_.26} parent=0 // pred_check
    _
  $region11: #{_lambda_.26} parent=0 // pred_check_branch
    %16 = sbr.rel (0) target = $region13
  $region12: #{_lambda_.26} parent=0 // pred_region
    _
  $region13: #{_lambda_.26} parent=0 // pred_fallthru
    _
  // Predicated region
  $region14: #{_lambda_.26} parent=0 // pred_check
    _
  $region15: #{_lambda_.26} parent=0 // pred_check_branch
    %18 = sbr.rel (0) target = $region17
  $region16: #{_lambda_.26} parent=0 // pred_region
    _
  $region17: #{_lambda_.26} parent=0 // pred_fallthru
    _
  %p20 = scmp.eq.s32.totalorder 0, 0
  // Predicated region
  $region18: #{_lambda_.26} parent=0 // pred_check
    %p21 = pneg %p20
  $region19: #{_lambda_.26} parent=0 // pred_check_branch
    %23 = sbr.rel (%p21) target = $region21
  $region20: #{_lambda_.26} parent=0 // pred_region
    %24 = vst [vmem:[#allocation2] sm:$0xff] 0.0
    %25 = vst [vmem:[#allocation2 + $0x8] sm:$0xff] 0.0
    %26 = vst [vmem:[#allocation2 + $0x10] sm:$0xff] 0.0
    %27 = vst [vmem:[#allocation2 + $0x18] sm:$0xff] 0.0
    %28 = vst [vmem:[#allocation2 + $0x20] sm:$0xff] 0.0
    %29 = vst [vmem:[#allocation2 + $0x28] sm:$0xff] 0.0
    %30 = vst [vmem:[#allocation2 + $0x30] sm:$0xff] 0.0
    %31 = vst [vmem:[#allocation2 + $0x38] sm:$0xff] 0.0
    %32 = vst [vmem:[#allocation2 + $0x40] sm:$0xff] 0.0
    %33 = vst [vmem:[#allocation2 + $0x48] sm:$0xff] 0.0
    %34 = vst [vmem:[#allocation2 + $0x50] sm:$0xff] 0.0
    %35 = vst [vmem:[#allocation2 + $0x58] sm:$0xff] 0.0
    %36 = vst [vmem:[#allocation2 + $0x60] sm:$0xff] 0.0
    %37 = vst [vmem:[#allocation2 + $0x68] sm:$0xff] 0.0
    %38 = vst [vmem:[#allocation2 + $0x70] sm:$0xff] 0.0
    %39 = vst [vmem:[#allocation2 + $0x78] sm:$0xff] 0.0
  $region21: #{_lambda_.26} parent=0 // pred_fallthru
    _
  %v40 = vld [vmem:[#allocation2] sm:$0xff]
  %v41 = vld [vmem:[#allocation2 + $0x8] sm:$0xff]
  %v42 = vld [vmem:[#allocation2 + $0x10] sm:$0xff]
  %v43 = vld [vmem:[#allocation2 + $0x18] sm:$0xff]
  %v44 = vld [vmem:[#allocation2 + $0x20] sm:$0xff]
  %v45 = vld [vmem:[#allocation2 + $0x28] sm:$0xff]
  %v46 = vld [vmem:[#allocation2 + $0x30] sm:$0xff]
  %v47 = vld [vmem:[#allocation2 + $0x38] sm:$0xff]
  %v48 = vld [vmem:[#allocation2 + $0x40] sm:$0xff]
  %v49 = vld [vmem:[#allocation2 + $0x48] sm:$0xff]
  %v50 = vld [vmem:[#allocation2 + $0x50] sm:$0xff]
  %v51 = vld [vmem:[#allocation2 + $0x58] sm:$0xff]
  %v52 = vld [vmem:[#allocation2 + $0x60] sm:$0xff]
  %v53 = vld [vmem:[#allocation2 + $0x68] sm:$0xff]
  %v54 = vld [vmem:[#allocation2 + $0x70] sm:$0xff]
  %v55 = vld [vmem:[#allocation2 + $0x78] sm:$0xff]
  %v56 = vld [vmem:[%s0] sm:$0xff]
  %v57 = vld [vmem:[%s0 + $0x8] sm:$0xff]
  %v58 = vld [vmem:[%s0 + $0x10] sm:$0xf]
  %v59 = vld [vmem:[%s0 + $0x14] sm:$0xff]
  %v60 = vld [vmem:[%s0 + $0x1c] sm:$0xff]
  %v61 = vld [vmem:[%s0 + $0x24] sm:$0xf]
  %v62 = vld [vmem:[%s0 + $0x28] sm:$0xff]
  %v63 = vld [vmem:[%s0 + $0x30] sm:$0xff]
  %v64 = vld [vmem:[%s0 + $0x38] sm:$0xf]
  %v65 = vld [vmem:[%s0 + $0x3c] sm:$0xff]
  %v66 = vld [vmem:[%s0 + $0x44] sm:$0xff]
  %v67 = vld [vmem:[%s0 + $0x4c] sm:$0xf]
  %v68 = vld [vmem:[%s0 + $0x50] sm:$0xff]
  %v69 = vld [vmem:[%s0 + $0x58] sm:$0xff]
  %v70 = vld [vmem:[%s0 + $0x60] sm:$0xf]
  %v71 = vld [vmem:[%s0 + $0x64] sm:$0xff]
  %v72 = vld [vmem:[%s0 + $0x6c] sm:$0xff]
  %v73 = vld [vmem:[%s0 + $0x74] sm:$0xf]
  %v74 = vld [vmem:[%s0 + $0x78] sm:$0xff]
  %v75 = vld [vmem:[%s0 + $0x80] sm:$0xff]
  %v76 = vld [vmem:[%s0 + $0x88] sm:$0xf]
  %v77 = vld [vmem:[%s0 + $0x8c] sm:$0xff]
  %v78 = vld [vmem:[%s0 + $0x94] sm:$0xff]
  %v79 = vld [vmem:[%s0 + $0x9c] sm:$0xf]
  %v80 = vld [vmem:[%s0 + $0xa0] sm:$0xff]
  %v81 = vld [vmem:[%s0 + $0xa8] sm:$0xff]
  %v82 = vld [vmem:[%s0 + $0xb0] sm:$0xf]
  %v83 = vld [vmem:[%s0 + $0xb4] sm:$0xff]
  %v84 = vld [vmem:[%s0 + $0xbc] sm:$0xff]
  %v85 = vld [vmem:[%s0 + $0xc4] sm:$0xf]
  %v86 = vld [vmem:[%s0 + $0xc8] sm:$0xff]
  %v87 = vld [vmem:[%s0 + $0xd0] sm:$0xff]
  %v88 = vld [vmem:[%s0 + $0xd8] sm:$0xf]
  %v89 = vld [vmem:[%s0 + $0xdc] sm:$0xff]
  %v90 = vld [vmem:[%s0 + $0xe4] sm:$0xff]
  %v91 = vld [vmem:[%s0 + $0xec] sm:$0xf]
  %v92 = vld [vmem:[%s0 + $0xf0] sm:$0xff]
  %v93 = vld [vmem:[%s0 + $0xf8] sm:$0xff]
  %v94 = vld [vmem:[%s0 + $0x100] sm:$0xf]
  %v95 = vld [vmem:[%s0 + $0x104] sm:$0xff]
  %v96 = vld [vmem:[%s0 + $0x10c] sm:$0xff]
  %v97 = vld [vmem:[%s0 + $0x114] sm:$0xf]
  %v98 = vld [vmem:[%s0 + $0x118] sm:$0xff]
  %v99 = vld [vmem:[%s0 + $0x120] sm:$0xff]
  %v100 = vld [vmem:[%s0 + $0x128] sm:$0xf]
  %v101 = vld [vmem:[%s0 + $0x12c] sm:$0xff]
  %v102 = vld [vmem:[%s0 + $0x134] sm:$0xff]
  %v103 = vld [vmem:[%s0 + $0x13c] sm:$0xf]
  %v104 = vld [vmem:[%s1] sm:$0xf]
  %v105 = vld [vmem:[%s1 + $0x4] sm:$0xf]
  %v106 = vld [vmem:[%s1 + $0x8] sm:$0xf]
  %v107 = vld [vmem:[%s1 + $0xc] sm:$0xf]
  %v108 = vld [vmem:[%s1 + $0x10] sm:$0xf]
  %v109 = vld [vmem:[%s1 + $0x14] sm:$0xf]
  %v110 = vld [vmem:[%s1 + $0x18] sm:$0xf]
  %v111 = vld [vmem:[%s1 + $0x1c] sm:$0xf]
  %v112 = vld [vmem:[%s1 + $0x20] sm:$0xf]
  %v113 = vld [vmem:[%s1 + $0x24] sm:$0xf]
  %v114 = vld [vmem:[%s1 + $0x28] sm:$0xf]
  %v115 = vld [vmem:[%s1 + $0x2c] sm:$0xf]
  %v116 = vld [vmem:[%s1 + $0x30] sm:$0xf]
  %v117 = vld [vmem:[%s1 + $0x34] sm:$0xf]
  %v118 = vld [vmem:[%s1 + $0x38] sm:$0xf]
  %v119 = vld [vmem:[%s1 + $0x3c] sm:$0xf]
  %v120 = vld [vmem:[%s1 + $0x40] sm:$0xf]
  %v121 = vld [vmem:[%s1 + $0x44] sm:$0xf]
  %v122 = vld [vmem:[%s1 + $0x48] sm:$0xf]
  %v123 = vld [vmem:[%s1 + $0x4c] sm:$0xf]
  %v124 = vld [vmem:[%s1 + $0x50] sm:$0xf]
  %v125 = vld [vmem:[%s1 + $0x54] sm:$0xf]
  %v126 = vld [vmem:[%s1 + $0x58] sm:$0xf]
  %v127 = vld [vmem:[%s1 + $0x5c] sm:$0xf]
  %v128 = vld [vmem:[%s1 + $0x60] sm:$0xf]
  %v129 = vld [vmem:[%s1 + $0x64] sm:$0xf]
  %v130 = vld [vmem:[%s1 + $0x68] sm:$0xf]
  %v131 = vld [vmem:[%s1 + $0x6c] sm:$0xf]
  %v132 = vld [vmem:[%s1 + $0x70] sm:$0xf]
  %v133 = vld [vmem:[%s1 + $0x74] sm:$0xf]
  %v134 = vld [vmem:[%s1 + $0x78] sm:$0xf]
  %v135 = vld [vmem:[%s1 + $0x7c] sm:$0xf]
  %v136 = vld [vmem:[%s1 + $0x80] sm:$0xf]
  %v137 = vld [vmem:[%s1 + $0x84] sm:$0xf]
  %v138 = vld [vmem:[%s1 + $0x88] sm:$0xf]
  %v139 = vld [vmem:[%s1 + $0x8c] sm:$0xf]
  %v140 = vld [vmem:[%s1 + $0x90] sm:$0xf]
  %v141 = vld [vmem:[%s1 + $0x94] sm:$0xf]
  %v142 = vld [vmem:[%s1 + $0x98] sm:$0xf]
  %v143 = vld [vmem:[%s1 + $0x9c] sm:$0xf]
  %v144 = vld [vmem:[%s1 + $0xa0] sm:$0xf]
  %v145 = vld [vmem:[%s1 + $0xa4] sm:$0xf]
  %v146 = vld [vmem:[%s1 + $0xa8] sm:$0xf]
  %v147 = vld [vmem:[%s1 + $0xac] sm:$0xf]
  %v148 = vld [vmem:[%s1 + $0xb0] sm:$0xf]
  %v149 = vld [vmem:[%s1 + $0xb4] sm:$0xf]
  %v150 = vld [vmem:[%s1 + $0xb8] sm:$0xf]
  %v151 = vld [vmem:[%s1 + $0xbc] sm:$0xf]
  %v152 = vld [vmem:[%s1 + $0xc0] sm:$0xf]
  %v153 = vld [vmem:[%s1 + $0xc4] sm:$0xf]
  %v154 = vld [vmem:[%s1 + $0xc8] sm:$0xf]
  %v155 = vld [vmem:[%s1 + $0xcc] sm:$0xf]
  %v156 = vld [vmem:[%s1 + $0xd0] sm:$0xf]
  %v157 = vld [vmem:[%s1 + $0xd4] sm:$0xf]
  %v158 = vld [vmem:[%s1 + $0xd8] sm:$0xf]
  %v159 = vld [vmem:[%s1 + $0xdc] sm:$0xf]
  %v160 = vld [vmem:[%s1 + $0xe0] sm:$0xf]
  %v161 = vld [vmem:[%s1 + $0xe4] sm:$0xf]
  %v162 = vld [vmem:[%s1 + $0xe8] sm:$0xf]
  %v163 = vld [vmem:[%s1 + $0xec] sm:$0xf]
  %v164 = vld [vmem:[%s1 + $0xf0] sm:$0xf]
  %v165 = vld [vmem:[%s1 + $0xf4] sm:$0xf]
  %v166 = vld [vmem:[%s1 + $0xf8] sm:$0xf]
  %v167 = vld [vmem:[%s1 + $0xfc] sm:$0xf]
  %v168 = vld [vmem:[%s1 + $0x100] sm:$0xf]
  %v169 = vld [vmem:[%s1 + $0x104] sm:$0xf]
  %v170 = vld [vmem:[%s1 + $0x108] sm:$0xf]
  %v171 = vld [vmem:[%s1 + $0x10c] sm:$0xf]
  %v172 = vld [vmem:[%s1 + $0x110] sm:$0xf]
  %v173 = vld [vmem:[%s1 + $0x114] sm:$0xf]
  %v174 = vld [vmem:[%s1 + $0x118] sm:$0xf]
  %v175 = vld [vmem:[%s1 + $0x11c] sm:$0xf]
  %v176 = vld [vmem:[%s1 + $0x120] sm:$0xf]
  %v177 = vld [vmem:[%s1 + $0x124] sm:$0xf]
  %v178 = vld [vmem:[%s1 + $0x128] sm:$0xf]
  %v179 = vld [vmem:[%s1 + $0x12c] sm:$0xf]
  %v180 = vld [vmem:[%s1 + $0x130] sm:$0xf]
  %v181 = vld [vmem:[%s1 + $0x134] sm:$0xf]
  %v182 = vld [vmem:[%s1 + $0x138] sm:$0xf]
  %v183 = vld [vmem:[%s1 + $0x13c] sm:$0xf]
  %v232 = vunpack.c.l.b16 %v56
  %v233 = vunpack.c.h.b16 %v56
  %v234 = vunpack.c.l.b16 %v57
  %v235 = vunpack.c.h.b16 %v57
  %v236 = vunpack.c.l.b16 %v58
  %v237 = vunpack.c.l.b16 %v59
  %v238 = vunpack.c.h.b16 %v59
  %v239 = vunpack.c.l.b16 %v60
  %v240 = vunpack.c.h.b16 %v60
  %v241 = vunpack.c.l.b16 %v61
  %v242 = vunpack.c.l.b16 %v62
  %v243 = vunpack.c.h.b16 %v62
  %v244 = vunpack.c.l.b16 %v63
  %v245 = vunpack.c.h.b16 %v63
  %v246 = vunpack.c.l.b16 %v64
  %v247 = vunpack.c.l.b16 %v65
  %v248 = vunpack.c.h.b16 %v65
  %v249 = vunpack.c.l.b16 %v66
  %v250 = vunpack.c.h.b16 %v66
  %v251 = vunpack.c.l.b16 %v67
  %v252 = vunpack.c.l.b16 %v68
  %v253 = vunpack.c.h.b16 %v68
  %v254 = vunpack.c.l.b16 %v69
  %v255 = vunpack.c.h.b16 %v69
  %v256 = vunpack.c.l.b16 %v70
  %v257 = vunpack.c.l.b16 %v71
  %v258 = vunpack.c.h.b16 %v71
  %v259 = vunpack.c.l.b16 %v72
  %v260 = vunpack.c.h.b16 %v72
  %v261 = vunpack.c.l.b16 %v73
  %v262 = vunpack.c.l.b16 %v74
  %v263 = vunpack.c.h.b16 %v74
  %v264 = vunpack.c.l.b16 %v75
  %v265 = vunpack.c.h.b16 %v75
  %v266 = vunpack.c.l.b16 %v76
  %v267 = vunpack.c.l.b16 %v77
  %v268 = vunpack.c.h.b16 %v77
  %v269 = vunpack.c.l.b16 %v78
  %v270 = vunpack.c.h.b16 %v78
  %v271 = vunpack.c.l.b16 %v79
  %v272 = vunpack.c.l.b16 %v80
  %v273 = vunpack.c.h.b16 %v80
  %v274 = vunpack.c.l.b16 %v81
  %v275 = vunpack.c.h.b16 %v81
  %v276 = vunpack.c.l.b16 %v82
  %v277 = vunpack.c.l.b16 %v83
  %v278 = vunpack.c.h.b16 %v83
  %v279 = vunpack.c.l.b16 %v84
  %v280 = vunpack.c.h.b16 %v84
  %v281 = vunpack.c.l.b16 %v85
  %v282 = vunpack.c.l.b16 %v86
  %v283 = vunpack.c.h.b16 %v86
  %v284 = vunpack.c.l.b16 %v87
  %v285 = vunpack.c.h.b16 %v87
  %v286 = vunpack.c.l.b16 %v88
  %v287 = vunpack.c.l.b16 %v89
  %v288 = vunpack.c.h.b16 %v89
  %v289 = vunpack.c.l.b16 %v90
  %v290 = vunpack.c.h.b16 %v90
  %v291 = vunpack.c.l.b16 %v91
  %v292 = vunpack.c.l.b16 %v92
  %v293 = vunpack.c.h.b16 %v92
  %v294 = vunpack.c.l.b16 %v93
  %v295 = vunpack.c.h.b16 %v93
  %v296 = vunpack.c.l.b16 %v94
  %v297 = vunpack.c.l.b16 %v95
  %v298 = vunpack.c.h.b16 %v95
  %v299 = vunpack.c.l.b16 %v96
  %v300 = vunpack.c.h.b16 %v96
  %v301 = vunpack.c.l.b16 %v97
  %v302 = vunpack.c.l.b16 %v98
  %v303 = vunpack.c.h.b16 %v98
  %v304 = vunpack.c.l.b16 %v99
  %v305 = vunpack.c.h.b16 %v99
  %v306 = vunpack.c.l.b16 %v100
  %v307 = vunpack.c.l.b16 %v101
  %v308 = vunpack.c.h.b16 %v101
  %v309 = vunpack.c.l.b16 %v102
  %v310 = vunpack.c.h.b16 %v102
  %v311 = vunpack.c.l.b16 %v103
  %v312 = vpack.c.b16 %v237, %v232
  %v313 = vpack.c.b16 %v238, %v233
  %v314 = vpack.c.b16 %v239, %v234
  %v315 = vpack.c.b16 %v240, %v235
  %v316 = vpack.c.b16 %v241, %v236
  %v317 = vpack.c.b16 %v247, %v242
  %v318 = vpack.c.b16 %v248, %v243
  %v319 = vpack.c.b16 %v249, %v244
  %v320 = vpack.c.b16 %v250, %v245
  %v321 = vpack.c.b16 %v251, %v246
  %v322 = vpack.c.b16 %v257, %v252
  %v323 = vpack.c.b16 %v258, %v253
  %v324 = vpack.c.b16 %v259, %v254
  %v325 = vpack.c.b16 %v260, %v255
  %v326 = vpack.c.b16 %v261, %v256
  %v327 = vpack.c.b16 %v267, %v262
  %v328 = vpack.c.b16 %v268, %v263
  %v329 = vpack.c.b16 %v269, %v264
  %v330 = vpack.c.b16 %v270, %v265
  %v331 = vpack.c.b16 %v271, %v266
  %v332 = vpack.c.b16 %v277, %v272
  %v333 = vpack.c.b16 %v278, %v273
  %v334 = vpack.c.b16 %v279, %v274
  %v335 = vpack.c.b16 %v280, %v275
  %v336 = vpack.c.b16 %v281, %v276
  %v337 = vpack.c.b16 %v287, %v282
  %v338 = vpack.c.b16 %v288, %v283
  %v339 = vpack.c.b16 %v289, %v284
  %v340 = vpack.c.b16 %v290, %v285
  %v341 = vpack.c.b16 %v291, %v286
  %v342 = vpack.c.b16 %v297, %v292
  %v343 = vpack.c.b16 %v298, %v293
  %v344 = vpack.c.b16 %v299, %v294
  %v345 = vpack.c.b16 %v300, %v295
  %v346 = vpack.c.b16 %v301, %v296
  %v347 = vpack.c.b16 %v307, %v302
  %v348 = vpack.c.b16 %v308, %v303
  %v349 = vpack.c.b16 %v309, %v304
  %v350 = vpack.c.b16 %v310, %v305
  %v351 = vpack.c.b16 %v311, %v306
  %v472 = vunpack.c.l.b16 %v104
  %v473 = vunpack.c.l.b16 %v105
  %v474 = vunpack.c.l.b16 %v106
  %v475 = vunpack.c.l.b16 %v107
  %v476 = vunpack.c.l.b16 %v108
  %v477 = vunpack.c.l.b16 %v109
  %v478 = vunpack.c.l.b16 %v110
  %v479 = vunpack.c.l.b16 %v111
  %v480 = vunpack.c.l.b16 %v112
  %v481 = vunpack.c.l.b16 %v113
  %v482 = vunpack.c.l.b16 %v114
  %v483 = vunpack.c.l.b16 %v115
  %v484 = vunpack.c.l.b16 %v116
  %v485 = vunpack.c.l.b16 %v117
  %v486 = vunpack.c.l.b16 %v118
  %v487 = vunpack.c.l.b16 %v119
  %v488 = vunpack.c.l.b16 %v120
  %v489 = vunpack.c.l.b16 %v121
  %v490 = vunpack.c.l.b16 %v122
  %v491 = vunpack.c.l.b16 %v123
  %v492 = vunpack.c.l.b16 %v124
  %v493 = vunpack.c.l.b16 %v125
  %v494 = vunpack.c.l.b16 %v126
  %v495 = vunpack.c.l.b16 %v127
  %v496 = vunpack.c.l.b16 %v128
  %v497 = vunpack.c.l.b16 %v129
  %v498 = vunpack.c.l.b16 %v130
  %v499 = vunpack.c.l.b16 %v131
  %v500 = vunpack.c.l.b16 %v132
  %v501 = vunpack.c.l.b16 %v133
  %v502 = vunpack.c.l.b16 %v134
  %v503 = vunpack.c.l.b16 %v135
  %v504 = vunpack.c.l.b16 %v136
  %v505 = vunpack.c.l.b16 %v137
  %v506 = vunpack.c.l.b16 %v138
  %v507 = vunpack.c.l.b16 %v139
  %v508 = vunpack.c.l.b16 %v140
  %v509 = vunpack.c.l.b16 %v141
  %v510 = vunpack.c.l.b16 %v142
  %v511 = vunpack.c.l.b16 %v143
  %v512 = vunpack.c.l.b16 %v144
  %v513 = vunpack.c.l.b16 %v145
  %v514 = vunpack.c.l.b16 %v146
  %v515 = vunpack.c.l.b16 %v147
  %v516 = vunpack.c.l.b16 %v148
  %v517 = vunpack.c.l.b16 %v149
  %v518 = vunpack.c.l.b16 %v150
  %v519 = vunpack.c.l.b16 %v151
  %v520 = vunpack.c.l.b16 %v152
  %v521 = vunpack.c.l.b16 %v153
  %v522 = vunpack.c.l.b16 %v154
  %v523 = vunpack.c.l.b16 %v155
  %v524 = vunpack.c.l.b16 %v156
  %v525 = vunpack.c.l.b16 %v157
  %v526 = vunpack.c.l.b16 %v158
  %v527 = vunpack.c.l.b16 %v159
  %v528 = vunpack.c.l.b16 %v160
  %v529 = vunpack.c.l.b16 %v161
  %v530 = vunpack.c.l.b16 %v162
  %v531 = vunpack.c.l.b16 %v163
  %v532 = vunpack.c.l.b16 %v164
  %v533 = vunpack.c.l.b16 %v165
  %v534 = vunpack.c.l.b16 %v166
  %v535 = vunpack.c.l.b16 %v167
  %v536 = vunpack.c.l.b16 %v168
  %v537 = vunpack.c.l.b16 %v169
  %v538 = vunpack.c.l.b16 %v170
  %v539 = vunpack.c.l.b16 %v171
  %v540 = vunpack.c.l.b16 %v172
  %v541 = vunpack.c.l.b16 %v173
  %v542 = vunpack.c.l.b16 %v174
  %v543 = vunpack.c.l.b16 %v175
  %v544 = vunpack.c.l.b16 %v176
  %v545 = vunpack.c.l.b16 %v177
  %v546 = vunpack.c.l.b16 %v178
  %v547 = vunpack.c.l.b16 %v179
  %v548 = vunpack.c.l.b16 %v180
  %v549 = vunpack.c.l.b16 %v181
  %v550 = vunpack.c.l.b16 %v182
  %v551 = vunpack.c.l.b16 %v183
  %v552 = vpack.c.b16 %v473, %v472
  %v553 = vpack.c.b16 %v475, %v474
  %v554 = vpack.c.b16 %v477, %v476
  %v555 = vpack.c.b16 %v479, %v478
  %v556 = vpack.c.b16 %v481, %v480
  %v557 = vpack.c.b16 %v483, %v482
  %v558 = vpack.c.b16 %v485, %v484
  %v559 = vpack.c.b16 %v487, %v486
  %v560 = vpack.c.b16 %v489, %v488
  %v561 = vpack.c.b16 %v491, %v490
  %v562 = vpack.c.b16 %v493, %v492
  %v563 = vpack.c.b16 %v495, %v494
  %v564 = vpack.c.b16 %v497, %v496
  %v565 = vpack.c.b16 %v499, %v498
  %v566 = vpack.c.b16 %v501, %v500
  %v567 = vpack.c.b16 %v503, %v502
  %v568 = vpack.c.b16 %v505, %v504
  %v569 = vpack.c.b16 %v507, %v506
  %v570 = vpack.c.b16 %v509, %v508
  %v571 = vpack.c.b16 %v511, %v510
  %v572 = vpack.c.b16 %v513, %v512
  %v573 = vpack.c.b16 %v515, %v514
  %v574 = vpack.c.b16 %v517, %v516
  %v575 = vpack.c.b16 %v519, %v518
  %v576 = vpack.c.b16 %v521, %v520
  %v577 = vpack.c.b16 %v523, %v522
  %v578 = vpack.c.b16 %v525, %v524
  %v579 = vpack.c.b16 %v527, %v526
  %v580 = vpack.c.b16 %v529, %v528
  %v581 = vpack.c.b16 %v531, %v530
  %v582 = vpack.c.b16 %v533, %v532
  %v583 = vpack.c.b16 %v535, %v534
  %v584 = vpack.c.b16 %v537, %v536
  %v585 = vpack.c.b16 %v539, %v538
  %v586 = vpack.c.b16 %v541, %v540
  %v587 = vpack.c.b16 %v543, %v542
  %v588 = vpack.c.b16 %v545, %v544
  %v589 = vpack.c.b16 %v547, %v546
  %v590 = vpack.c.b16 %v549, %v548
  %v591 = vpack.c.b16 %v551, %v550
  %632 = vmatprep.subr.bf16.mxu0 0
  %633 = vmatpush1.bf16.msra.mxu0 %v559
  %634 = vmatprep.subr.bf16.mxu0 0
  %635 = vmatpush1.bf16.msra.mxu0 %v558
  %636 = vmatprep.subr.bf16.mxu0 0
  %637 = vmatpush1.bf16.msra.mxu0 %v557
  %638 = vmatprep.subr.bf16.mxu0 0
  %639 = vmatpush1.bf16.msra.mxu0 %v556
  %640 = vmatprep.subr.bf16.mxu0 0
  %641 = vmatpush1.bf16.msra.mxu0 %v555
  %642 = vmatprep.subr.bf16.mxu0 0
  %643 = vmatpush1.bf16.msra.mxu0 %v554
  %644 = vmatprep.subr.bf16.mxu0 0
  %645 = vmatpush1.bf16.msra.mxu0 %v553
  %646 = vmatprep.subr.bf16.mxu0 0
  %647 = vmatpush1.bf16.msra.mxu0 %v552
  %648 = vmatprep.subr.bf16.mxu0 0
  %649 = vmatpush2.bf16.msra.mxu0 %v567
  %650 = vmatprep.subr.bf16.mxu0 0
  %651 = vmatpush2.bf16.msra.mxu0 %v566
  %652 = vmatprep.subr.bf16.mxu0 0
  %653 = vmatpush2.bf16.msra.mxu0 %v565
  %654 = vmatprep.subr.bf16.mxu0 0
  %655 = vmatpush2.bf16.msra.mxu0 %v564
  %656 = vmatprep.subr.bf16.mxu0 0
  %657 = vmatpush2.bf16.msra.mxu0 %v563
  %658 = vmatprep.subr.bf16.mxu0 0
  %659 = vmatpush2.bf16.msra.mxu0 %v562
  %660 = vmatprep.subr.bf16.mxu0 0
  %661 = vmatpush2.bf16.msra.mxu0 %v561
  %662 = vmatprep.subr.bf16.mxu0 0
  %663 = vmatpush2.bf16.msra.mxu0 %v560
  %664 = vmatprep.mubr.bf16.mxu0 %v313
  %665 = vmatmul.mubr.bf16.gmra.mxu0 %v312
  %v666 = vpop.f32.mrf.mxu0
  %v667 = vadd.f32 0.0, %v666
  %v668 = vpop.f32.mrf.mxu0
  %v669 = vpop.f32.mrf.mxu0
  %v670 = vadd.f32 0.0, %v669
  %v671 = vpop.f32.mrf.mxu0
  %672 = vmatprep.mubr.bf16.mxu0 %v318
  %673 = vmatmul.mubr.bf16.gmra.mxu0 %v317
  %v674 = vpop.f32.mrf.mxu0
  %v675 = vadd.f32 0.0, %v674
  %v676 = vpop.f32.mrf.mxu0
  %v677 = vpop.f32.mrf.mxu0
  %v678 = vadd.f32 0.0, %v677
  %v679 = vpop.f32.mrf.mxu0
  %680 = vmatprep.mubr.bf16.mxu0 %v323
  %681 = vmatmul.mubr.bf16.gmra.mxu0 %v322
  %v682 = vpop.f32.mrf.mxu0
  %v683 = vadd.f32 0.0, %v682
  %v684 = vpop.f32.mrf.mxu0
  %v685 = vpop.f32.mrf.mxu0
  %v686 = vadd.f32 0.0, %v685
  %v687 = vpop.f32.mrf.mxu0
  %688 = vmatprep.mubr.bf16.mxu0 %v328
  %689 = vmatmul.mubr.bf16.gmra.mxu0 %v327
  %v690 = vpop.f32.mrf.mxu0
  %v691 = vadd.f32 0.0, %v690
  %v692 = vpop.f32.mrf.mxu0
  %v693 = vpop.f32.mrf.mxu0
  %v694 = vadd.f32 0.0, %v693
  %v695 = vpop.f32.mrf.mxu0
  %696 = vmatprep.mubr.bf16.mxu0 %v333
  %697 = vmatmul.mubr.bf16.gmra.mxu0 %v332
  %v698 = vpop.f32.mrf.mxu0
  %v699 = vadd.f32 0.0, %v698
  %v700 = vpop.f32.mrf.mxu0
  %v701 = vpop.f32.mrf.mxu0
  %v702 = vadd.f32 0.0, %v701
  %v703 = vpop.f32.mrf.mxu0
  %704 = vmatprep.mubr.bf16.mxu0 %v338
  %705 = vmatmul.mubr.bf16.gmra.mxu0 %v337
  %v706 = vpop.f32.mrf.mxu0
  %v707 = vadd.f32 0.0, %v706
  %v708 = vpop.f32.mrf.mxu0
  %v709 = vpop.f32.mrf.mxu0
  %v710 = vadd.f32 0.0, %v709
  %v711 = vpop.f32.mrf.mxu0
  %712 = vmatprep.mubr.bf16.mxu0 %v343
  %713 = vmatmul.mubr.bf16.gmra.mxu0 %v342
  %v714 = vpop.f32.mrf.mxu0
  %v715 = vadd.f32 0.0, %v714
  %v716 = vpop.f32.mrf.mxu0
  %v717 = vpop.f32.mrf.mxu0
  %v718 = vadd.f32 0.0, %v717
  %v719 = vpop.f32.mrf.mxu0
  %720 = vmatprep.mubr.bf16.mxu0 %v348
  %721 = vmatmul.mubr.bf16.gmra.mxu0 %v347
  %v722 = vpop.f32.mrf.mxu0
  %v723 = vadd.f32 0.0, %v722
  %v724 = vpop.f32.mrf.mxu0
  %v725 = vpop.f32.mrf.mxu0
  %v726 = vadd.f32 0.0, %v725
  %v727 = vpop.f32.mrf.mxu0
  %728 = vdwg.mxu0
  %729 = vmatprep.subr.bf16.mxu0 0
  %730 = vmatpush1.bf16.msra.mxu0 %v575
  %731 = vmatprep.subr.bf16.mxu0 0
  %732 = vmatpush1.bf16.msra.mxu0 %v574
  %733 = vmatprep.subr.bf16.mxu0 0
  %734 = vmatpush1.bf16.msra.mxu0 %v573
  %735 = vmatprep.subr.bf16.mxu0 0
  %736 = vmatpush1.bf16.msra.mxu0 %v572
  %737 = vmatprep.subr.bf16.mxu0 0
  %738 = vmatpush1.bf16.msra.mxu0 %v571
  %739 = vmatprep.subr.bf16.mxu0 0
  %740 = vmatpush1.bf16.msra.mxu0 %v570
  %741 = vmatprep.subr.bf16.mxu0 0
  %742 = vmatpush1.bf16.msra.mxu0 %v569
  %743 = vmatprep.subr.bf16.mxu0 0
  %744 = vmatpush1.bf16.msra.mxu0 %v568
  %745 = vmatprep.subr.bf16.mxu0 0
  %746 = vmatpush2.bf16.msra.mxu0 %v583
  %747 = vmatprep.subr.bf16.mxu0 0
  %748 = vmatpush2.bf16.msra.mxu0 %v582
  %749 = vmatprep.subr.bf16.mxu0 0
  %750 = vmatpush2.bf16.msra.mxu0 %v581
  %751 = vmatprep.subr.bf16.mxu0 0
  %752 = vmatpush2.bf16.msra.mxu0 %v580
  %753 = vmatprep.subr.bf16.mxu0 0
  %754 = vmatpush2.bf16.msra.mxu0 %v579
  %755 = vmatprep.subr.bf16.mxu0 0
  %756 = vmatpush2.bf16.msra.mxu0 %v578
  %757 = vmatprep.subr.bf16.mxu0 0
  %758 = vmatpush2.bf16.msra.mxu0 %v577
  %759 = vmatprep.subr.bf16.mxu0 0
  %760 = vmatpush2.bf16.msra.mxu0 %v576
  %761 = vmatprep.mubr.bf16.mxu0 %v315
  %762 = vmatmul.mubr.bf16.gmra.mxu0 %v314
  %v763 = vpop.f32.mrf.mxu0
  %v764 = vadd.f32 %v667, %v763
  %v765 = vpop.f32.mrf.mxu0
  %v766 = vpop.f32.mrf.mxu0
  %v767 = vadd.f32 %v670, %v766
  %v768 = vpop.f32.mrf.mxu0
  %769 = vmatprep.mubr.bf16.mxu0 %v320
  %770 = vmatmul.mubr.bf16.gmra.mxu0 %v319
  %v771 = vpop.f32.mrf.mxu0
  %v772 = vadd.f32 %v675, %v771
  %v773 = vpop.f32.mrf.mxu0
  %v774 = vpop.f32.mrf.mxu0
  %v775 = vadd.f32 %v678, %v774
  %v776 = vpop.f32.mrf.mxu0
  %777 = vmatprep.mubr.bf16.mxu0 %v325
  %778 = vmatmul.mubr.bf16.gmra.mxu0 %v324
  %v779 = vpop.f32.mrf.mxu0
  %v780 = vadd.f32 %v683, %v779
  %v781 = vpop.f32.mrf.mxu0
  %v782 = vpop.f32.mrf.mxu0
  %v783 = vadd.f32 %v686, %v782
  %v784 = vpop.f32.mrf.mxu0
  %785 = vmatprep.mubr.bf16.mxu0 %v330
  %786 = vmatmul.mubr.bf16.gmra.mxu0 %v329
  %v787 = vpop.f32.mrf.mxu0
  %v788 = vadd.f32 %v691, %v787
  %v789 = vpop.f32.mrf.mxu0
  %v790 = vpop.f32.mrf.mxu0
  %v791 = vadd.f32 %v694, %v790
  %v792 = vpop.f32.mrf.mxu0
  %793 = vmatprep.mubr.bf16.mxu0 %v335
  %794 = vmatmul.mubr.bf16.gmra.mxu0 %v334
  %v795 = vpop.f32.mrf.mxu0
  %v796 = vadd.f32 %v699, %v795
  %v797 = vpop.f32.mrf.mxu0
  %v798 = vpop.f32.mrf.mxu0
  %v799 = vadd.f32 %v702, %v798
  %v800 = vpop.f32.mrf.mxu0
  %801 = vmatprep.mubr.bf16.mxu0 %v340
  %802 = vmatmul.mubr.bf16.gmra.mxu0 %v339
  %v803 = vpop.f32.mrf.mxu0
  %v804 = vadd.f32 %v707, %v803
  %v805 = vpop.f32.mrf.mxu0
  %v806 = vpop.f32.mrf.mxu0
  %v807 = vadd.f32 %v710, %v806
  %v808 = vpop.f32.mrf.mxu0
  %809 = vmatprep.mubr.bf16.mxu0 %v345
  %810 = vmatmul.mubr.bf16.gmra.mxu0 %v344
  %v811 = vpop.f32.mrf.mxu0
  %v812 = vadd.f32 %v715, %v811
  %v813 = vpop.f32.mrf.mxu0
  %v814 = vpop.f32.mrf.mxu0
  %v815 = vadd.f32 %v718, %v814
  %v816 = vpop.f32.mrf.mxu0
  %817 = vmatprep.mubr.bf16.mxu0 %v350
  %818 = vmatmul.mubr.bf16.gmra.mxu0 %v349
  %v819 = vpop.f32.mrf.mxu0
  %v820 = vadd.f32 %v723, %v819
  %v821 = vpop.f32.mrf.mxu0
  %v822 = vpop.f32.mrf.mxu0
  %v823 = vadd.f32 %v726, %v822
  %v824 = vpop.f32.mrf.mxu0
  %825 = vdwg.mxu0
  %826 = vmatprep.subr.bf16.mxu0 0
  %827 = vmatpush1.bf16.msra.mxu0 %v591
  %828 = vmatprep.subr.bf16.mxu0 0
  %829 = vmatpush1.bf16.msra.mxu0 %v590
  %830 = vmatprep.subr.bf16.mxu0 0
  %831 = vmatpush1.bf16.msra.mxu0 %v589
  %832 = vmatprep.subr.bf16.mxu0 0
  %833 = vmatpush1.bf16.msra.mxu0 %v588
  %834 = vmatprep.subr.bf16.mxu0 0
  %835 = vmatpush1.bf16.msra.mxu0 %v587
  %836 = vmatprep.subr.bf16.mxu0 0
  %837 = vmatpush1.bf16.msra.mxu0 %v586
  %838 = vmatprep.subr.bf16.mxu0 0
  %839 = vmatpush1.bf16.msra.mxu0 %v585
  %840 = vmatprep.subr.bf16.mxu0 0
  %841 = vmatpush1.bf16.msra.mxu0 %v584
  %842 = vmatprep.subr.bf16.mxu0 0
  %843 = vmatpush2.bf16.msra.mxu0 0
  %844 = vmatprep.subr.bf16.mxu0 0
  %845 = vmatpush2.bf16.msra.mxu0 0
  %846 = vmatprep.subr.bf16.mxu0 0
  %847 = vmatpush2.bf16.msra.mxu0 0
  %848 = vmatprep.subr.bf16.mxu0 0
  %849 = vmatpush2.bf16.msra.mxu0 0
  %850 = vmatprep.subr.bf16.mxu0 0
  %851 = vmatpush2.bf16.msra.mxu0 0
  %852 = vmatprep.subr.bf16.mxu0 0
  %853 = vmatpush2.bf16.msra.mxu0 0
  %854 = vmatprep.subr.bf16.mxu0 0
  %855 = vmatpush2.bf16.msra.mxu0 0
  %856 = vmatprep.subr.bf16.mxu0 0
  %857 = vmatpush2.bf16.msra.mxu0 0
  %858 = vmatprep.mubr.bf16.mxu0 0
  %859 = vmatmul.mubr.bf16.gmra.mxu0 %v316
  %v860 = vpop.f32.mrf.mxu0
  %v861 = vadd.f32 %v764, %v860
  %v862 = vpop.f32.mrf.mxu0
  %v863 = vpop.f32.mrf.mxu0
  %v864 = vadd.f32 %v767, %v863
  %v865 = vpop.f32.mrf.mxu0
  %866 = vmatprep.mubr.bf16.mxu0 0
  %867 = vmatmul.mubr.bf16.gmra.mxu0 %v321
  %v868 = vpop.f32.mrf.mxu0
  %v869 = vadd.f32 %v772, %v868
  %v870 = vpop.f32.mrf.mxu0
  %v871 = vpop.f32.mrf.mxu0
  %v872 = vadd.f32 %v775, %v871
  %v873 = vpop.f32.mrf.mxu0
  %874 = vmatprep.mubr.bf16.mxu0 0
  %875 = vmatmul.mubr.bf16.gmra.mxu0 %v326
  %v876 = vpop.f32.mrf.mxu0
  %v877 = vadd.f32 %v780, %v876
  %v878 = vpop.f32.mrf.mxu0
  %v879 = vpop.f32.mrf.mxu0
  %v880 = vadd.f32 %v783, %v879
  %v881 = vpop.f32.mrf.mxu0
  %882 = vmatprep.mubr.bf16.mxu0 0
  %883 = vmatmul.mubr.bf16.gmra.mxu0 %v331
  %v884 = vpop.f32.mrf.mxu0
  %v885 = vadd.f32 %v788, %v884
  %v886 = vpop.f32.mrf.mxu0
  %v887 = vpop.f32.mrf.mxu0
  %v888 = vadd.f32 %v791, %v887
  %v889 = vpop.f32.mrf.mxu0
  %890 = vmatprep.mubr.bf16.mxu0 0
  %891 = vmatmul.mubr.bf16.gmra.mxu0 %v336
  %v892 = vpop.f32.mrf.mxu0
  %v893 = vadd.f32 %v796, %v892
  %v894 = vpop.f32.mrf.mxu0
  %v895 = vpop.f32.mrf.mxu0
  %v896 = vadd.f32 %v799, %v895
  %v897 = vpop.f32.mrf.mxu0
  %898 = vmatprep.mubr.bf16.mxu0 0
  %899 = vmatmul.mubr.bf16.gmra.mxu0 %v341
  %v900 = vpop.f32.mrf.mxu0
  %v901 = vadd.f32 %v804, %v900
  %v902 = vpop.f32.mrf.mxu0
  %v903 = vpop.f32.mrf.mxu0
  %v904 = vadd.f32 %v807, %v903
  %v905 = vpop.f32.mrf.mxu0
  %906 = vmatprep.mubr.bf16.mxu0 0
  %907 = vmatmul.mubr.bf16.gmra.mxu0 %v346
  %v908 = vpop.f32.mrf.mxu0
  %v909 = vadd.f32 %v812, %v908
  %v910 = vpop.f32.mrf.mxu0
  %v911 = vpop.f32.mrf.mxu0
  %v912 = vadd.f32 %v815, %v911
  %v913 = vpop.f32.mrf.mxu0
  %914 = vmatprep.mubr.bf16.mxu0 0
  %915 = vmatmul.mubr.bf16.gmra.mxu0 %v351
  %v916 = vpop.f32.mrf.mxu0
  %v917 = vadd.f32 %v820, %v916
  %v918 = vpop.f32.mrf.mxu0
  %v919 = vpop.f32.mrf.mxu0
  %v920 = vadd.f32 %v823, %v919
  %v921 = vpop.f32.mrf.mxu0
  %922 = vdwg.mxu0
  %v923 = vadd.f32 %v40, %v861
  %v924 = vadd.f32 %v41, %v864
  %v925 = vadd.f32 %v42, %v869
  %v926 = vadd.f32 %v43, %v872
  %v927 = vadd.f32 %v44, %v877
  %v928 = vadd.f32 %v45, %v880
  %v929 = vadd.f32 %v46, %v885
  %v930 = vadd.f32 %v47, %v888
  %v931 = vadd.f32 %v48, %v893
  %v932 = vadd.f32 %v49, %v896
  %v933 = vadd.f32 %v50, %v901
  %v934 = vadd.f32 %v51, %v904
  %v935 = vadd.f32 %v52, %v909
  %v936 = vadd.f32 %v53, %v912
  %v937 = vadd.f32 %v54, %v917
  %v938 = vadd.f32 %v55, %v920
  %939 = vst [vmem:[#allocation2] sm:$0xff] %v923
  %940 = vst [vmem:[#allocation2 + $0x8] sm:$0xff] %v924
  %941 = vst [vmem:[#allocation2 + $0x10] sm:$0xff] %v925
  %942 = vst [vmem:[#allocation2 + $0x18] sm:$0xff] %v926
  %943 = vst [vmem:[#allocation2 + $0x20] sm:$0xff] %v927
  %944 = vst [vmem:[#allocation2 + $0x28] sm:$0xff] %v928
  %945 = vst [vmem:[#allocation2 + $0x30] sm:$0xff] %v929
  %946 = vst [vmem:[#allocation2 + $0x38] sm:$0xff] %v930
  %947 = vst [vmem:[#allocation2 + $0x40] sm:$0xff] %v931
  %948 = vst [vmem:[#allocation2 + $0x48] sm:$0xff] %v932
  %949 = vst [vmem:[#allocation2 + $0x50] sm:$0xff] %v933
  %950 = vst [vmem:[#allocation2 + $0x58] sm:$0xff] %v934
  %951 = vst [vmem:[#allocation2 + $0x60] sm:$0xff] %v935
  %952 = vst [vmem:[#allocation2 + $0x68] sm:$0xff] %v936
  %953 = vst [vmem:[#allocation2 + $0x70] sm:$0xff] %v937
  %954 = vst [vmem:[#allocation2 + $0x78] sm:$0xff] %v938
  // Predicated region
  $region22: #{_lambda_.26} parent=0 // pred_check
    %p955 = pneg %p20
  $region23: #{_lambda_.26} parent=0 // pred_check_branch
    %957 = sbr.rel (%p955) target = $region25
  $region24: #{_lambda_.26} parent=0 // pred_region
    %v958 = vld [vmem:[#allocation2] sm:$0xff]
    %v959 = vld [vmem:[#allocation2 + $0x8] sm:$0xff]
    %v960 = vld [vmem:[#allocation2 + $0x10] sm:$0xff]
    %v961 = vld [vmem:[#allocation2 + $0x18] sm:$0xff]
    %v962 = vld [vmem:[#allocation2 + $0x20] sm:$0xff]
    %v963 = vld [vmem:[#allocation2 + $0x28] sm:$0xff]
    %v964 = vld [vmem:[#allocation2 + $0x30] sm:$0xff]
    %v965 = vld [vmem:[#allocation2 + $0x38] sm:$0xff]
    %v966 = vld [vmem:[#allocation2 + $0x40] sm:$0xff]
    %v967 = vld [vmem:[#allocation2 + $0x48] sm:$0xff]
    %v968 = vld [vmem:[#allocation2 + $0x50] sm:$0xff]
    %v969 = vld [vmem:[#allocation2 + $0x58] sm:$0xff]
    %v970 = vld [vmem:[#allocation2 + $0x60] sm:$0xff]
    %v971 = vld [vmem:[#allocation2 + $0x68] sm:$0xff]
    %v972 = vld [vmem:[#allocation2 + $0x70] sm:$0xff]
    %v973 = vld [vmem:[#allocation2 + $0x78] sm:$0xff]
    %v974 = vld [vmem:[%s2] sm:$0x1]
    %v976 = vlaneseq
    %v977 = vshrl.u32 %v976, 7
    %v978 = vsub.s32 0, %v977
    %v979 = vrot.slane %v974, %v978
    %v981 = vadd.f32 %v958, %v979
    %v982 = vadd.f32 %v959, %v979
    %v983 = vadd.f32 %v960, %v979
    %v984 = vadd.f32 %v961, %v979
    %v985 = vadd.f32 %v962, %v979
    %v986 = vadd.f32 %v963, %v979
    %v987 = vadd.f32 %v964, %v979
    %v988 = vadd.f32 %v965, %v979
    %v989 = vadd.f32 %v966, %v979
    %v990 = vadd.f32 %v967, %v979
    %v991 = vadd.f32 %v968, %v979
    %v992 = vadd.f32 %v969, %v979
    %v993 = vadd.f32 %v970, %v979
    %v994 = vadd.f32 %v971, %v979
    %v995 = vadd.f32 %v972, %v979
    %v996 = vadd.f32 %v973, %v979
    %v997 = vld [vmem:[%s3] sm:$0xff]
    %v998 = vld [vmem:[%s3 + $0x8] sm:$0xff]
    %v999 = vld [vmem:[%s3 + $0x10] sm:$0xff]
    %v1000 = vld [vmem:[%s3 + $0x18] sm:$0xff]
    %v1001 = vld [vmem:[%s3 + $0x20] sm:$0xff]
    %v1002 = vld [vmem:[%s3 + $0x28] sm:$0xff]
    %v1003 = vld [vmem:[%s3 + $0x30] sm:$0xff]
    %v1004 = vld [vmem:[%s3 + $0x38] sm:$0xff]
    %v1005 = vld [vmem:[%s3 + $0x40] sm:$0xff]
    %v1006 = vld [vmem:[%s3 + $0x48] sm:$0xff]
    %v1007 = vld [vmem:[%s3 + $0x50] sm:$0xff]
    %v1008 = vld [vmem:[%s3 + $0x58] sm:$0xff]
    %v1009 = vld [vmem:[%s3 + $0x60] sm:$0xff]
    %v1010 = vld [vmem:[%s3 + $0x68] sm:$0xff]
    %v1011 = vld [vmem:[%s3 + $0x70] sm:$0xff]
    %v1012 = vld [vmem:[%s3 + $0x78] sm:$0xff]
    %vm1013 = vcmp.gt.f32.partialorder %v997, 1.0
    %vm1014 = vcmp.gt.f32.partialorder %v998, 1.0
    %vm1015 = vcmp.gt.f32.partialorder %v999, 1.0
    %vm1016 = vcmp.gt.f32.partialorder %v1000, 1.0
    %vm1017 = vcmp.gt.f32.partialorder %v1001, 1.0
    %vm1018 = vcmp.gt.f32.partialorder %v1002, 1.0
    %vm1019 = vcmp.gt.f32.partialorder %v1003, 1.0
    %vm1020 = vcmp.gt.f32.partialorder %v1004, 1.0
    %vm1021 = vcmp.gt.f32.partialorder %v1005, 1.0
    %vm1022 = vcmp.gt.f32.partialorder %v1006, 1.0
    %vm1023 = vcmp.gt.f32.partialorder %v1007, 1.0
    %vm1024 = vcmp.gt.f32.partialorder %v1008, 1.0
    %vm1025 = vcmp.gt.f32.partialorder %v1009, 1.0
    %vm1026 = vcmp.gt.f32.partialorder %v1010, 1.0
    %vm1027 = vcmp.gt.f32.partialorder %v1011, 1.0
    %vm1028 = vcmp.gt.f32.partialorder %v1012, 1.0
    %v1029 = vsel %vm1013, 1.0, 0.0
    %v1030 = vsel %vm1014, 1.0, 0.0
    %v1031 = vsel %vm1015, 1.0, 0.0
    %v1032 = vsel %vm1016, 1.0, 0.0
    %v1033 = vsel %vm1017, 1.0, 0.0
    %v1034 = vsel %vm1018, 1.0, 0.0
    %v1035 = vsel %vm1019, 1.0, 0.0
    %v1036 = vsel %vm1020, 1.0, 0.0
    %v1037 = vsel %vm1021, 1.0, 0.0
    %v1038 = vsel %vm1022, 1.0, 0.0
    %v1039 = vsel %vm1023, 1.0, 0.0
    %v1040 = vsel %vm1024, 1.0, 0.0
    %v1041 = vsel %vm1025, 1.0, 0.0
    %v1042 = vsel %vm1026, 1.0, 0.0
    %v1043 = vsel %vm1027, 1.0, 0.0
    %v1044 = vsel %vm1028, 1.0, 0.0
    %v1045 = vmul.f32 %v997, 0.9
    %v1046 = vmul.f32 %v998, 0.9
    %v1047 = vmul.f32 %v999, 0.9
    %v1048 = vmul.f32 %v1000, 0.9
    %v1049 = vmul.f32 %v1001, 0.9
    %v1050 = vmul.f32 %v1002, 0.9
    %v1051 = vmul.f32 %v1003, 0.9
    %v1052 = vmul.f32 %v1004, 0.9
    %v1053 = vmul.f32 %v1005, 0.9
    %v1054 = vmul.f32 %v1006, 0.9
    %v1055 = vmul.f32 %v1007, 0.9
    %v1056 = vmul.f32 %v1008, 0.9
    %v1057 = vmul.f32 %v1009, 0.9
    %v1058 = vmul.f32 %v1010, 0.9
    %v1059 = vmul.f32 %v1011, 0.9
    %v1060 = vmul.f32 %v1012, 0.9
    %v1061 = vadd.f32 %v1045, %v981
    %v1062 = vadd.f32 %v1046, %v982
    %v1063 = vadd.f32 %v1047, %v983
    %v1064 = vadd.f32 %v1048, %v984
    %v1065 = vadd.f32 %v1049, %v985
    %v1066 = vadd.f32 %v1050, %v986
    %v1067 = vadd.f32 %v1051, %v987
    %v1068 = vadd.f32 %v1052, %v988
    %v1069 = vadd.f32 %v1053, %v989
    %v1070 = vadd.f32 %v1054, %v990
    %v1071 = vadd.f32 %v1055, %v991
    %v1072 = vadd.f32 %v1056, %v992
    %v1073 = vadd.f32 %v1057, %v993
    %v1074 = vadd.f32 %v1058, %v994
    %v1075 = vadd.f32 %v1059, %v995
    %v1076 = vadd.f32 %v1060, %v996
    %v1077 = vsub.f32 %v1061, %v1029
    %v1078 = vsub.f32 %v1062, %v1030
    %v1079 = vsub.f32 %v1063, %v1031
    %v1080 = vsub.f32 %v1064, %v1032
    %v1081 = vsub.f32 %v1065, %v1033
    %v1082 = vsub.f32 %v1066, %v1034
    %v1083 = vsub.f32 %v1067, %v1035
    %v1084 = vsub.f32 %v1068, %v1036
    %v1085 = vsub.f32 %v1069, %v1037
    %v1086 = vsub.f32 %v1070, %v1038
    %v1087 = vsub.f32 %v1071, %v1039
    %v1088 = vsub.f32 %v1072, %v1040
    %v1089 = vsub.f32 %v1073, %v1041
    %v1090 = vsub.f32 %v1074, %v1042
    %v1091 = vsub.f32 %v1075, %v1043
    %v1092 = vsub.f32 %v1076, %v1044
    %vm1093 = vcmp.gt.f32.partialorder %v1077, 1.0
    %vm1094 = vcmp.gt.f32.partialorder %v1078, 1.0
    %vm1095 = vcmp.gt.f32.partialorder %v1079, 1.0
    %vm1096 = vcmp.gt.f32.partialorder %v1080, 1.0
    %vm1097 = vcmp.gt.f32.partialorder %v1081, 1.0
    %vm1098 = vcmp.gt.f32.partialorder %v1082, 1.0
    %vm1099 = vcmp.gt.f32.partialorder %v1083, 1.0
    %vm1100 = vcmp.gt.f32.partialorder %v1084, 1.0
    %vm1101 = vcmp.gt.f32.partialorder %v1085, 1.0
    %vm1102 = vcmp.gt.f32.partialorder %v1086, 1.0
    %vm1103 = vcmp.gt.f32.partialorder %v1087, 1.0
    %vm1104 = vcmp.gt.f32.partialorder %v1088, 1.0
    %vm1105 = vcmp.gt.f32.partialorder %v1089, 1.0
    %vm1106 = vcmp.gt.f32.partialorder %v1090, 1.0
    %vm1107 = vcmp.gt.f32.partialorder %v1091, 1.0
    %vm1108 = vcmp.gt.f32.partialorder %v1092, 1.0
    %v1109 = vsel %vm1093, 1.0, 0.0
    %v1110 = vsel %vm1094, 1.0, 0.0
    %v1111 = vsel %vm1095, 1.0, 0.0
    %v1112 = vsel %vm1096, 1.0, 0.0
    %v1113 = vsel %vm1097, 1.0, 0.0
    %v1114 = vsel %vm1098, 1.0, 0.0
    %v1115 = vsel %vm1099, 1.0, 0.0
    %v1116 = vsel %vm1100, 1.0, 0.0
    %v1117 = vsel %vm1101, 1.0, 0.0
    %v1118 = vsel %vm1102, 1.0, 0.0
    %v1119 = vsel %vm1103, 1.0, 0.0
    %v1120 = vsel %vm1104, 1.0, 0.0
    %v1121 = vsel %vm1105, 1.0, 0.0
    %v1122 = vsel %vm1106, 1.0, 0.0
    %v1123 = vsel %vm1107, 1.0, 0.0
    %v1124 = vsel %vm1108, 1.0, 0.0
    %1125 = vst [vmem:[%s4] sm:$0xff] %v1109
    %1126 = vst [vmem:[%s4 + $0x8] sm:$0xff] %v1110
    %1127 = vst [vmem:[%s4 + $0x10] sm:$0xff] %v1111
    %1128 = vst [vmem:[%s4 + $0x18] sm:$0xff] %v1112
    %1129 = vst [vmem:[%s4 + $0x20] sm:$0xff] %v1113
    %1130 = vst [vmem:[%s4 + $0x28] sm:$0xff] %v1114
    %1131 = vst [vmem:[%s4 + $0x30] sm:$0xff] %v1115
    %1132 = vst [vmem:[%s4 + $0x38] sm:$0xff] %v1116
    %1133 = vst [vmem:[%s4 + $0x40] sm:$0xff] %v1117
    %1134 = vst [vmem:[%s4 + $0x48] sm:$0xff] %v1118
    %1135 = vst [vmem:[%s4 + $0x50] sm:$0xff] %v1119
    %1136 = vst [vmem:[%s4 + $0x58] sm:$0xff] %v1120
    %1137 = vst [vmem:[%s4 + $0x60] sm:$0xff] %v1121
    %1138 = vst [vmem:[%s4 + $0x68] sm:$0xff] %v1122
    %1139 = vst [vmem:[%s4 + $0x70] sm:$0xff] %v1123
    %1140 = vst [vmem:[%s4 + $0x78] sm:$0xff] %v1124
    %1141 = vst [vmem:[%s5] sm:$0xff] %v1077
    %1142 = vst [vmem:[%s5 + $0x8] sm:$0xff] %v1078
    %1143 = vst [vmem:[%s5 + $0x10] sm:$0xff] %v1079
    %1144 = vst [vmem:[%s5 + $0x18] sm:$0xff] %v1080
    %1145 = vst [vmem:[%s5 + $0x20] sm:$0xff] %v1081
    %1146 = vst [vmem:[%s5 + $0x28] sm:$0xff] %v1082
    %1147 = vst [vmem:[%s5 + $0x30] sm:$0xff] %v1083
    %1148 = vst [vmem:[%s5 + $0x38] sm:$0xff] %v1084
    %1149 = vst [vmem:[%s5 + $0x40] sm:$0xff] %v1085
    %1150 = vst [vmem:[%s5 + $0x48] sm:$0xff] %v1086
    %1151 = vst [vmem:[%s5 + $0x50] sm:$0xff] %v1087
    %1152 = vst [vmem:[%s5 + $0x58] sm:$0xff] %v1088
    %1153 = vst [vmem:[%s5 + $0x60] sm:$0xff] %v1089
    %1154 = vst [vmem:[%s5 + $0x68] sm:$0xff] %v1090
    %1155 = vst [vmem:[%s5 + $0x70] sm:$0xff] %v1091
    %1156 = vst [vmem:[%s5 + $0x78] sm:$0xff] %v1092
  $region25: #{_lambda_.26} parent=0 // pred_fallthru
    _
  // Predicated region
  $region26: #{_lambda_.26} parent=0 // pred_check
    _
  $region27: #{_lambda_.26} parent=0 // pred_check_branch
    %1158 = sbr.rel (0) target = $region29
  $region28: #{_lambda_.26} parent=0 // pred_region
    _
  $region29: #{_lambda_.26} parent=0 // pred_fallthru
    _
  // Predicated region
  $region30: #{_lambda_.26} parent=0 // pred_check
    _
  $region31: #{_lambda_.26} parent=0 // pred_check_branch
    %1160 = sbr.rel (0) target = $region33
  $region32: #{_lambda_.26} parent=0 // pred_region
    _
  $region33: #{_lambda_.26} parent=0 // pred_fallthru
    _
  // Predicated region
  $region34: #{_lambda_.26} parent=0 // pred_check
    _
  $region35: #{_lambda_.26} parent=0 // pred_check_branch
    %1162 = sbr.rel (0) target = $region37
  $region36: #{_lambda_.26} parent=0 // pred_region
    _
  $region37: #{_lambda_.26} parent=0 // pred_fallthru
    _
  // Predicated region
  $region38: #{_lambda_.26} parent=0 // pred_check
    _
  $region39: #{_lambda_.26} parent=0 // pred_check_branch
    %1164 = sbr.rel (0) target = $region41
  $region40: #{_lambda_.26} parent=0 // pred_region
    _
  $region41: #{_lambda_.26} parent=0 // pred_fallthru
    _

// kernel: _lambda_.25
$region0: #{_lambda_.25}
  #allocation0 [shape = 'u32[]', space=smem, size = 0x4, offset = 0x4, fixed_abs, tag = 'smem constant byte address 0x4 - core index']
  #allocation1 [shape = 'u32[144,128]{1,0:T(1,128)}', space=vmem, size = 0x12000, scoped, tag = 'internal scratch']
  #allocation2 [shape = 'f32[32,128]{1,0:T(8,128)}', space=vmem, size = 0x4000, scoped, tag = 'scratch operand']
  %s0 = inlined_call_operand.vmem [shape: bf16[32,128], index: 0, kind: input, shape index: {}]
  %s1 = inlined_call_operand.vmem [shape: bf16[128,128], index: 1, kind: input, shape index: {}]
  %s2 = inlined_call_operand.vmem [shape: f32[1,128], index: 2, kind: input, shape index: {}]
  %s3 = inlined_call_operand.vmem [shape: f32[32,128], index: 3, kind: input, shape index: {}, may-alias: {3,5}]
  %s4 = inlined_call_operand.vmem [shape: f32[32,128], index: 4, kind: output, shape index: {0}]
  %s5 = inlined_call_operand.vmem [shape: f32[32,128], index: 5, kind: output, shape index: {1}, may-alias: {3,5}]
  %6 = xla_tuple %s4, %s5
  %s7 = sld [smem:[#allocation0]]
  $region42: #{_lambda_.25} parent=0
    _
  %s9 = ssub.s32 1, %s7
  %s10 = scalar_select 0, %s9, %s7
  // Predicated region
  $region2: #{_lambda_.25} parent=0 // pred_check
    _
  $region3: #{_lambda_.25} parent=0 // pred_check_branch
    %12 = sbr.rel (0) target = $region5
  $region4: #{_lambda_.25} parent=0 // pred_region
    _
  $region5: #{_lambda_.25} parent=0 // pred_fallthru
    _
  // Predicated region
  $region6: #{_lambda_.25} parent=0 // pred_check
    _
  $region7: #{_lambda_.25} parent=0 // pred_check_branch
    %14 = sbr.rel (0) target = $region9
  $region8: #{_lambda_.25} parent=0 // pred_region
    _
  $region9: #{_lambda_.25} parent=0 // pred_fallthru
    _
  // Predicated region
  $region10: #{_lambda_.25} parent=0 // pred_check
    _
  $region11: #{_lambda_.25} parent=0 // pred_check_branch
    %16 = sbr.rel (0) target = $region13
  $region12: #{_lambda_.25} parent=0 // pred_region
    _
  $region13: #{_lambda_.25} parent=0 // pred_fallthru
    _
  // Predicated region
  $region14: #{_lambda_.25} parent=0 // pred_check
    _
  $region15: #{_lambda_.25} parent=0 // pred_check_branch
    %18 = sbr.rel (0) target = $region17
  $region16: #{_lambda_.25} parent=0 // pred_region
    _
  $region17: #{_lambda_.25} parent=0 // pred_fallthru
    _
  %p20 = scmp.eq.s32.totalorder 0, 0
  // Predicated region
  $region18: #{_lambda_.25} parent=0 // pred_check
    %p21 = pneg %p20
  $region19: #{_lambda_.25} parent=0 // pred_check_branch
    %23 = sbr.rel (%p21) target = $region21
  $region20: #{_lambda_.25} parent=0 // pred_region
    %24 = vst [vmem:[#allocation2] sm:$0xff] 0.0
    %25 = vst [vmem:[#allocation2 + $0x8] sm:$0xff] 0.0
    %26 = vst [vmem:[#allocation2 + $0x10] sm:$0xff] 0.0
    %27 = vst [vmem:[#allocation2 + $0x18] sm:$0xff] 0.0
  $region21: #{_lambda_.25} parent=0 // pred_fallthru
    _
  %v28 = vld [vmem:[#allocation2] sm:$0xff]
  %v29 = vld [vmem:[#allocation2 + $0x8] sm:$0xff]
  %v30 = vld [vmem:[#allocation2 + $0x10] sm:$0xff]
  %v31 = vld [vmem:[#allocation2 + $0x18] sm:$0xff]
  %v32 = vld [vmem:[%s0] sm:$0xf]
  %v33 = vld [vmem:[%s0 + $0x4] sm:$0xf]
  %v34 = vld [vmem:[%s0 + $0x8] sm:$0xf]
  %v35 = vld [vmem:[%s0 + $0xc] sm:$0xf]
  %v36 = vld [vmem:[%s1] sm:$0xf]
  %v37 = vld [vmem:[%s1 + $0x4] sm:$0xf]
  %v38 = vld [vmem:[%s1 + $0x8] sm:$0xf]
  %v39 = vld [vmem:[%s1 + $0xc] sm:$0xf]
  %v40 = vld [vmem:[%s1 + $0x10] sm:$0xf]
  %v41 = vld [vmem:[%s1 + $0x14] sm:$0xf]
  %v42 = vld [vmem:[%s1 + $0x18] sm:$0xf]
  %v43 = vld [vmem:[%s1 + $0x1c] sm:$0xf]
  %v44 = vld [vmem:[%s1 + $0x20] sm:$0xf]
  %v45 = vld [vmem:[%s1 + $0x24] sm:$0xf]
  %v46 = vld [vmem:[%s1 + $0x28] sm:$0xf]
  %v47 = vld [vmem:[%s1 + $0x2c] sm:$0xf]
  %v48 = vld [vmem:[%s1 + $0x30] sm:$0xf]
  %v49 = vld [vmem:[%s1 + $0x34] sm:$0xf]
  %v50 = vld [vmem:[%s1 + $0x38] sm:$0xf]
  %v51 = vld [vmem:[%s1 + $0x3c] sm:$0xf]
  %v56 = vunpack.c.l.b16 %v32
  %v57 = vunpack.c.l.b16 %v33
  %v58 = vunpack.c.l.b16 %v34
  %v59 = vunpack.c.l.b16 %v35
  %v60 = vpack.c.b16 %v57, %v56
  %v61 = vpack.c.b16 %v59, %v58
  %v80 = vunpack.c.l.b16 %v36
  %v81 = vunpack.c.l.b16 %v37
  %v82 = vunpack.c.l.b16 %v38
  %v83 = vunpack.c.l.b16 %v39
  %v84 = vunpack.c.l.b16 %v40
  %v85 = vunpack.c.l.b16 %v41
  %v86 = vunpack.c.l.b16 %v42
  %v87 = vunpack.c.l.b16 %v43
  %v88 = vunpack.c.l.b16 %v44
  %v89 = vunpack.c.l.b16 %v45
  %v90 = vunpack.c.l.b16 %v46
  %v91 = vunpack.c.l.b16 %v47
  %v92 = vunpack.c.l.b16 %v48
  %v93 = vunpack.c.l.b16 %v49
  %v94 = vunpack.c.l.b16 %v50
  %v95 = vunpack.c.l.b16 %v51
  %v96 = vpack.c.b16 %v81, %v80
  %v97 = vpack.c.b16 %v83, %v82
  %v98 = vpack.c.b16 %v85, %v84
  %v99 = vpack.c.b16 %v87, %v86
  %v100 = vpack.c.b16 %v89, %v88
  %v101 = vpack.c.b16 %v91, %v90
  %v102 = vpack.c.b16 %v93, %v92
  %v103 = vpack.c.b16 %v95, %v94
  %112 = vmatprep.subr.bf16.mxu0 0
  %113 = vmatpush1.bf16.msra.mxu0 %v103
  %114 = vmatprep.subr.bf16.mxu0 0
  %115 = vmatpush1.bf16.msra.mxu0 %v102
  %116 = vmatprep.subr.bf16.mxu0 0
  %117 = vmatpush1.bf16.msra.mxu0 %v101
  %118 = vmatprep.subr.bf16.mxu0 0
  %119 = vmatpush1.bf16.msra.mxu0 %v100
  %120 = vmatprep.subr.bf16.mxu0 0
  %121 = vmatpush1.bf16.msra.mxu0 %v99
  %122 = vmatprep.subr.bf16.mxu0 0
  %123 = vmatpush1.bf16.msra.mxu0 %v98
  %124 = vmatprep.subr.bf16.mxu0 0
  %125 = vmatpush1.bf16.msra.mxu0 %v97
  %126 = vmatprep.subr.bf16.mxu0 0
  %127 = vmatpush1.bf16.msra.mxu0 %v96
  %128 = vmatprep.subr.bf16.mxu0 0
  %129 = vmatpush2.bf16.msra.mxu0 0
  %130 = vmatprep.subr.bf16.mxu0 0
  %131 = vmatpush2.bf16.msra.mxu0 0
  %132 = vmatprep.subr.bf16.mxu0 0
  %133 = vmatpush2.bf16.msra.mxu0 0
  %134 = vmatprep.subr.bf16.mxu0 0
  %135 = vmatpush2.bf16.msra.mxu0 0
  %136 = vmatprep.subr.bf16.mxu0 0
  %137 = vmatpush2.bf16.msra.mxu0 0
  %138 = vmatprep.subr.bf16.mxu0 0
  %139 = vmatpush2.bf16.msra.mxu0 0
  %140 = vmatprep.subr.bf16.mxu0 0
  %141 = vmatpush2.bf16.msra.mxu0 0
  %142 = vmatprep.subr.bf16.mxu0 0
  %143 = vmatpush2.bf16.msra.mxu0 0
  %144 = vmatprep.mubr.bf16.mxu0 0
  %145 = vmatmul.mubr.bf16.gmra.mxu0 %v60
  %v146 = vpop.f32.mrf.mxu0
  %v147 = vadd.f32 0.0, %v146
  %v148 = vpop.f32.mrf.mxu0
  %v149 = vpop.f32.mrf.mxu0
  %v150 = vadd.f32 0.0, %v149
  %v151 = vpop.f32.mrf.mxu0
  %152 = vmatprep.mubr.bf16.mxu0 0
  %153 = vmatmul.mubr.bf16.gmra.mxu0 %v61
  %v154 = vpop.f32.mrf.mxu0
  %v155 = vadd.f32 0.0, %v154
  %v156 = vpop.f32.mrf.mxu0
  %v157 = vpop.f32.mrf.mxu0
  %v158 = vadd.f32 0.0, %v157
  %v159 = vpop.f32.mrf.mxu0
  %160 = vdwg.mxu0
  %v161 = vadd.f32 %v28, %v147
  %v162 = vadd.f32 %v29, %v150
  %v163 = vadd.f32 %v30, %v155
  %v164 = vadd.f32 %v31, %v158
  %165 = vst [vmem:[#allocation2] sm:$0xff] %v161
  %166 = vst [vmem:[#allocation2 + $0x8] sm:$0xff] %v162
  %167 = vst [vmem:[#allocation2 + $0x10] sm:$0xff] %v163
  %168 = vst [vmem:[#allocation2 + $0x18] sm:$0xff] %v164
  // Predicated region
  $region22: #{_lambda_.25} parent=0 // pred_check
    %p169 = pneg %p20
  $region23: #{_lambda_.25} parent=0 // pred_check_branch
    %171 = sbr.rel (%p169) target = $region25
  $region24: #{_lambda_.25} parent=0 // pred_region
    %v172 = vld [vmem:[#allocation2] sm:$0xff]
    %v173 = vld [vmem:[#allocation2 + $0x8] sm:$0xff]
    %v174 = vld [vmem:[#allocation2 + $0x10] sm:$0xff]
    %v175 = vld [vmem:[#allocation2 + $0x18] sm:$0xff]
    %v176 = vld [vmem:[%s2] sm:$0x1]
    %v178 = vlaneseq
    %v179 = vshrl.u32 %v178, 7
    %v180 = vsub.s32 0, %v179
    %v181 = vrot.slane %v176, %v180
    %v183 = vadd.f32 %v172, %v181
    %v184 = vadd.f32 %v173, %v181
    %v185 = vadd.f32 %v174, %v181
    %v186 = vadd.f32 %v175, %v181
    %v187 = vld [vmem:[%s3] sm:$0xff]
    %v188 = vld [vmem:[%s3 + $0x8] sm:$0xff]
    %v189 = vld [vmem:[%s3 + $0x10] sm:$0xff]
    %v190 = vld [vmem:[%s3 + $0x18] sm:$0xff]
    %vm191 = vcmp.gt.f32.partialorder %v187, 1.0
    %vm192 = vcmp.gt.f32.partialorder %v188, 1.0
    %vm193 = vcmp.gt.f32.partialorder %v189, 1.0
    %vm194 = vcmp.gt.f32.partialorder %v190, 1.0
    %v195 = vsel %vm191, 1.0, 0.0
    %v196 = vsel %vm192, 1.0, 0.0
    %v197 = vsel %vm193, 1.0, 0.0
    %v198 = vsel %vm194, 1.0, 0.0
    %v199 = vmul.f32 %v187, 0.9
    %v200 = vmul.f32 %v188, 0.9
    %v201 = vmul.f32 %v189, 0.9
    %v202 = vmul.f32 %v190, 0.9
    %v203 = vadd.f32 %v199, %v183
    %v204 = vadd.f32 %v200, %v184
    %v205 = vadd.f32 %v201, %v185
    %v206 = vadd.f32 %v202, %v186
    %v207 = vsub.f32 %v203, %v195
    %v208 = vsub.f32 %v204, %v196
    %v209 = vsub.f32 %v205, %v197
    %v210 = vsub.f32 %v206, %v198
    %vm211 = vcmp.gt.f32.partialorder %v207, 1.0
    %vm212 = vcmp.gt.f32.partialorder %v208, 1.0
    %vm213 = vcmp.gt.f32.partialorder %v209, 1.0
    %vm214 = vcmp.gt.f32.partialorder %v210, 1.0
    %v215 = vsel %vm211, 1.0, 0.0
    %v216 = vsel %vm212, 1.0, 0.0
    %v217 = vsel %vm213, 1.0, 0.0
    %v218 = vsel %vm214, 1.0, 0.0
    %219 = vst [vmem:[%s4] sm:$0xff] %v215
    %220 = vst [vmem:[%s4 + $0x8] sm:$0xff] %v216
    %221 = vst [vmem:[%s4 + $0x10] sm:$0xff] %v217
    %222 = vst [vmem:[%s4 + $0x18] sm:$0xff] %v218
    %223 = vst [vmem:[%s5] sm:$0xff] %v207
    %224 = vst [vmem:[%s5 + $0x8] sm:$0xff] %v208
    %225 = vst [vmem:[%s5 + $0x10] sm:$0xff] %v209
    %226 = vst [vmem:[%s5 + $0x18] sm:$0xff] %v210
  $region25: #{_lambda_.25} parent=0 // pred_fallthru
    _
  // Predicated region
  $region26: #{_lambda_.25} parent=0 // pred_check
    _
  $region27: #{_lambda_.25} parent=0 // pred_check_branch
    %228 = sbr.rel (0) target = $region29
  $region28: #{_lambda_.25} parent=0 // pred_region
    _
  $region29: #{_lambda_.25} parent=0 // pred_fallthru
    _
  // Predicated region
  $region30: #{_lambda_.25} parent=0 // pred_check
    _
  $region31: #{_lambda_.25} parent=0 // pred_check_branch
    %230 = sbr.rel (0) target = $region33
  $region32: #{_lambda_.25} parent=0 // pred_region
    _
  $region33: #{_lambda_.25} parent=0 // pred_fallthru
    _
  // Predicated region
  $region34: #{_lambda_.25} parent=0 // pred_check
    _
  $region35: #{_lambda_.25} parent=0 // pred_check_branch
    %232 = sbr.rel (0) target = $region37
  $region36: #{_lambda_.25} parent=0 // pred_region
    _
  $region37: #{_lambda_.25} parent=0 // pred_fallthru
    _
  // Predicated region
  $region38: #{_lambda_.25} parent=0 // pred_check
    _
  $region39: #{_lambda_.25} parent=0 // pred_check_branch
    %234 = sbr.rel (0) target = $region41
  $region40: #{_lambda_.25} parent=0 // pred_region
    _
  $region41: #{_lambda_.25} parent=0 // pred_fallthru
    _

// kernel: _lambda_.27
$region0: #{_lambda_.27}
  #allocation0 [shape = 'u32[]', space=smem, size = 0x4, offset = 0x4, fixed_abs, tag = 'smem constant byte address 0x4 - core index']
  #allocation1 [shape = 'u32[144,128]{1,0:T(1,128)}', space=vmem, size = 0x12000, scoped, tag = 'internal scratch']
  #allocation2 [shape = 'f32[32,128]{1,0:T(8,128)}', space=vmem, size = 0x4000, scoped, tag = 'scratch operand']
  %s0 = inlined_call_operand.vmem [shape: bf16[32,640], index: 0, kind: input, shape index: {}]
  %s1 = inlined_call_operand.vmem [shape: bf16[640,128], index: 1, kind: input, shape index: {}]
  %s2 = inlined_call_operand.vmem [shape: f32[1,128], index: 2, kind: input, shape index: {}]
  %s3 = inlined_call_operand.vmem [shape: f32[32,128], index: 3, kind: input, shape index: {}]
  %s4 = inlined_call_operand.vmem [shape: f32[32,128], index: 4, kind: input, shape index: {}, may-alias: {4,6}]
  %s5 = inlined_call_operand.vmem [shape: f32[32,128], index: 5, kind: output, shape index: {0}]
  %s6 = inlined_call_operand.vmem [shape: f32[32,128], index: 6, kind: output, shape index: {1}, may-alias: {4,6}]
  %7 = xla_tuple %s5, %s6
  %s8 = sld [smem:[#allocation0]]
  $region46: #{_lambda_.27} parent=0
    _
  %s10 = ssub.s32 1, %s8
  %s11 = scalar_select 0, %s10, %s8
  // Predicated region
  $region2: #{_lambda_.27} parent=0 // pred_check
    _
  $region3: #{_lambda_.27} parent=0 // pred_check_branch
    %13 = sbr.rel (0) target = $region5
  $region4: #{_lambda_.27} parent=0 // pred_region
    _
  $region5: #{_lambda_.27} parent=0 // pred_fallthru
    _
  // Predicated region
  $region6: #{_lambda_.27} parent=0 // pred_check
    _
  $region7: #{_lambda_.27} parent=0 // pred_check_branch
    %15 = sbr.rel (0) target = $region9
  $region8: #{_lambda_.27} parent=0 // pred_region
    _
  $region9: #{_lambda_.27} parent=0 // pred_fallthru
    _
  // Predicated region
  $region10: #{_lambda_.27} parent=0 // pred_check
    _
  $region11: #{_lambda_.27} parent=0 // pred_check_branch
    %17 = sbr.rel (0) target = $region13
  $region12: #{_lambda_.27} parent=0 // pred_region
    _
  $region13: #{_lambda_.27} parent=0 // pred_fallthru
    _
  // Predicated region
  $region14: #{_lambda_.27} parent=0 // pred_check
    _
  $region15: #{_lambda_.27} parent=0 // pred_check_branch
    %19 = sbr.rel (0) target = $region17
  $region16: #{_lambda_.27} parent=0 // pred_region
    _
  $region17: #{_lambda_.27} parent=0 // pred_fallthru
    _
  // Predicated region
  $region18: #{_lambda_.27} parent=0 // pred_check
    _
  $region19: #{_lambda_.27} parent=0 // pred_check_branch
    %21 = sbr.rel (0) target = $region21
  $region20: #{_lambda_.27} parent=0 // pred_region
    _
  $region21: #{_lambda_.27} parent=0 // pred_fallthru
    _
  %p23 = scmp.eq.s32.totalorder 0, 0
  // Predicated region
  $region22: #{_lambda_.27} parent=0 // pred_check
    %p24 = pneg %p23
  $region23: #{_lambda_.27} parent=0 // pred_check_branch
    %26 = sbr.rel (%p24) target = $region25
  $region24: #{_lambda_.27} parent=0 // pred_region
    %27 = vst [vmem:[#allocation2] sm:$0xff] 0.0
    %28 = vst [vmem:[#allocation2 + $0x8] sm:$0xff] 0.0
    %29 = vst [vmem:[#allocation2 + $0x10] sm:$0xff] 0.0
    %30 = vst [vmem:[#allocation2 + $0x18] sm:$0xff] 0.0
  $region25: #{_lambda_.27} parent=0 // pred_fallthru
    _
  %v31 = vld [vmem:[#allocation2] sm:$0xff]
  %v32 = vld [vmem:[#allocation2 + $0x8] sm:$0xff]
  %v33 = vld [vmem:[#allocation2 + $0x10] sm:$0xff]
  %v34 = vld [vmem:[#allocation2 + $0x18] sm:$0xff]
  %v35 = vld [vmem:[%s0] sm:$0xff]
  %v36 = vld [vmem:[%s0 + $0x8] sm:$0xff]
  %v37 = vld [vmem:[%s0 + $0x10] sm:$0xf]
  %v38 = vld [vmem:[%s0 + $0x14] sm:$0xff]
  %v39 = vld [vmem:[%s0 + $0x1c] sm:$0xff]
  %v40 = vld [vmem:[%s0 + $0x24] sm:$0xf]
  %v41 = vld [vmem:[%s0 + $0x28] sm:$0xff]
  %v42 = vld [vmem:[%s0 + $0x30] sm:$0xff]
  %v43 = vld [vmem:[%s0 + $0x38] sm:$0xf]
  %v44 = vld [vmem:[%s0 + $0x3c] sm:$0xff]
  %v45 = vld [vmem:[%s0 + $0x44] sm:$0xff]
  %v46 = vld [vmem:[%s0 + $0x4c] sm:$0xf]
  %v47 = vld [vmem:[%s1] sm:$0xf]
  %v48 = vld [vmem:[%s1 + $0x4] sm:$0xf]
  %v49 = vld [vmem:[%s1 + $0x8] sm:$0xf]
  %v50 = vld [vmem:[%s1 + $0xc] sm:$0xf]
  %v51 = vld [vmem:[%s1 + $0x10] sm:$0xf]
  %v52 = vld [vmem:[%s1 + $0x14] sm:$0xf]
  %v53 = vld [vmem:[%s1 + $0x18] sm:$0xf]
  %v54 = vld [vmem:[%s1 + $0x1c] sm:$0xf]
  %v55 = vld [vmem:[%s1 + $0x20] sm:$0xf]
  %v56 = vld [vmem:[%s1 + $0x24] sm:$0xf]
  %v57 = vld [vmem:[%s1 + $0x28] sm:$0xf]
  %v58 = vld [vmem:[%s1 + $0x2c] sm:$0xf]
  %v59 = vld [vmem:[%s1 + $0x30] sm:$0xf]
  %v60 = vld [vmem:[%s1 + $0x34] sm:$0xf]
  %v61 = vld [vmem:[%s1 + $0x38] sm:$0xf]
  %v62 = vld [vmem:[%s1 + $0x3c] sm:$0xf]
  %v63 = vld [vmem:[%s1 + $0x40] sm:$0xf]
  %v64 = vld [vmem:[%s1 + $0x44] sm:$0xf]
  %v65 = vld [vmem:[%s1 + $0x48] sm:$0xf]
  %v66 = vld [vmem:[%s1 + $0x4c] sm:$0xf]
  %v67 = vld [vmem:[%s1 + $0x50] sm:$0xf]
  %v68 = vld [vmem:[%s1 + $0x54] sm:$0xf]
  %v69 = vld [vmem:[%s1 + $0x58] sm:$0xf]
  %v70 = vld [vmem:[%s1 + $0x5c] sm:$0xf]
  %v71 = vld [vmem:[%s1 + $0x60] sm:$0xf]
  %v72 = vld [vmem:[%s1 + $0x64] sm:$0xf]
  %v73 = vld [vmem:[%s1 + $0x68] sm:$0xf]
  %v74 = vld [vmem:[%s1 + $0x6c] sm:$0xf]
  %v75 = vld [vmem:[%s1 + $0x70] sm:$0xf]
  %v76 = vld [vmem:[%s1 + $0x74] sm:$0xf]
  %v77 = vld [vmem:[%s1 + $0x78] sm:$0xf]
  %v78 = vld [vmem:[%s1 + $0x7c] sm:$0xf]
  %v79 = vld [vmem:[%s1 + $0x80] sm:$0xf]
  %v80 = vld [vmem:[%s1 + $0x84] sm:$0xf]
  %v81 = vld [vmem:[%s1 + $0x88] sm:$0xf]
  %v82 = vld [vmem:[%s1 + $0x8c] sm:$0xf]
  %v83 = vld [vmem:[%s1 + $0x90] sm:$0xf]
  %v84 = vld [vmem:[%s1 + $0x94] sm:$0xf]
  %v85 = vld [vmem:[%s1 + $0x98] sm:$0xf]
  %v86 = vld [vmem:[%s1 + $0x9c] sm:$0xf]
  %v87 = vld [vmem:[%s1 + $0xa0] sm:$0xf]
  %v88 = vld [vmem:[%s1 + $0xa4] sm:$0xf]
  %v89 = vld [vmem:[%s1 + $0xa8] sm:$0xf]
  %v90 = vld [vmem:[%s1 + $0xac] sm:$0xf]
  %v91 = vld [vmem:[%s1 + $0xb0] sm:$0xf]
  %v92 = vld [vmem:[%s1 + $0xb4] sm:$0xf]
  %v93 = vld [vmem:[%s1 + $0xb8] sm:$0xf]
  %v94 = vld [vmem:[%s1 + $0xbc] sm:$0xf]
  %v95 = vld [vmem:[%s1 + $0xc0] sm:$0xf]
  %v96 = vld [vmem:[%s1 + $0xc4] sm:$0xf]
  %v97 = vld [vmem:[%s1 + $0xc8] sm:$0xf]
  %v98 = vld [vmem:[%s1 + $0xcc] sm:$0xf]
  %v99 = vld [vmem:[%s1 + $0xd0] sm:$0xf]
  %v100 = vld [vmem:[%s1 + $0xd4] sm:$0xf]
  %v101 = vld [vmem:[%s1 + $0xd8] sm:$0xf]
  %v102 = vld [vmem:[%s1 + $0xdc] sm:$0xf]
  %v103 = vld [vmem:[%s1 + $0xe0] sm:$0xf]
  %v104 = vld [vmem:[%s1 + $0xe4] sm:$0xf]
  %v105 = vld [vmem:[%s1 + $0xe8] sm:$0xf]
  %v106 = vld [vmem:[%s1 + $0xec] sm:$0xf]
  %v107 = vld [vmem:[%s1 + $0xf0] sm:$0xf]
  %v108 = vld [vmem:[%s1 + $0xf4] sm:$0xf]
  %v109 = vld [vmem:[%s1 + $0xf8] sm:$0xf]
  %v110 = vld [vmem:[%s1 + $0xfc] sm:$0xf]
  %v111 = vld [vmem:[%s1 + $0x100] sm:$0xf]
  %v112 = vld [vmem:[%s1 + $0x104] sm:$0xf]
  %v113 = vld [vmem:[%s1 + $0x108] sm:$0xf]
  %v114 = vld [vmem:[%s1 + $0x10c] sm:$0xf]
  %v115 = vld [vmem:[%s1 + $0x110] sm:$0xf]
  %v116 = vld [vmem:[%s1 + $0x114] sm:$0xf]
  %v117 = vld [vmem:[%s1 + $0x118] sm:$0xf]
  %v118 = vld [vmem:[%s1 + $0x11c] sm:$0xf]
  %v119 = vld [vmem:[%s1 + $0x120] sm:$0xf]
  %v120 = vld [vmem:[%s1 + $0x124] sm:$0xf]
  %v121 = vld [vmem:[%s1 + $0x128] sm:$0xf]
  %v122 = vld [vmem:[%s1 + $0x12c] sm:$0xf]
  %v123 = vld [vmem:[%s1 + $0x130] sm:$0xf]
  %v124 = vld [vmem:[%s1 + $0x134] sm:$0xf]
  %v125 = vld [vmem:[%s1 + $0x138] sm:$0xf]
  %v126 = vld [vmem:[%s1 + $0x13c] sm:$0xf]
  %v139 = vunpack.c.l.b16 %v35
  %v140 = vunpack.c.h.b16 %v35
  %v141 = vunpack.c.l.b16 %v36
  %v142 = vunpack.c.h.b16 %v36
  %v143 = vunpack.c.l.b16 %v37
  %v144 = vunpack.c.l.b16 %v38
  %v145 = vunpack.c.h.b16 %v38
  %v146 = vunpack.c.l.b16 %v39
  %v147 = vunpack.c.h.b16 %v39
  %v148 = vunpack.c.l.b16 %v40
  %v149 = vunpack.c.l.b16 %v41
  %v150 = vunpack.c.h.b16 %v41
  %v151 = vunpack.c.l.b16 %v42
  %v152 = vunpack.c.h.b16 %v42
  %v153 = vunpack.c.l.b16 %v43
  %v154 = vunpack.c.l.b16 %v44
  %v155 = vunpack.c.h.b16 %v44
  %v156 = vunpack.c.l.b16 %v45
  %v157 = vunpack.c.h.b16 %v45
  %v158 = vunpack.c.l.b16 %v46
  %v159 = vpack.c.b16 %v144, %v139
  %v160 = vpack.c.b16 %v145, %v140
  %v161 = vpack.c.b16 %v146, %v141
  %v162 = vpack.c.b16 %v147, %v142
  %v163 = vpack.c.b16 %v148, %v143
  %v164 = vpack.c.b16 %v154, %v149
  %v165 = vpack.c.b16 %v155, %v150
  %v166 = vpack.c.b16 %v156, %v151
  %v167 = vpack.c.b16 %v157, %v152
  %v168 = vpack.c.b16 %v158, %v153
  %v259 = vunpack.c.l.b16 %v47
  %v260 = vunpack.c.l.b16 %v48
  %v261 = vunpack.c.l.b16 %v49
  %v262 = vunpack.c.l.b16 %v50
  %v263 = vunpack.c.l.b16 %v51
  %v264 = vunpack.c.l.b16 %v52
  %v265 = vunpack.c.l.b16 %v53
  %v266 = vunpack.c.l.b16 %v54
  %v267 = vunpack.c.l.b16 %v55
  %v268 = vunpack.c.l.b16 %v56
  %v269 = vunpack.c.l.b16 %v57
  %v270 = vunpack.c.l.b16 %v58
  %v271 = vunpack.c.l.b16 %v59
  %v272 = vunpack.c.l.b16 %v60
  %v273 = vunpack.c.l.b16 %v61
  %v274 = vunpack.c.l.b16 %v62
  %v275 = vunpack.c.l.b16 %v63
  %v276 = vunpack.c.l.b16 %v64
  %v277 = vunpack.c.l.b16 %v65
  %v278 = vunpack.c.l.b16 %v66
  %v279 = vunpack.c.l.b16 %v67
  %v280 = vunpack.c.l.b16 %v68
  %v281 = vunpack.c.l.b16 %v69
  %v282 = vunpack.c.l.b16 %v70
  %v283 = vunpack.c.l.b16 %v71
  %v284 = vunpack.c.l.b16 %v72
  %v285 = vunpack.c.l.b16 %v73
  %v286 = vunpack.c.l.b16 %v74
  %v287 = vunpack.c.l.b16 %v75
  %v288 = vunpack.c.l.b16 %v76
  %v289 = vunpack.c.l.b16 %v77
  %v290 = vunpack.c.l.b16 %v78
  %v291 = vunpack.c.l.b16 %v79
  %v292 = vunpack.c.l.b16 %v80
  %v293 = vunpack.c.l.b16 %v81
  %v294 = vunpack.c.l.b16 %v82
  %v295 = vunpack.c.l.b16 %v83
  %v296 = vunpack.c.l.b16 %v84
  %v297 = vunpack.c.l.b16 %v85
  %v298 = vunpack.c.l.b16 %v86
  %v299 = vunpack.c.l.b16 %v87
  %v300 = vunpack.c.l.b16 %v88
  %v301 = vunpack.c.l.b16 %v89
  %v302 = vunpack.c.l.b16 %v90
  %v303 = vunpack.c.l.b16 %v91
  %v304 = vunpack.c.l.b16 %v92
  %v305 = vunpack.c.l.b16 %v93
  %v306 = vunpack.c.l.b16 %v94
  %v307 = vunpack.c.l.b16 %v95
  %v308 = vunpack.c.l.b16 %v96
  %v309 = vunpack.c.l.b16 %v97
  %v310 = vunpack.c.l.b16 %v98
  %v311 = vunpack.c.l.b16 %v99
  %v312 = vunpack.c.l.b16 %v100
  %v313 = vunpack.c.l.b16 %v101
  %v314 = vunpack.c.l.b16 %v102
  %v315 = vunpack.c.l.b16 %v103
  %v316 = vunpack.c.l.b16 %v104
  %v317 = vunpack.c.l.b16 %v105
  %v318 = vunpack.c.l.b16 %v106
  %v319 = vunpack.c.l.b16 %v107
  %v320 = vunpack.c.l.b16 %v108
  %v321 = vunpack.c.l.b16 %v109
  %v322 = vunpack.c.l.b16 %v110
  %v323 = vunpack.c.l.b16 %v111
  %v324 = vunpack.c.l.b16 %v112
  %v325 = vunpack.c.l.b16 %v113
  %v326 = vunpack.c.l.b16 %v114
  %v327 = vunpack.c.l.b16 %v115
  %v328 = vunpack.c.l.b16 %v116
  %v329 = vunpack.c.l.b16 %v117
  %v330 = vunpack.c.l.b16 %v118
  %v331 = vunpack.c.l.b16 %v119
  %v332 = vunpack.c.l.b16 %v120
  %v333 = vunpack.c.l.b16 %v121
  %v334 = vunpack.c.l.b16 %v122
  %v335 = vunpack.c.l.b16 %v123
  %v336 = vunpack.c.l.b16 %v124
  %v337 = vunpack.c.l.b16 %v125
  %v338 = vunpack.c.l.b16 %v126
  %v339 = vpack.c.b16 %v260, %v259
  %v340 = vpack.c.b16 %v262, %v261
  %v341 = vpack.c.b16 %v264, %v263
  %v342 = vpack.c.b16 %v266, %v265
  %v343 = vpack.c.b16 %v268, %v267
  %v344 = vpack.c.b16 %v270, %v269
  %v345 = vpack.c.b16 %v272, %v271
  %v346 = vpack.c.b16 %v274, %v273
  %v347 = vpack.c.b16 %v276, %v275
  %v348 = vpack.c.b16 %v278, %v277
  %v349 = vpack.c.b16 %v280, %v279
  %v350 = vpack.c.b16 %v282, %v281
  %v351 = vpack.c.b16 %v284, %v283
  %v352 = vpack.c.b16 %v286, %v285
  %v353 = vpack.c.b16 %v288, %v287
  %v354 = vpack.c.b16 %v290, %v289
  %v355 = vpack.c.b16 %v292, %v291
  %v356 = vpack.c.b16 %v294, %v293
  %v357 = vpack.c.b16 %v296, %v295
  %v358 = vpack.c.b16 %v298, %v297
  %v359 = vpack.c.b16 %v300, %v299
  %v360 = vpack.c.b16 %v302, %v301
  %v361 = vpack.c.b16 %v304, %v303
  %v362 = vpack.c.b16 %v306, %v305
  %v363 = vpack.c.b16 %v308, %v307
  %v364 = vpack.c.b16 %v310, %v309
  %v365 = vpack.c.b16 %v312, %v311
  %v366 = vpack.c.b16 %v314, %v313
  %v367 = vpack.c.b16 %v316, %v315
  %v368 = vpack.c.b16 %v318, %v317
  %v369 = vpack.c.b16 %v320, %v319
  %v370 = vpack.c.b16 %v322, %v321
  %v371 = vpack.c.b16 %v324, %v323
  %v372 = vpack.c.b16 %v326, %v325
  %v373 = vpack.c.b16 %v328, %v327
  %v374 = vpack.c.b16 %v330, %v329
  %v375 = vpack.c.b16 %v332, %v331
  %v376 = vpack.c.b16 %v334, %v333
  %v377 = vpack.c.b16 %v336, %v335
  %v378 = vpack.c.b16 %v338, %v337
  %419 = vmatprep.subr.bf16.mxu0 0
  %420 = vmatpush1.bf16.msra.mxu0 %v346
  %421 = vmatprep.subr.bf16.mxu0 0
  %422 = vmatpush1.bf16.msra.mxu0 %v345
  %423 = vmatprep.subr.bf16.mxu0 0
  %424 = vmatpush1.bf16.msra.mxu0 %v344
  %425 = vmatprep.subr.bf16.mxu0 0
  %426 = vmatpush1.bf16.msra.mxu0 %v343
  %427 = vmatprep.subr.bf16.mxu0 0
  %428 = vmatpush1.bf16.msra.mxu0 %v342
  %429 = vmatprep.subr.bf16.mxu0 0
  %430 = vmatpush1.bf16.msra.mxu0 %v341
  %431 = vmatprep.subr.bf16.mxu0 0
  %432 = vmatpush1.bf16.msra.mxu0 %v340
  %433 = vmatprep.subr.bf16.mxu0 0
  %434 = vmatpush1.bf16.msra.mxu0 %v339
  %435 = vmatprep.subr.bf16.mxu0 0
  %436 = vmatpush2.bf16.msra.mxu0 %v354
  %437 = vmatprep.subr.bf16.mxu0 0
  %438 = vmatpush2.bf16.msra.mxu0 %v353
  %439 = vmatprep.subr.bf16.mxu0 0
  %440 = vmatpush2.bf16.msra.mxu0 %v352
  %441 = vmatprep.subr.bf16.mxu0 0
  %442 = vmatpush2.bf16.msra.mxu0 %v351
  %443 = vmatprep.subr.bf16.mxu0 0
  %444 = vmatpush2.bf16.msra.mxu0 %v350
  %445 = vmatprep.subr.bf16.mxu0 0
  %446 = vmatpush2.bf16.msra.mxu0 %v349
  %447 = vmatprep.subr.bf16.mxu0 0
  %448 = vmatpush2.bf16.msra.mxu0 %v348
  %449 = vmatprep.subr.bf16.mxu0 0
  %450 = vmatpush2.bf16.msra.mxu0 %v347
  %451 = vmatprep.mubr.bf16.mxu0 %v160
  %452 = vmatmul.mubr.bf16.gmra.mxu0 %v159
  %v453 = vpop.f32.mrf.mxu0
  %v454 = vadd.f32 0.0, %v453
  %v455 = vpop.f32.mrf.mxu0
  %v456 = vpop.f32.mrf.mxu0
  %v457 = vadd.f32 0.0, %v456
  %v458 = vpop.f32.mrf.mxu0
  %459 = vmatprep.mubr.bf16.mxu0 %v165
  %460 = vmatmul.mubr.bf16.gmra.mxu0 %v164
  %v461 = vpop.f32.mrf.mxu0
  %v462 = vadd.f32 0.0, %v461
  %v463 = vpop.f32.mrf.mxu0
  %v464 = vpop.f32.mrf.mxu0
  %v465 = vadd.f32 0.0, %v464
  %v466 = vpop.f32.mrf.mxu0
  %467 = vdwg.mxu0
  %468 = vmatprep.subr.bf16.mxu0 0
  %469 = vmatpush1.bf16.msra.mxu0 %v362
  %470 = vmatprep.subr.bf16.mxu0 0
  %471 = vmatpush1.bf16.msra.mxu0 %v361
  %472 = vmatprep.subr.bf16.mxu0 0
  %473 = vmatpush1.bf16.msra.mxu0 %v360
  %474 = vmatprep.subr.bf16.mxu0 0
  %475 = vmatpush1.bf16.msra.mxu0 %v359
  %476 = vmatprep.subr.bf16.mxu0 0
  %477 = vmatpush1.bf16.msra.mxu0 %v358
  %478 = vmatprep.subr.bf16.mxu0 0
  %479 = vmatpush1.bf16.msra.mxu0 %v357
  %480 = vmatprep.subr.bf16.mxu0 0
  %481 = vmatpush1.bf16.msra.mxu0 %v356
  %482 = vmatprep.subr.bf16.mxu0 0
  %483 = vmatpush1.bf16.msra.mxu0 %v355
  %484 = vmatprep.subr.bf16.mxu0 0
  %485 = vmatpush2.bf16.msra.mxu0 %v370
  %486 = vmatprep.subr.bf16.mxu0 0
  %487 = vmatpush2.bf16.msra.mxu0 %v369
  %488 = vmatprep.subr.bf16.mxu0 0
  %489 = vmatpush2.bf16.msra.mxu0 %v368
  %490 = vmatprep.subr.bf16.mxu0 0
  %491 = vmatpush2.bf16.msra.mxu0 %v367
  %492 = vmatprep.subr.bf16.mxu0 0
  %493 = vmatpush2.bf16.msra.mxu0 %v366
  %494 = vmatprep.subr.bf16.mxu0 0
  %495 = vmatpush2.bf16.msra.mxu0 %v365
  %496 = vmatprep.subr.bf16.mxu0 0
  %497 = vmatpush2.bf16.msra.mxu0 %v364
  %498 = vmatprep.subr.bf16.mxu0 0
  %499 = vmatpush2.bf16.msra.mxu0 %v363
  %500 = vmatprep.mubr.bf16.mxu0 %v162
  %501 = vmatmul.mubr.bf16.gmra.mxu0 %v161
  %v502 = vpop.f32.mrf.mxu0
  %v503 = vadd.f32 %v454, %v502
  %v504 = vpop.f32.mrf.mxu0
  %v505 = vpop.f32.mrf.mxu0
  %v506 = vadd.f32 %v457, %v505
  %v507 = vpop.f32.mrf.mxu0
  %508 = vmatprep.mubr.bf16.mxu0 %v167
  %509 = vmatmul.mubr.bf16.gmra.mxu0 %v166
  %v510 = vpop.f32.mrf.mxu0
  %v511 = vadd.f32 %v462, %v510
  %v512 = vpop.f32.mrf.mxu0
  %v513 = vpop.f32.mrf.mxu0
  %v514 = vadd.f32 %v465, %v513
  %v515 = vpop.f32.mrf.mxu0
  %516 = vdwg.mxu0
  %517 = vmatprep.subr.bf16.mxu0 0
  %518 = vmatpush1.bf16.msra.mxu0 %v378
  %519 = vmatprep.subr.bf16.mxu0 0
  %520 = vmatpush1.bf16.msra.mxu0 %v377
  %521 = vmatprep.subr.bf16.mxu0 0
  %522 = vmatpush1.bf16.msra.mxu0 %v376
  %523 = vmatprep.subr.bf16.mxu0 0
  %524 = vmatpush1.bf16.msra.mxu0 %v375
  %525 = vmatprep.subr.bf16.mxu0 0
  %526 = vmatpush1.bf16.msra.mxu0 %v374
  %527 = vmatprep.subr.bf16.mxu0 0
  %528 = vmatpush1.bf16.msra.mxu0 %v373
  %529 = vmatprep.subr.bf16.mxu0 0
  %530 = vmatpush1.bf16.msra.mxu0 %v372
  %531 = vmatprep.subr.bf16.mxu0 0
  %532 = vmatpush1.bf16.msra.mxu0 %v371
  %533 = vmatprep.subr.bf16.mxu0 0
  %534 = vmatpush2.bf16.msra.mxu0 0
  %535 = vmatprep.subr.bf16.mxu0 0
  %536 = vmatpush2.bf16.msra.mxu0 0
  %537 = vmatprep.subr.bf16.mxu0 0
  %538 = vmatpush2.bf16.msra.mxu0 0
  %539 = vmatprep.subr.bf16.mxu0 0
  %540 = vmatpush2.bf16.msra.mxu0 0
  %541 = vmatprep.subr.bf16.mxu0 0
  %542 = vmatpush2.bf16.msra.mxu0 0
  %543 = vmatprep.subr.bf16.mxu0 0
  %544 = vmatpush2.bf16.msra.mxu0 0
  %545 = vmatprep.subr.bf16.mxu0 0
  %546 = vmatpush2.bf16.msra.mxu0 0
  %547 = vmatprep.subr.bf16.mxu0 0
  %548 = vmatpush2.bf16.msra.mxu0 0
  %549 = vmatprep.mubr.bf16.mxu0 0
  %550 = vmatmul.mubr.bf16.gmra.mxu0 %v163
  %v551 = vpop.f32.mrf.mxu0
  %v552 = vadd.f32 %v503, %v551
  %v553 = vpop.f32.mrf.mxu0
  %v554 = vpop.f32.mrf.mxu0
  %v555 = vadd.f32 %v506, %v554
  %v556 = vpop.f32.mrf.mxu0
  %557 = vmatprep.mubr.bf16.mxu0 0
  %558 = vmatmul.mubr.bf16.gmra.mxu0 %v168
  %v559 = vpop.f32.mrf.mxu0
  %v560 = vadd.f32 %v511, %v559
  %v561 = vpop.f32.mrf.mxu0
  %v562 = vpop.f32.mrf.mxu0
  %v563 = vadd.f32 %v514, %v562
  %v564 = vpop.f32.mrf.mxu0
  %565 = vdwg.mxu0
  %v566 = vadd.f32 %v31, %v552
  %v567 = vadd.f32 %v32, %v555
  %v568 = vadd.f32 %v33, %v560
  %v569 = vadd.f32 %v34, %v563
  %570 = vst [vmem:[#allocation2] sm:$0xff] %v566
  %571 = vst [vmem:[#allocation2 + $0x8] sm:$0xff] %v567
  %572 = vst [vmem:[#allocation2 + $0x10] sm:$0xff] %v568
  %573 = vst [vmem:[#allocation2 + $0x18] sm:$0xff] %v569
  // Predicated region
  $region26: #{_lambda_.27} parent=0 // pred_check
    %p574 = pneg %p23
  $region27: #{_lambda_.27} parent=0 // pred_check_branch
    %576 = sbr.rel (%p574) target = $region29
  $region28: #{_lambda_.27} parent=0 // pred_region
    %v577 = vld [vmem:[#allocation2] sm:$0xff]
    %v578 = vld [vmem:[#allocation2 + $0x8] sm:$0xff]
    %v579 = vld [vmem:[#allocation2 + $0x10] sm:$0xff]
    %v580 = vld [vmem:[#allocation2 + $0x18] sm:$0xff]
    %v581 = vld [vmem:[%s2] sm:$0x1]
    %v583 = vlaneseq
    %v584 = vshrl.u32 %v583, 7
    %v585 = vsub.s32 0, %v584
    %v586 = vrot.slane %v581, %v585
    %v588 = vadd.f32 %v577, %v586
    %v589 = vadd.f32 %v578, %v586
    %v590 = vadd.f32 %v579, %v586
    %v591 = vadd.f32 %v580, %v586
    %v592 = vld [vmem:[%s4] sm:$0xff]
    %v593 = vld [vmem:[%s4 + $0x8] sm:$0xff]
    %v594 = vld [vmem:[%s4 + $0x10] sm:$0xff]
    %v595 = vld [vmem:[%s4 + $0x18] sm:$0xff]
    %vm596 = vcmp.gt.f32.partialorder %v592, 1.0
    %vm597 = vcmp.gt.f32.partialorder %v593, 1.0
    %vm598 = vcmp.gt.f32.partialorder %v594, 1.0
    %vm599 = vcmp.gt.f32.partialorder %v595, 1.0
    %v600 = vsel %vm596, 1.0, 0.0
    %v601 = vsel %vm597, 1.0, 0.0
    %v602 = vsel %vm598, 1.0, 0.0
    %v603 = vsel %vm599, 1.0, 0.0
    %v604 = vmul.f32 %v592, 0.9
    %v605 = vmul.f32 %v593, 0.9
    %v606 = vmul.f32 %v594, 0.9
    %v607 = vmul.f32 %v595, 0.9
    %v608 = vadd.f32 %v604, %v588
    %v609 = vadd.f32 %v605, %v589
    %v610 = vadd.f32 %v606, %v590
    %v611 = vadd.f32 %v607, %v591
    %v612 = vsub.f32 %v608, %v600
    %v613 = vsub.f32 %v609, %v601
    %v614 = vsub.f32 %v610, %v602
    %v615 = vsub.f32 %v611, %v603
    %vm616 = vcmp.gt.f32.partialorder %v612, 1.0
    %vm617 = vcmp.gt.f32.partialorder %v613, 1.0
    %vm618 = vcmp.gt.f32.partialorder %v614, 1.0
    %vm619 = vcmp.gt.f32.partialorder %v615, 1.0
    %v620 = vsel %vm616, 1.0, 0.0
    %v621 = vsel %vm617, 1.0, 0.0
    %v622 = vsel %vm618, 1.0, 0.0
    %v623 = vsel %vm619, 1.0, 0.0
    %v624 = vld [vmem:[%s3] sm:$0xff]
    %v625 = vld [vmem:[%s3 + $0x8] sm:$0xff]
    %v626 = vld [vmem:[%s3 + $0x10] sm:$0xff]
    %v627 = vld [vmem:[%s3 + $0x18] sm:$0xff]
    %v628 = vadd.f32 %v620, %v624
    %v629 = vadd.f32 %v621, %v625
    %v630 = vadd.f32 %v622, %v626
    %v631 = vadd.f32 %v623, %v627
    %632 = vst [vmem:[%s5] sm:$0xff] %v628
    %633 = vst [vmem:[%s5 + $0x8] sm:$0xff] %v629
    %634 = vst [vmem:[%s5 + $0x10] sm:$0xff] %v630
    %635 = vst [vmem:[%s5 + $0x18] sm:$0xff] %v631
    %636 = vst [vmem:[%s6] sm:$0xff] %v612
    %637 = vst [vmem:[%s6 + $0x8] sm:$0xff] %v613
    %638 = vst [vmem:[%s6 + $0x10] sm:$0xff] %v614
    %639 = vst [vmem:[%s6 + $0x18] sm:$0xff] %v615
  $region29: #{_lambda_.27} parent=0 // pred_fallthru
    _
  // Predicated region
  $region30: #{_lambda_.27} parent=0 // pred_check
    _
  $region31: #{_lambda_.27} parent=0 // pred_check_branch
    %641 = sbr.rel (0) target = $region33
  $region32: #{_lambda_.27} parent=0 // pred_region
    _
  $region33: #{_lambda_.27} parent=0 // pred_fallthru
    _
  // Predicated region
  $region34: #{_lambda_.27} parent=0 // pred_check
    _
  $region35: #{_lambda_.27} parent=0 // pred_check_branch
    %643 = sbr.rel (0) target = $region37
  $region36: #{_lambda_.27} parent=0 // pred_region
    _
  $region37: #{_lambda_.27} parent=0 // pred_fallthru
    _
  // Predicated region
  $region38: #{_lambda_.27} parent=0 // pred_check
    _
  $region39: #{_lambda_.27} parent=0 // pred_check_branch
    %645 = sbr.rel (0) target = $region41
  $region40: #{_lambda_.27} parent=0 // pred_region
    _
  $region41: #{_lambda_.27} parent=0 // pred_fallthru
    _
  // Predicated region
  $region42: #{_lambda_.27} parent=0 // pred_check
    _
  $region43: #{_lambda_.27} parent=0 // pred_check_branch
    %647 = sbr.rel (0) target = $region45
  $region44: #{_lambda_.27} parent=0 // pred_region
    _
  $region45: #{_lambda_.27} parent=0 // pred_fallthru
    _

// kernel: _lambda_.29
$region0: #{_lambda_.29}
  #allocation0 [shape = 'u32[]', space=smem, size = 0x4, offset = 0x4, fixed_abs, tag = 'smem constant byte address 0x4 - core index']
  #allocation1 [shape = 'u32[144,128]{1,0:T(1,128)}', space=vmem, size = 0x12000, scoped, tag = 'internal scratch']
  #allocation2 [shape = 'f32[32,128]{1,0:T(8,128)}', space=vmem, size = 0x4000, scoped, tag = 'scratch operand']
  %s0 = inlined_call_operand.vmem [shape: bf16[32,640], index: 0, kind: input, shape index: {}]
  %s1 = inlined_call_operand.vmem [shape: bf16[640,128], index: 1, kind: input, shape index: {}]
  %s2 = inlined_call_operand.vmem [shape: f32[1,128], index: 2, kind: input, shape index: {}]
  %s3 = inlined_call_operand.vmem [shape: f32[32,128], index: 3, kind: input, shape index: {}, may-alias: {3,5}]
  %s4 = inlined_call_operand.vmem [shape: f32[32,128], index: 4, kind: output, shape index: {0}]
  %s5 = inlined_call_operand.vmem [shape: f32[32,128], index: 5, kind: output, shape index: {1}, may-alias: {3,5}]
  %6 = xla_tuple %s4, %s5
  %s7 = sld [smem:[#allocation0]]
  $region42: #{_lambda_.29} parent=0
    _
  %s9 = ssub.s32 1, %s7
  %s10 = scalar_select 0, %s9, %s7
  // Predicated region
  $region2: #{_lambda_.29} parent=0 // pred_check
    _
  $region3: #{_lambda_.29} parent=0 // pred_check_branch
    %12 = sbr.rel (0) target = $region5
  $region4: #{_lambda_.29} parent=0 // pred_region
    _
  $region5: #{_lambda_.29} parent=0 // pred_fallthru
    _
  // Predicated region
  $region6: #{_lambda_.29} parent=0 // pred_check
    _
  $region7: #{_lambda_.29} parent=0 // pred_check_branch
    %14 = sbr.rel (0) target = $region9
  $region8: #{_lambda_.29} parent=0 // pred_region
    _
  $region9: #{_lambda_.29} parent=0 // pred_fallthru
    _
  // Predicated region
  $region10: #{_lambda_.29} parent=0 // pred_check
    _
  $region11: #{_lambda_.29} parent=0 // pred_check_branch
    %16 = sbr.rel (0) target = $region13
  $region12: #{_lambda_.29} parent=0 // pred_region
    _
  $region13: #{_lambda_.29} parent=0 // pred_fallthru
    _
  // Predicated region
  $region14: #{_lambda_.29} parent=0 // pred_check
    _
  $region15: #{_lambda_.29} parent=0 // pred_check_branch
    %18 = sbr.rel (0) target = $region17
  $region16: #{_lambda_.29} parent=0 // pred_region
    _
  $region17: #{_lambda_.29} parent=0 // pred_fallthru
    _
  %p20 = scmp.eq.s32.totalorder 0, 0
  // Predicated region
  $region18: #{_lambda_.29} parent=0 // pred_check
    %p21 = pneg %p20
  $region19: #{_lambda_.29} parent=0 // pred_check_branch
    %23 = sbr.rel (%p21) target = $region21
  $region20: #{_lambda_.29} parent=0 // pred_region
    %24 = vst [vmem:[#allocation2] sm:$0xff] 0.0
    %25 = vst [vmem:[#allocation2 + $0x8] sm:$0xff] 0.0
    %26 = vst [vmem:[#allocation2 + $0x10] sm:$0xff] 0.0
    %27 = vst [vmem:[#allocation2 + $0x18] sm:$0xff] 0.0
  $region21: #{_lambda_.29} parent=0 // pred_fallthru
    _
  %v28 = vld [vmem:[#allocation2] sm:$0xff]
  %v29 = vld [vmem:[#allocation2 + $0x8] sm:$0xff]
  %v30 = vld [vmem:[#allocation2 + $0x10] sm:$0xff]
  %v31 = vld [vmem:[#allocation2 + $0x18] sm:$0xff]
  %v32 = vld [vmem:[%s0] sm:$0xff]
  %v33 = vld [vmem:[%s0 + $0x8] sm:$0xff]
  %v34 = vld [vmem:[%s0 + $0x10] sm:$0xf]
  %v35 = vld [vmem:[%s0 + $0x14] sm:$0xff]
  %v36 = vld [vmem:[%s0 + $0x1c] sm:$0xff]
  %v37 = vld [vmem:[%s0 + $0x24] sm:$0xf]
  %v38 = vld [vmem:[%s0 + $0x28] sm:$0xff]
  %v39 = vld [vmem:[%s0 + $0x30] sm:$0xff]
  %v40 = vld [vmem:[%s0 + $0x38] sm:$0xf]
  %v41 = vld [vmem:[%s0 + $0x3c] sm:$0xff]
  %v42 = vld [vmem:[%s0 + $0x44] sm:$0xff]
  %v43 = vld [vmem:[%s0 + $0x4c] sm:$0xf]
  %v44 = vld [vmem:[%s1] sm:$0xf]
  %v45 = vld [vmem:[%s1 + $0x4] sm:$0xf]
  %v46 = vld [vmem:[%s1 + $0x8] sm:$0xf]
  %v47 = vld [vmem:[%s1 + $0xc] sm:$0xf]
  %v48 = vld [vmem:[%s1 + $0x10] sm:$0xf]
  %v49 = vld [vmem:[%s1 + $0x14] sm:$0xf]
  %v50 = vld [vmem:[%s1 + $0x18] sm:$0xf]
  %v51 = vld [vmem:[%s1 + $0x1c] sm:$0xf]
  %v52 = vld [vmem:[%s1 + $0x20] sm:$0xf]
  %v53 = vld [vmem:[%s1 + $0x24] sm:$0xf]
  %v54 = vld [vmem:[%s1 + $0x28] sm:$0xf]
  %v55 = vld [vmem:[%s1 + $0x2c] sm:$0xf]
  %v56 = vld [vmem:[%s1 + $0x30] sm:$0xf]
  %v57 = vld [vmem:[%s1 + $0x34] sm:$0xf]
  %v58 = vld [vmem:[%s1 + $0x38] sm:$0xf]
  %v59 = vld [vmem:[%s1 + $0x3c] sm:$0xf]
  %v60 = vld [vmem:[%s1 + $0x40] sm:$0xf]
  %v61 = vld [vmem:[%s1 + $0x44] sm:$0xf]
  %v62 = vld [vmem:[%s1 + $0x48] sm:$0xf]
  %v63 = vld [vmem:[%s1 + $0x4c] sm:$0xf]
  %v64 = vld [vmem:[%s1 + $0x50] sm:$0xf]
  %v65 = vld [vmem:[%s1 + $0x54] sm:$0xf]
  %v66 = vld [vmem:[%s1 + $0x58] sm:$0xf]
  %v67 = vld [vmem:[%s1 + $0x5c] sm:$0xf]
  %v68 = vld [vmem:[%s1 + $0x60] sm:$0xf]
  %v69 = vld [vmem:[%s1 + $0x64] sm:$0xf]
  %v70 = vld [vmem:[%s1 + $0x68] sm:$0xf]
  %v71 = vld [vmem:[%s1 + $0x6c] sm:$0xf]
  %v72 = vld [vmem:[%s1 + $0x70] sm:$0xf]
  %v73 = vld [vmem:[%s1 + $0x74] sm:$0xf]
  %v74 = vld [vmem:[%s1 + $0x78] sm:$0xf]
  %v75 = vld [vmem:[%s1 + $0x7c] sm:$0xf]
  %v76 = vld [vmem:[%s1 + $0x80] sm:$0xf]
  %v77 = vld [vmem:[%s1 + $0x84] sm:$0xf]
  %v78 = vld [vmem:[%s1 + $0x88] sm:$0xf]
  %v79 = vld [vmem:[%s1 + $0x8c] sm:$0xf]
  %v80 = vld [vmem:[%s1 + $0x90] sm:$0xf]
  %v81 = vld [vmem:[%s1 + $0x94] sm:$0xf]
  %v82 = vld [vmem:[%s1 + $0x98] sm:$0xf]
  %v83 = vld [vmem:[%s1 + $0x9c] sm:$0xf]
  %v84 = vld [vmem:[%s1 + $0xa0] sm:$0xf]
  %v85 = vld [vmem:[%s1 + $0xa4] sm:$0xf]
  %v86 = vld [vmem:[%s1 + $0xa8] sm:$0xf]
  %v87 = vld [vmem:[%s1 + $0xac] sm:$0xf]
  %v88 = vld [vmem:[%s1 + $0xb0] sm:$0xf]
  %v89 = vld [vmem:[%s1 + $0xb4] sm:$0xf]
  %v90 = vld [vmem:[%s1 + $0xb8] sm:$0xf]
  %v91 = vld [vmem:[%s1 + $0xbc] sm:$0xf]
  %v92 = vld [vmem:[%s1 + $0xc0] sm:$0xf]
  %v93 = vld [vmem:[%s1 + $0xc4] sm:$0xf]
  %v94 = vld [vmem:[%s1 + $0xc8] sm:$0xf]
  %v95 = vld [vmem:[%s1 + $0xcc] sm:$0xf]
  %v96 = vld [vmem:[%s1 + $0xd0] sm:$0xf]
  %v97 = vld [vmem:[%s1 + $0xd4] sm:$0xf]
  %v98 = vld [vmem:[%s1 + $0xd8] sm:$0xf]
  %v99 = vld [vmem:[%s1 + $0xdc] sm:$0xf]
  %v100 = vld [vmem:[%s1 + $0xe0] sm:$0xf]
  %v101 = vld [vmem:[%s1 + $0xe4] sm:$0xf]
  %v102 = vld [vmem:[%s1 + $0xe8] sm:$0xf]
  %v103 = vld [vmem:[%s1 + $0xec] sm:$0xf]
  %v104 = vld [vmem:[%s1 + $0xf0] sm:$0xf]
  %v105 = vld [vmem:[%s1 + $0xf4] sm:$0xf]
  %v106 = vld [vmem:[%s1 + $0xf8] sm:$0xf]
  %v107 = vld [vmem:[%s1 + $0xfc] sm:$0xf]
  %v108 = vld [vmem:[%s1 + $0x100] sm:$0xf]
  %v109 = vld [vmem:[%s1 + $0x104] sm:$0xf]
  %v110 = vld [vmem:[%s1 + $0x108] sm:$0xf]
  %v111 = vld [vmem:[%s1 + $0x10c] sm:$0xf]
  %v112 = vld [vmem:[%s1 + $0x110] sm:$0xf]
  %v113 = vld [vmem:[%s1 + $0x114] sm:$0xf]
  %v114 = vld [vmem:[%s1 + $0x118] sm:$0xf]
  %v115 = vld [vmem:[%s1 + $0x11c] sm:$0xf]
  %v116 = vld [vmem:[%s1 + $0x120] sm:$0xf]
  %v117 = vld [vmem:[%s1 + $0x124] sm:$0xf]
  %v118 = vld [vmem:[%s1 + $0x128] sm:$0xf]
  %v119 = vld [vmem:[%s1 + $0x12c] sm:$0xf]
  %v120 = vld [vmem:[%s1 + $0x130] sm:$0xf]
  %v121 = vld [vmem:[%s1 + $0x134] sm:$0xf]
  %v122 = vld [vmem:[%s1 + $0x138] sm:$0xf]
  %v123 = vld [vmem:[%s1 + $0x13c] sm:$0xf]
  %v136 = vunpack.c.l.b16 %v32
  %v137 = vunpack.c.h.b16 %v32
  %v138 = vunpack.c.l.b16 %v33
  %v139 = vunpack.c.h.b16 %v33
  %v140 = vunpack.c.l.b16 %v34
  %v141 = vunpack.c.l.b16 %v35
  %v142 = vunpack.c.h.b16 %v35
  %v143 = vunpack.c.l.b16 %v36
  %v144 = vunpack.c.h.b16 %v36
  %v145 = vunpack.c.l.b16 %v37
  %v146 = vunpack.c.l.b16 %v38
  %v147 = vunpack.c.h.b16 %v38
  %v148 = vunpack.c.l.b16 %v39
  %v149 = vunpack.c.h.b16 %v39
  %v150 = vunpack.c.l.b16 %v40
  %v151 = vunpack.c.l.b16 %v41
  %v152 = vunpack.c.h.b16 %v41
  %v153 = vunpack.c.l.b16 %v42
  %v154 = vunpack.c.h.b16 %v42
  %v155 = vunpack.c.l.b16 %v43
  %v156 = vpack.c.b16 %v141, %v136
  %v157 = vpack.c.b16 %v142, %v137
  %v158 = vpack.c.b16 %v143, %v138
  %v159 = vpack.c.b16 %v144, %v139
  %v160 = vpack.c.b16 %v145, %v140
  %v161 = vpack.c.b16 %v151, %v146
  %v162 = vpack.c.b16 %v152, %v147
  %v163 = vpack.c.b16 %v153, %v148
  %v164 = vpack.c.b16 %v154, %v149
  %v165 = vpack.c.b16 %v155, %v150
  %v256 = vunpack.c.l.b16 %v44
  %v257 = vunpack.c.l.b16 %v45
  %v258 = vunpack.c.l.b16 %v46
  %v259 = vunpack.c.l.b16 %v47
  %v260 = vunpack.c.l.b16 %v48
  %v261 = vunpack.c.l.b16 %v49
  %v262 = vunpack.c.l.b16 %v50
  %v263 = vunpack.c.l.b16 %v51
  %v264 = vunpack.c.l.b16 %v52
  %v265 = vunpack.c.l.b16 %v53
  %v266 = vunpack.c.l.b16 %v54
  %v267 = vunpack.c.l.b16 %v55
  %v268 = vunpack.c.l.b16 %v56
  %v269 = vunpack.c.l.b16 %v57
  %v270 = vunpack.c.l.b16 %v58
  %v271 = vunpack.c.l.b16 %v59
  %v272 = vunpack.c.l.b16 %v60
  %v273 = vunpack.c.l.b16 %v61
  %v274 = vunpack.c.l.b16 %v62
  %v275 = vunpack.c.l.b16 %v63
  %v276 = vunpack.c.l.b16 %v64
  %v277 = vunpack.c.l.b16 %v65
  %v278 = vunpack.c.l.b16 %v66
  %v279 = vunpack.c.l.b16 %v67
  %v280 = vunpack.c.l.b16 %v68
  %v281 = vunpack.c.l.b16 %v69
  %v282 = vunpack.c.l.b16 %v70
  %v283 = vunpack.c.l.b16 %v71
  %v284 = vunpack.c.l.b16 %v72
  %v285 = vunpack.c.l.b16 %v73
  %v286 = vunpack.c.l.b16 %v74
  %v287 = vunpack.c.l.b16 %v75
  %v288 = vunpack.c.l.b16 %v76
  %v289 = vunpack.c.l.b16 %v77
  %v290 = vunpack.c.l.b16 %v78
  %v291 = vunpack.c.l.b16 %v79
  %v292 = vunpack.c.l.b16 %v80
  %v293 = vunpack.c.l.b16 %v81
  %v294 = vunpack.c.l.b16 %v82
  %v295 = vunpack.c.l.b16 %v83
  %v296 = vunpack.c.l.b16 %v84
  %v297 = vunpack.c.l.b16 %v85
  %v298 = vunpack.c.l.b16 %v86
  %v299 = vunpack.c.l.b16 %v87
  %v300 = vunpack.c.l.b16 %v88
  %v301 = vunpack.c.l.b16 %v89
  %v302 = vunpack.c.l.b16 %v90
  %v303 = vunpack.c.l.b16 %v91
  %v304 = vunpack.c.l.b16 %v92
  %v305 = vunpack.c.l.b16 %v93
  %v306 = vunpack.c.l.b16 %v94
  %v307 = vunpack.c.l.b16 %v95
  %v308 = vunpack.c.l.b16 %v96
  %v309 = vunpack.c.l.b16 %v97
  %v310 = vunpack.c.l.b16 %v98
  %v311 = vunpack.c.l.b16 %v99
  %v312 = vunpack.c.l.b16 %v100
  %v313 = vunpack.c.l.b16 %v101
  %v314 = vunpack.c.l.b16 %v102
  %v315 = vunpack.c.l.b16 %v103
  %v316 = vunpack.c.l.b16 %v104
  %v317 = vunpack.c.l.b16 %v105
  %v318 = vunpack.c.l.b16 %v106
  %v319 = vunpack.c.l.b16 %v107
  %v320 = vunpack.c.l.b16 %v108
  %v321 = vunpack.c.l.b16 %v109
  %v322 = vunpack.c.l.b16 %v110
  %v323 = vunpack.c.l.b16 %v111
  %v324 = vunpack.c.l.b16 %v112
  %v325 = vunpack.c.l.b16 %v113
  %v326 = vunpack.c.l.b16 %v114
  %v327 = vunpack.c.l.b16 %v115
  %v328 = vunpack.c.l.b16 %v116
  %v329 = vunpack.c.l.b16 %v117
  %v330 = vunpack.c.l.b16 %v118
  %v331 = vunpack.c.l.b16 %v119
  %v332 = vunpack.c.l.b16 %v120
  %v333 = vunpack.c.l.b16 %v121
  %v334 = vunpack.c.l.b16 %v122
  %v335 = vunpack.c.l.b16 %v123
  %v336 = vpack.c.b16 %v257, %v256
  %v337 = vpack.c.b16 %v259, %v258
  %v338 = vpack.c.b16 %v261, %v260
  %v339 = vpack.c.b16 %v263, %v262
  %v340 = vpack.c.b16 %v265, %v264
  %v341 = vpack.c.b16 %v267, %v266
  %v342 = vpack.c.b16 %v269, %v268
  %v343 = vpack.c.b16 %v271, %v270
  %v344 = vpack.c.b16 %v273, %v272
  %v345 = vpack.c.b16 %v275, %v274
  %v346 = vpack.c.b16 %v277, %v276
  %v347 = vpack.c.b16 %v279, %v278
  %v348 = vpack.c.b16 %v281, %v280
  %v349 = vpack.c.b16 %v283, %v282
  %v350 = vpack.c.b16 %v285, %v284
  %v351 = vpack.c.b16 %v287, %v286
  %v352 = vpack.c.b16 %v289, %v288
  %v353 = vpack.c.b16 %v291, %v290
  %v354 = vpack.c.b16 %v293, %v292
  %v355 = vpack.c.b16 %v295, %v294
  %v356 = vpack.c.b16 %v297, %v296
  %v357 = vpack.c.b16 %v299, %v298
  %v358 = vpack.c.b16 %v301, %v300
  %v359 = vpack.c.b16 %v303, %v302
  %v360 = vpack.c.b16 %v305, %v304
  %v361 = vpack.c.b16 %v307, %v306
  %v362 = vpack.c.b16 %v309, %v308
  %v363 = vpack.c.b16 %v311, %v310
  %v364 = vpack.c.b16 %v313, %v312
  %v365 = vpack.c.b16 %v315, %v314
  %v366 = vpack.c.b16 %v317, %v316
  %v367 = vpack.c.b16 %v319, %v318
  %v368 = vpack.c.b16 %v321, %v320
  %v369 = vpack.c.b16 %v323, %v322
  %v370 = vpack.c.b16 %v325, %v324
  %v371 = vpack.c.b16 %v327, %v326
  %v372 = vpack.c.b16 %v329, %v328
  %v373 = vpack.c.b16 %v331, %v330
  %v374 = vpack.c.b16 %v333, %v332
  %v375 = vpack.c.b16 %v335, %v334
  %416 = vmatprep.subr.bf16.mxu0 0
  %417 = vmatpush1.bf16.msra.mxu0 %v343
  %418 = vmatprep.subr.bf16.mxu0 0
  %419 = vmatpush1.bf16.msra.mxu0 %v342
  %420 = vmatprep.subr.bf16.mxu0 0
  %421 = vmatpush1.bf16.msra.mxu0 %v341
  %422 = vmatprep.subr.bf16.mxu0 0
  %423 = vmatpush1.bf16.msra.mxu0 %v340
  %424 = vmatprep.subr.bf16.mxu0 0
  %425 = vmatpush1.bf16.msra.mxu0 %v339
  %426 = vmatprep.subr.bf16.mxu0 0
  %427 = vmatpush1.bf16.msra.mxu0 %v338
  %428 = vmatprep.subr.bf16.mxu0 0
  %429 = vmatpush1.bf16.msra.mxu0 %v337
  %430 = vmatprep.subr.bf16.mxu0 0
  %431 = vmatpush1.bf16.msra.mxu0 %v336
  %432 = vmatprep.subr.bf16.mxu0 0
  %433 = vmatpush2.bf16.msra.mxu0 %v351
  %434 = vmatprep.subr.bf16.mxu0 0
  %435 = vmatpush2.bf16.msra.mxu0 %v350
  %436 = vmatprep.subr.bf16.mxu0 0
  %437 = vmatpush2.bf16.msra.mxu0 %v349
  %438 = vmatprep.subr.bf16.mxu0 0
  %439 = vmatpush2.bf16.msra.mxu0 %v348
  %440 = vmatprep.subr.bf16.mxu0 0
  %441 = vmatpush2.bf16.msra.mxu0 %v347
  %442 = vmatprep.subr.bf16.mxu0 0
  %443 = vmatpush2.bf16.msra.mxu0 %v346
  %444 = vmatprep.subr.bf16.mxu0 0
  %445 = vmatpush2.bf16.msra.mxu0 %v345
  %446 = vmatprep.subr.bf16.mxu0 0
  %447 = vmatpush2.bf16.msra.mxu0 %v344
  %448 = vmatprep.mubr.bf16.mxu0 %v157
  %449 = vmatmul.mubr.bf16.gmra.mxu0 %v156
  %v450 = vpop.f32.mrf.mxu0
  %v451 = vadd.f32 0.0, %v450
  %v452 = vpop.f32.mrf.mxu0
  %v453 = vpop.f32.mrf.mxu0
  %v454 = vadd.f32 0.0, %v453
  %v455 = vpop.f32.mrf.mxu0
  %456 = vmatprep.mubr.bf16.mxu0 %v162
  %457 = vmatmul.mubr.bf16.gmra.mxu0 %v161
  %v458 = vpop.f32.mrf.mxu0
  %v459 = vadd.f32 0.0, %v458
  %v460 = vpop.f32.mrf.mxu0
  %v461 = vpop.f32.mrf.mxu0
  %v462 = vadd.f32 0.0, %v461
  %v463 = vpop.f32.mrf.mxu0
  %464 = vdwg.mxu0
  %465 = vmatprep.subr.bf16.mxu0 0
  %466 = vmatpush1.bf16.msra.mxu0 %v359
  %467 = vmatprep.subr.bf16.mxu0 0
  %468 = vmatpush1.bf16.msra.mxu0 %v358
  %469 = vmatprep.subr.bf16.mxu0 0
  %470 = vmatpush1.bf16.msra.mxu0 %v357
  %471 = vmatprep.subr.bf16.mxu0 0
  %472 = vmatpush1.bf16.msra.mxu0 %v356
  %473 = vmatprep.subr.bf16.mxu0 0
  %474 = vmatpush1.bf16.msra.mxu0 %v355
  %475 = vmatprep.subr.bf16.mxu0 0
  %476 = vmatpush1.bf16.msra.mxu0 %v354
  %477 = vmatprep.subr.bf16.mxu0 0
  %478 = vmatpush1.bf16.msra.mxu0 %v353
  %479 = vmatprep.subr.bf16.mxu0 0
  %480 = vmatpush1.bf16.msra.mxu0 %v352
  %481 = vmatprep.subr.bf16.mxu0 0
  %482 = vmatpush2.bf16.msra.mxu0 %v367
  %483 = vmatprep.subr.bf16.mxu0 0
  %484 = vmatpush2.bf16.msra.mxu0 %v366
  %485 = vmatprep.subr.bf16.mxu0 0
  %486 = vmatpush2.bf16.msra.mxu0 %v365
  %487 = vmatprep.subr.bf16.mxu0 0
  %488 = vmatpush2.bf16.msra.mxu0 %v364
  %489 = vmatprep.subr.bf16.mxu0 0
  %490 = vmatpush2.bf16.msra.mxu0 %v363
  %491 = vmatprep.subr.bf16.mxu0 0
  %492 = vmatpush2.bf16.msra.mxu0 %v362
  %493 = vmatprep.subr.bf16.mxu0 0
  %494 = vmatpush2.bf16.msra.mxu0 %v361
  %495 = vmatprep.subr.bf16.mxu0 0
  %496 = vmatpush2.bf16.msra.mxu0 %v360
  %497 = vmatprep.mubr.bf16.mxu0 %v159
  %498 = vmatmul.mubr.bf16.gmra.mxu0 %v158
  %v499 = vpop.f32.mrf.mxu0
  %v500 = vadd.f32 %v451, %v499
  %v501 = vpop.f32.mrf.mxu0
  %v502 = vpop.f32.mrf.mxu0
  %v503 = vadd.f32 %v454, %v502
  %v504 = vpop.f32.mrf.mxu0
  %505 = vmatprep.mubr.bf16.mxu0 %v164
  %506 = vmatmul.mubr.bf16.gmra.mxu0 %v163
  %v507 = vpop.f32.mrf.mxu0
  %v508 = vadd.f32 %v459, %v507
  %v509 = vpop.f32.mrf.mxu0
  %v510 = vpop.f32.mrf.mxu0
  %v511 = vadd.f32 %v462, %v510
  %v512 = vpop.f32.mrf.mxu0
  %513 = vdwg.mxu0
  %514 = vmatprep.subr.bf16.mxu0 0
  %515 = vmatpush1.bf16.msra.mxu0 %v375
  %516 = vmatprep.subr.bf16.mxu0 0
  %517 = vmatpush1.bf16.msra.mxu0 %v374
  %518 = vmatprep.subr.bf16.mxu0 0
  %519 = vmatpush1.bf16.msra.mxu0 %v373
  %520 = vmatprep.subr.bf16.mxu0 0
  %521 = vmatpush1.bf16.msra.mxu0 %v372
  %522 = vmatprep.subr.bf16.mxu0 0
  %523 = vmatpush1.bf16.msra.mxu0 %v371
  %524 = vmatprep.subr.bf16.mxu0 0
  %525 = vmatpush1.bf16.msra.mxu0 %v370
  %526 = vmatprep.subr.bf16.mxu0 0
  %527 = vmatpush1.bf16.msra.mxu0 %v369
  %528 = vmatprep.subr.bf16.mxu0 0
  %529 = vmatpush1.bf16.msra.mxu0 %v368
  %530 = vmatprep.subr.bf16.mxu0 0
  %531 = vmatpush2.bf16.msra.mxu0 0
  %532 = vmatprep.subr.bf16.mxu0 0
  %533 = vmatpush2.bf16.msra.mxu0 0
  %534 = vmatprep.subr.bf16.mxu0 0
  %535 = vmatpush2.bf16.msra.mxu0 0
  %536 = vmatprep.subr.bf16.mxu0 0
  %537 = vmatpush2.bf16.msra.mxu0 0
  %538 = vmatprep.subr.bf16.mxu0 0
  %539 = vmatpush2.bf16.msra.mxu0 0
  %540 = vmatprep.subr.bf16.mxu0 0
  %541 = vmatpush2.bf16.msra.mxu0 0
  %542 = vmatprep.subr.bf16.mxu0 0
  %543 = vmatpush2.bf16.msra.mxu0 0
  %544 = vmatprep.subr.bf16.mxu0 0
  %545 = vmatpush2.bf16.msra.mxu0 0
  %546 = vmatprep.mubr.bf16.mxu0 0
  %547 = vmatmul.mubr.bf16.gmra.mxu0 %v160
  %v548 = vpop.f32.mrf.mxu0
  %v549 = vadd.f32 %v500, %v548
  %v550 = vpop.f32.mrf.mxu0
  %v551 = vpop.f32.mrf.mxu0
  %v552 = vadd.f32 %v503, %v551
  %v553 = vpop.f32.mrf.mxu0
  %554 = vmatprep.mubr.bf16.mxu0 0
  %555 = vmatmul.mubr.bf16.gmra.mxu0 %v165
  %v556 = vpop.f32.mrf.mxu0
  %v557 = vadd.f32 %v508, %v556
  %v558 = vpop.f32.mrf.mxu0
  %v559 = vpop.f32.mrf.mxu0
  %v560 = vadd.f32 %v511, %v559
  %v561 = vpop.f32.mrf.mxu0
  %562 = vdwg.mxu0
  %v563 = vadd.f32 %v28, %v549
  %v564 = vadd.f32 %v29, %v552
  %v565 = vadd.f32 %v30, %v557
  %v566 = vadd.f32 %v31, %v560
  %567 = vst [vmem:[#allocation2] sm:$0xff] %v563
  %568 = vst [vmem:[#allocation2 + $0x8] sm:$0xff] %v564
  %569 = vst [vmem:[#allocation2 + $0x10] sm:$0xff] %v565
  %570 = vst [vmem:[#allocation2 + $0x18] sm:$0xff] %v566
  // Predicated region
  $region22: #{_lambda_.29} parent=0 // pred_check
    %p571 = pneg %p20
  $region23: #{_lambda_.29} parent=0 // pred_check_branch
    %573 = sbr.rel (%p571) target = $region25
  $region24: #{_lambda_.29} parent=0 // pred_region
    %v574 = vld [vmem:[#allocation2] sm:$0xff]
    %v575 = vld [vmem:[#allocation2 + $0x8] sm:$0xff]
    %v576 = vld [vmem:[#allocation2 + $0x10] sm:$0xff]
    %v577 = vld [vmem:[#allocation2 + $0x18] sm:$0xff]
    %v578 = vld [vmem:[%s2] sm:$0x1]
    %v580 = vlaneseq
    %v581 = vshrl.u32 %v580, 7
    %v582 = vsub.s32 0, %v581
    %v583 = vrot.slane %v578, %v582
    %v585 = vadd.f32 %v574, %v583
    %v586 = vadd.f32 %v575, %v583
    %v587 = vadd.f32 %v576, %v583
    %v588 = vadd.f32 %v577, %v583
    %v589 = vld [vmem:[%s3] sm:$0xff]
    %v590 = vld [vmem:[%s3 + $0x8] sm:$0xff]
    %v591 = vld [vmem:[%s3 + $0x10] sm:$0xff]
    %v592 = vld [vmem:[%s3 + $0x18] sm:$0xff]
    %vm593 = vcmp.gt.f32.partialorder %v589, 1.0
    %vm594 = vcmp.gt.f32.partialorder %v590, 1.0
    %vm595 = vcmp.gt.f32.partialorder %v591, 1.0
    %vm596 = vcmp.gt.f32.partialorder %v592, 1.0
    %v597 = vsel %vm593, 1.0, 0.0
    %v598 = vsel %vm594, 1.0, 0.0
    %v599 = vsel %vm595, 1.0, 0.0
    %v600 = vsel %vm596, 1.0, 0.0
    %v601 = vmul.f32 %v589, 0.9
    %v602 = vmul.f32 %v590, 0.9
    %v603 = vmul.f32 %v591, 0.9
    %v604 = vmul.f32 %v592, 0.9
    %v605 = vadd.f32 %v601, %v585
    %v606 = vadd.f32 %v602, %v586
    %v607 = vadd.f32 %v603, %v587
    %v608 = vadd.f32 %v604, %v588
    %v609 = vsub.f32 %v605, %v597
    %v610 = vsub.f32 %v606, %v598
    %v611 = vsub.f32 %v607, %v599
    %v612 = vsub.f32 %v608, %v600
    %vm613 = vcmp.gt.f32.partialorder %v609, 1.0
    %vm614 = vcmp.gt.f32.partialorder %v610, 1.0
    %vm615 = vcmp.gt.f32.partialorder %v611, 1.0
    %vm616 = vcmp.gt.f32.partialorder %v612, 1.0
    %v617 = vsel %vm613, 1.0, 0.0
    %v618 = vsel %vm614, 1.0, 0.0
    %v619 = vsel %vm615, 1.0, 0.0
    %v620 = vsel %vm616, 1.0, 0.0
    %621 = vst [vmem:[%s4] sm:$0xff] %v617
    %622 = vst [vmem:[%s4 + $0x8] sm:$0xff] %v618
    %623 = vst [vmem:[%s4 + $0x10] sm:$0xff] %v619
    %624 = vst [vmem:[%s4 + $0x18] sm:$0xff] %v620
    %625 = vst [vmem:[%s5] sm:$0xff] %v609
    %626 = vst [vmem:[%s5 + $0x8] sm:$0xff] %v610
    %627 = vst [vmem:[%s5 + $0x10] sm:$0xff] %v611
    %628 = vst [vmem:[%s5 + $0x18] sm:$0xff] %v612
  $region25: #{_lambda_.29} parent=0 // pred_fallthru
    _
  // Predicated region
  $region26: #{_lambda_.29} parent=0 // pred_check
    _
  $region27: #{_lambda_.29} parent=0 // pred_check_branch
    %630 = sbr.rel (0) target = $region29
  $region28: #{_lambda_.29} parent=0 // pred_region
    _
  $region29: #{_lambda_.29} parent=0 // pred_fallthru
    _
  // Predicated region
  $region30: #{_lambda_.29} parent=0 // pred_check
    _
  $region31: #{_lambda_.29} parent=0 // pred_check_branch
    %632 = sbr.rel (0) target = $region33
  $region32: #{_lambda_.29} parent=0 // pred_region
    _
  $region33: #{_lambda_.29} parent=0 // pred_fallthru
    _
  // Predicated region
  $region34: #{_lambda_.29} parent=0 // pred_check
    _
  $region35: #{_lambda_.29} parent=0 // pred_check_branch
    %634 = sbr.rel (0) target = $region37
  $region36: #{_lambda_.29} parent=0 // pred_region
    _
  $region37: #{_lambda_.29} parent=0 // pred_fallthru
    _
  // Predicated region
  $region38: #{_lambda_.29} parent=0 // pred_check
    _
  $region39: #{_lambda_.29} parent=0 // pred_check_branch
    %636 = sbr.rel (0) target = $region41
  $region40: #{_lambda_.29} parent=0 // pred_region
    _
  $region41: #{_lambda_.29} parent=0 // pred_fallthru
    _

// kernel: _lambda_.28
$region0: #{_lambda_.28}
  #allocation0 [shape = 'u32[]', space=smem, size = 0x4, offset = 0x4, fixed_abs, tag = 'smem constant byte address 0x4 - core index']
  #allocation1 [shape = 'u32[144,128]{1,0:T(1,128)}', space=vmem, size = 0x12000, scoped, tag = 'internal scratch']
  #allocation2 [shape = 'f32[8,128]{1,0:T(8,128)}', space=vmem, size = 0x1000, scoped, tag = 'scratch operand']
  %s0 = inlined_call_operand.vmem [shape: bf16[8,128], index: 0, kind: input, shape index: {}]
  %s1 = inlined_call_operand.vmem [shape: bf16[128,128], index: 1, kind: input, shape index: {}]
  %s2 = inlined_call_operand.vmem [shape: f32[1,128], index: 2, kind: input, shape index: {}]
  %s3 = inlined_call_operand.vmem [shape: f32[8,128], index: 3, kind: input, shape index: {}, may-alias: {3,5}]
  %s4 = inlined_call_operand.vmem [shape: f32[8,128], index: 4, kind: output, shape index: {0}]
  %s5 = inlined_call_operand.vmem [shape: f32[8,128], index: 5, kind: output, shape index: {1}, may-alias: {3,5}]
  %6 = xla_tuple %s4, %s5
  %s7 = sld [smem:[#allocation0]]
  $region42: #{_lambda_.28} parent=0
    _
  %s9 = ssub.s32 1, %s7
  %s10 = scalar_select 0, %s9, %s7
  // Predicated region
  $region2: #{_lambda_.28} parent=0 // pred_check
    _
  $region3: #{_lambda_.28} parent=0 // pred_check_branch
    %12 = sbr.rel (0) target = $region5
  $region4: #{_lambda_.28} parent=0 // pred_region
    _
  $region5: #{_lambda_.28} parent=0 // pred_fallthru
    _
  // Predicated region
  $region6: #{_lambda_.28} parent=0 // pred_check
    _
  $region7: #{_lambda_.28} parent=0 // pred_check_branch
    %14 = sbr.rel (0) target = $region9
  $region8: #{_lambda_.28} parent=0 // pred_region
    _
  $region9: #{_lambda_.28} parent=0 // pred_fallthru
    _
  // Predicated region
  $region10: #{_lambda_.28} parent=0 // pred_check
    _
  $region11: #{_lambda_.28} parent=0 // pred_check_branch
    %16 = sbr.rel (0) target = $region13
  $region12: #{_lambda_.28} parent=0 // pred_region
    _
  $region13: #{_lambda_.28} parent=0 // pred_fallthru
    _
  // Predicated region
  $region14: #{_lambda_.28} parent=0 // pred_check
    _
  $region15: #{_lambda_.28} parent=0 // pred_check_branch
    %18 = sbr.rel (0) target = $region17
  $region16: #{_lambda_.28} parent=0 // pred_region
    _
  $region17: #{_lambda_.28} parent=0 // pred_fallthru
    _
  %p20 = scmp.eq.s32.totalorder 0, 0
  // Predicated region
  $region18: #{_lambda_.28} parent=0 // pred_check
    %p21 = pneg %p20
  $region19: #{_lambda_.28} parent=0 // pred_check_branch
    %23 = sbr.rel (%p21) target = $region21
  $region20: #{_lambda_.28} parent=0 // pred_region
    %24 = vst [vmem:[#allocation2] sm:$0xff] 0.0
  $region21: #{_lambda_.28} parent=0 // pred_fallthru
    _
  %v25 = vld [vmem:[#allocation2] sm:$0xff]
  %v26 = vld [vmem:[%s0] sm:$0xf]
  %v27 = vld [vmem:[%s1] sm:$0xf]
  %v28 = vld [vmem:[%s1 + $0x4] sm:$0xf]
  %v29 = vld [vmem:[%s1 + $0x8] sm:$0xf]
  %v30 = vld [vmem:[%s1 + $0xc] sm:$0xf]
  %v31 = vld [vmem:[%s1 + $0x10] sm:$0xf]
  %v32 = vld [vmem:[%s1 + $0x14] sm:$0xf]
  %v33 = vld [vmem:[%s1 + $0x18] sm:$0xf]
  %v34 = vld [vmem:[%s1 + $0x1c] sm:$0xf]
  %v35 = vld [vmem:[%s1 + $0x20] sm:$0xf]
  %v36 = vld [vmem:[%s1 + $0x24] sm:$0xf]
  %v37 = vld [vmem:[%s1 + $0x28] sm:$0xf]
  %v38 = vld [vmem:[%s1 + $0x2c] sm:$0xf]
  %v39 = vld [vmem:[%s1 + $0x30] sm:$0xf]
  %v40 = vld [vmem:[%s1 + $0x34] sm:$0xf]
  %v41 = vld [vmem:[%s1 + $0x38] sm:$0xf]
  %v42 = vld [vmem:[%s1 + $0x3c] sm:$0xf]
  %v59 = vunpack.c.l.b16 %v27
  %v60 = vunpack.c.l.b16 %v28
  %v61 = vunpack.c.l.b16 %v29
  %v62 = vunpack.c.l.b16 %v30
  %v63 = vunpack.c.l.b16 %v31
  %v64 = vunpack.c.l.b16 %v32
  %v65 = vunpack.c.l.b16 %v33
  %v66 = vunpack.c.l.b16 %v34
  %v67 = vunpack.c.l.b16 %v35
  %v68 = vunpack.c.l.b16 %v36
  %v69 = vunpack.c.l.b16 %v37
  %v70 = vunpack.c.l.b16 %v38
  %v71 = vunpack.c.l.b16 %v39
  %v72 = vunpack.c.l.b16 %v40
  %v73 = vunpack.c.l.b16 %v41
  %v74 = vunpack.c.l.b16 %v42
  %v75 = vpack.c.b16 %v60, %v59
  %v76 = vpack.c.b16 %v62, %v61
  %v77 = vpack.c.b16 %v64, %v63
  %v78 = vpack.c.b16 %v66, %v65
  %v79 = vpack.c.b16 %v68, %v67
  %v80 = vpack.c.b16 %v70, %v69
  %v81 = vpack.c.b16 %v72, %v71
  %v82 = vpack.c.b16 %v74, %v73
  %91 = vmatprep.subr.bf16.mxu0 0
  %92 = vmatpush1.bf16.msra.mxu0 %v82
  %93 = vmatprep.subr.bf16.mxu0 0
  %94 = vmatpush1.bf16.msra.mxu0 %v81
  %95 = vmatprep.subr.bf16.mxu0 0
  %96 = vmatpush1.bf16.msra.mxu0 %v80
  %97 = vmatprep.subr.bf16.mxu0 0
  %98 = vmatpush1.bf16.msra.mxu0 %v79
  %99 = vmatprep.subr.bf16.mxu0 0
  %100 = vmatpush1.bf16.msra.mxu0 %v78
  %101 = vmatprep.subr.bf16.mxu0 0
  %102 = vmatpush1.bf16.msra.mxu0 %v77
  %103 = vmatprep.subr.bf16.mxu0 0
  %104 = vmatpush1.bf16.msra.mxu0 %v76
  %105 = vmatprep.subr.bf16.mxu0 0
  %106 = vmatpush1.bf16.msra.mxu0 %v75
  %107 = vmatprep.subr.bf16.mxu0 0
  %108 = vmatpush2.bf16.msra.mxu0 0
  %109 = vmatprep.subr.bf16.mxu0 0
  %110 = vmatpush2.bf16.msra.mxu0 0
  %111 = vmatprep.subr.bf16.mxu0 0
  %112 = vmatpush2.bf16.msra.mxu0 0
  %113 = vmatprep.subr.bf16.mxu0 0
  %114 = vmatpush2.bf16.msra.mxu0 0
  %115 = vmatprep.subr.bf16.mxu0 0
  %116 = vmatpush2.bf16.msra.mxu0 0
  %117 = vmatprep.subr.bf16.mxu0 0
  %118 = vmatpush2.bf16.msra.mxu0 0
  %119 = vmatprep.subr.bf16.mxu0 0
  %120 = vmatpush2.bf16.msra.mxu0 0
  %121 = vmatprep.subr.bf16.mxu0 0
  %122 = vmatpush2.bf16.msra.mxu0 0
  %123 = vmatprep.mubr.bf16.mxu0 0
  %124 = vmatmul.mubr.bf16.gmra.mxu0 %v26
  %v125 = vpop.f32.mrf.mxu0
  %v126 = vadd.f32 0.0, %v125
  %v127 = vpop.f32.mrf.mxu0
  %v128 = vpop.f32.mrf.mxu0
  %v129 = vpop.f32.mrf.mxu0
  %130 = vdwg.mxu0
  %v131 = vadd.f32 %v25, %v126
  %132 = vst [vmem:[#allocation2] sm:$0xff] %v131
  // Predicated region
  $region22: #{_lambda_.28} parent=0 // pred_check
    %p133 = pneg %p20
  $region23: #{_lambda_.28} parent=0 // pred_check_branch
    %135 = sbr.rel (%p133) target = $region25
  $region24: #{_lambda_.28} parent=0 // pred_region
    %v136 = vld [vmem:[#allocation2] sm:$0xff]
    %v137 = vld [vmem:[%s2] sm:$0x1]
    %v139 = vlaneseq
    %v140 = vshrl.u32 %v139, 7
    %v141 = vsub.s32 0, %v140
    %v142 = vrot.slane %v137, %v141
    %v144 = vadd.f32 %v136, %v142
    %v145 = vld [vmem:[%s3] sm:$0xff]
    %vm146 = vcmp.gt.f32.partialorder %v145, 1.0
    %v147 = vsel %vm146, 1.0, 0.0
    %v148 = vmul.f32 %v145, 0.9
    %v149 = vadd.f32 %v148, %v144
    %v150 = vsub.f32 %v149, %v147
    %vm151 = vcmp.gt.f32.partialorder %v150, 1.0
    %v152 = vsel %vm151, 1.0, 0.0
    %153 = vst [vmem:[%s4] sm:$0xff] %v152
    %154 = vst [vmem:[%s5] sm:$0xff] %v150
  $region25: #{_lambda_.28} parent=0 // pred_fallthru
    _
  // Predicated region
  $region26: #{_lambda_.28} parent=0 // pred_check
    _
  $region27: #{_lambda_.28} parent=0 // pred_check_branch
    %156 = sbr.rel (0) target = $region29
  $region28: #{_lambda_.28} parent=0 // pred_region
    _
  $region29: #{_lambda_.28} parent=0 // pred_fallthru
    _
  // Predicated region
  $region30: #{_lambda_.28} parent=0 // pred_check
    _
  $region31: #{_lambda_.28} parent=0 // pred_check_branch
    %158 = sbr.rel (0) target = $region33
  $region32: #{_lambda_.28} parent=0 // pred_region
    _
  $region33: #{_lambda_.28} parent=0 // pred_fallthru
    _
  // Predicated region
  $region34: #{_lambda_.28} parent=0 // pred_check
    _
  $region35: #{_lambda_.28} parent=0 // pred_check_branch
    %160 = sbr.rel (0) target = $region37
  $region36: #{_lambda_.28} parent=0 // pred_region
    _
  $region37: #{_lambda_.28} parent=0 // pred_fallthru
    _
  // Predicated region
  $region38: #{_lambda_.28} parent=0 // pred_check
    _
  $region39: #{_lambda_.28} parent=0 // pred_check_branch
    %162 = sbr.rel (0) target = $region41
  $region40: #{_lambda_.28} parent=0 // pred_region
    _
  $region41: #{_lambda_.28} parent=0 // pred_fallthru
    _

// kernel: _lambda_.31
$region0: #{_lambda_.31}
  #allocation0 [shape = 'u32[]', space=smem, size = 0x4, offset = 0x4, fixed_abs, tag = 'smem constant byte address 0x4 - core index']
  #allocation1 [shape = 'u32[144,128]{1,0:T(1,128)}', space=vmem, size = 0x12000, scoped, tag = 'internal scratch']
  %s0 = inlined_call_operand.vmem [shape: f32[2,4,128], index: 0, kind: input, shape index: {}]
  %s1 = inlined_call_operand.vmem [shape: f32[128,32], index: 1, kind: input, shape index: {}]
  %s2 = inlined_call_operand.vmem [shape: f32[1,32], index: 2, kind: input, shape index: {}]
  %s3 = inlined_call_operand.vmem [shape: f32[32,10], index: 3, kind: input, shape index: {}]
  %s4 = inlined_call_operand.vmem [shape: f32[2,32], index: 4, kind: input, shape index: {}, may-alias: {4,7}]
  %s5 = inlined_call_operand.vmem [shape: f32[2,10], index: 5, kind: input, shape index: {}, may-alias: {5,6}]
  %s6 = inlined_call_operand.vmem [shape: f32[2,10], index: 6, kind: output, shape index: {0}, may-alias: {5,6}]
  %s7 = inlined_call_operand.vmem [shape: f32[2,32], index: 7, kind: output, shape index: {1}, may-alias: {4,7}]
  %8 = xla_tuple %s6, %s7
  %s9 = sld [smem:[#allocation0]]
  $region42: #{_lambda_.31} parent=0
    _
  %s11 = ssub.s32 1, %s9
  %s12 = scalar_select 0, %s11, %s9
  // Predicated region
  $region2: #{_lambda_.31} parent=0 // pred_check
    _
  $region3: #{_lambda_.31} parent=0 // pred_check_branch
    %14 = sbr.rel (0) target = $region5
  $region4: #{_lambda_.31} parent=0 // pred_region
    _
  $region5: #{_lambda_.31} parent=0 // pred_fallthru
    _
  // Predicated region
  $region6: #{_lambda_.31} parent=0 // pred_check
    _
  $region7: #{_lambda_.31} parent=0 // pred_check_branch
    %16 = sbr.rel (0) target = $region9
  $region8: #{_lambda_.31} parent=0 // pred_region
    _
  $region9: #{_lambda_.31} parent=0 // pred_fallthru
    _
  // Predicated region
  $region10: #{_lambda_.31} parent=0 // pred_check
    _
  $region11: #{_lambda_.31} parent=0 // pred_check_branch
    %18 = sbr.rel (0) target = $region13
  $region12: #{_lambda_.31} parent=0 // pred_region
    _
  $region13: #{_lambda_.31} parent=0 // pred_fallthru
    _
  // Predicated region
  $region14: #{_lambda_.31} parent=0 // pred_check
    _
  $region15: #{_lambda_.31} parent=0 // pred_check_branch
    %20 = sbr.rel (0) target = $region17
  $region16: #{_lambda_.31} parent=0 // pred_region
    _
  $region17: #{_lambda_.31} parent=0 // pred_fallthru
    _
  // Predicated region
  $region18: #{_lambda_.31} parent=0 // pred_check
    _
  $region19: #{_lambda_.31} parent=0 // pred_check_branch
    %22 = sbr.rel (0) target = $region21
  $region20: #{_lambda_.31} parent=0 // pred_region
    _
  $region21: #{_lambda_.31} parent=0 // pred_fallthru
    _
  // Predicated region
  $region22: #{_lambda_.31} parent=0 // pred_check
    _
  $region23: #{_lambda_.31} parent=0 // pred_check_branch
    %24 = sbr.rel (0) target = $region25
  $region24: #{_lambda_.31} parent=0 // pred_region
    _
  $region25: #{_lambda_.31} parent=0 // pred_fallthru
    _
  %v25 = vld [vmem:[%s0] sm:$0xf]
  %v26 = vld [vmem:[%s0 + $0x4] sm:$0xf]
  %vm27 = vcmask 1043456
  %v28 = vsel %vm27, %v25, 0.0
  %v29 = vrot.slane %v28, 4
  %v30 = vadd.f32 %v28, %v29
  %v31 = vrot.slane %v30, 2
  %v32 = vadd.f32 %v30, %v31
  %v33 = vrot.slane %v32, 1
  %v34 = vadd.f32 %v32, %v33
  %v35 = vsel %vm27, %v26, 0.0
  %v36 = vrot.slane %v35, 4
  %v37 = vadd.f32 %v35, %v36
  %v38 = vrot.slane %v37, 2
  %v39 = vadd.f32 %v37, %v38
  %v40 = vrot.slane %v39, 1
  %v41 = vadd.f32 %v39, %v40
  %v42 = vrcp.pop 4.0
  %v43 = vmul.f32 %v34, %v42
  %v44 = vmul.f32 %v41, %v42
  %v45 = vld [vmem:[%s1] sm:$0xff]
  %v46 = vld [vmem:[%s1 + $0x8] sm:$0xff]
  %v47 = vld [vmem:[%s1 + $0x10] sm:$0xff]
  %v48 = vld [vmem:[%s1 + $0x18] sm:$0xff]
  %v49 = vld [vmem:[%s1 + $0x20] sm:$0xff]
  %v50 = vld [vmem:[%s1 + $0x28] sm:$0xff]
  %v51 = vld [vmem:[%s1 + $0x30] sm:$0xff]
  %v52 = vld [vmem:[%s1 + $0x38] sm:$0xff]
  %v53 = vld [vmem:[%s1 + $0x40] sm:$0xff]
  %v54 = vld [vmem:[%s1 + $0x48] sm:$0xff]
  %v55 = vld [vmem:[%s1 + $0x50] sm:$0xff]
  %v56 = vld [vmem:[%s1 + $0x58] sm:$0xff]
  %v57 = vld [vmem:[%s1 + $0x60] sm:$0xff]
  %v58 = vld [vmem:[%s1 + $0x68] sm:$0xff]
  %v59 = vld [vmem:[%s1 + $0x70] sm:$0xff]
  %v60 = vld [vmem:[%s1 + $0x78] sm:$0xff]
  %v61 = vld [vmem:[%s2] sm:$0x1]
  %v63 = vlaneseq
  %v64 = vshrl.u32 %v63, 7
  %v65 = vsub.s32 0, %v64
  %v66 = vrot.slane %v61, %v65
  %vm70 = vcmask 1041409
  %v71 = vsel %vm70, %v44, %v43
  %73 = vmatprep.subr.mxu0 0.0
  %74 = vmatpush1.msra.mxu0 %v60
  %75 = vmatprep.subr.mxu0 0.0
  %76 = vmatpush1.msra.mxu0 %v59
  %77 = vmatprep.subr.mxu0 0.0
  %78 = vmatpush1.msra.mxu0 %v58
  %79 = vmatprep.subr.mxu0 0.0
  %80 = vmatpush1.msra.mxu0 %v57
  %81 = vmatprep.subr.mxu0 0.0
  %82 = vmatpush1.msra.mxu0 %v56
  %83 = vmatprep.subr.mxu0 0.0
  %84 = vmatpush1.msra.mxu0 %v55
  %85 = vmatprep.subr.mxu0 0.0
  %86 = vmatpush1.msra.mxu0 %v54
  %87 = vmatprep.subr.mxu0 0.0
  %88 = vmatpush1.msra.mxu0 %v53
  %89 = vmatprep.subr.mxu0 0.0
  %90 = vmatpush1.msra.mxu0 %v52
  %91 = vmatprep.subr.mxu0 0.0
  %92 = vmatpush1.msra.mxu0 %v51
  %93 = vmatprep.subr.mxu0 0.0
  %94 = vmatpush1.msra.mxu0 %v50
  %95 = vmatprep.subr.mxu0 0.0
  %96 = vmatpush1.msra.mxu0 %v49
  %97 = vmatprep.subr.mxu0 0.0
  %98 = vmatpush1.msra.mxu0 %v48
  %99 = vmatprep.subr.mxu0 0.0
  %100 = vmatpush1.msra.mxu0 %v47
  %101 = vmatprep.subr.mxu0 0.0
  %102 = vmatpush1.msra.mxu0 %v46
  %103 = vmatprep.subr.mxu0 0.0
  %104 = vmatpush1.msra.mxu0 %v45
  %105 = vmatprep.subr.mxu0 0.0
  %106 = vmatpush2.msra.mxu0 0.0
  %107 = vmatprep.subr.mxu0 0.0
  %108 = vmatpush2.msra.mxu0 0.0
  %109 = vmatprep.subr.mxu0 0.0
  %110 = vmatpush2.msra.mxu0 0.0
  %111 = vmatprep.subr.mxu0 0.0
  %112 = vmatpush2.msra.mxu0 0.0
  %113 = vmatprep.subr.mxu0 0.0
  %114 = vmatpush2.msra.mxu0 0.0
  %115 = vmatprep.subr.mxu0 0.0
  %116 = vmatpush2.msra.mxu0 0.0
  %117 = vmatprep.subr.mxu0 0.0
  %118 = vmatpush2.msra.mxu0 0.0
  %119 = vmatprep.subr.mxu0 0.0
  %120 = vmatpush2.msra.mxu0 0.0
  %121 = vmatprep.subr.mxu0 0.0
  %122 = vmatpush2.msra.mxu0 0.0
  %123 = vmatprep.subr.mxu0 0.0
  %124 = vmatpush2.msra.mxu0 0.0
  %125 = vmatprep.subr.mxu0 0.0
  %126 = vmatpush2.msra.mxu0 0.0
  %127 = vmatprep.subr.mxu0 0.0
  %128 = vmatpush2.msra.mxu0 0.0
  %129 = vmatprep.subr.mxu0 0.0
  %130 = vmatpush2.msra.mxu0 0.0
  %131 = vmatprep.subr.mxu0 0.0
  %132 = vmatpush2.msra.mxu0 0.0
  %133 = vmatprep.subr.mxu0 0.0
  %134 = vmatpush2.msra.mxu0 0.0
  %135 = vmatprep.subr.mxu0 0.0
  %136 = vmatpush2.msra.mxu0 0.0
  %137 = vmatprep.mubr.f32.mxu0 0.0
  %138 = vmatmul.mubr.f32.gmra.mxu0 %v71
  %v139 = vpop.f32.mrf.mxu0
  %v140 = vadd.f32 %v66, %v139
  %v141 = vpop.f32.mrf.mxu0
  %142 = vdwg.mxu0
  %v143 = vld [vmem:[%s4] sm:$0x3]
  %vm144 = vcmp.gt.f32.partialorder %v143, 1.0
  %v145 = vsel %vm144, 1.0, 0.0
  %v146 = vmul.f32 %v143, 0.9
  %v147 = vadd.f32 %v146, %v140
  %v148 = vsub.f32 %v147, %v145
  %vm149 = vcmp.gt.f32.partialorder %v148, 1.0
  %v150 = vsel %vm149, 1.0, 0.0
  %vm151 = vcmask 254976
  %152 = vst.msk [vmem:[%s7] sm:$0x3] %vm151, %v148
  %v153 = vld [vmem:[%s5] sm:$0x3]
  %v154 = vld [vmem:[%s3] sm:$0xff]
  %v155 = vld [vmem:[%s3 + $0x8] sm:$0xff]
  %v156 = vld [vmem:[%s3 + $0x10] sm:$0xff]
  %v157 = vld [vmem:[%s3 + $0x18] sm:$0xff]
  %vm158 = vcmask 261120
  %v160 = vsel %vm158, %v150, 0
  %162 = vmatprep.subr.mxu0 0.0
  %163 = vmatpush1.msra.mxu0 0.0
  %164 = vmatprep.subr.mxu0 0.0
  %165 = vmatpush1.msra.mxu0 0.0
  %166 = vmatprep.subr.mxu0 0.0
  %167 = vmatpush1.msra.mxu0 0.0
  %168 = vmatprep.subr.mxu0 0.0
  %169 = vmatpush1.msra.mxu0 0.0
  %170 = vmatprep.subr.mxu0 0.0
  %171 = vmatpush1.msra.mxu0 0.0
  %172 = vmatprep.subr.mxu0 0.0
  %173 = vmatpush1.msra.mxu0 0.0
  %174 = vmatprep.subr.mxu0 0.0
  %175 = vmatpush1.msra.mxu0 0.0
  %176 = vmatprep.subr.mxu0 0.0
  %177 = vmatpush1.msra.mxu0 0.0
  %178 = vmatprep.subr.mxu0 0.0
  %179 = vmatpush1.msra.mxu0 0.0
  %180 = vmatprep.subr.mxu0 0.0
  %181 = vmatpush1.msra.mxu0 0.0
  %182 = vmatprep.subr.mxu0 0.0
  %183 = vmatpush1.msra.mxu0 0.0
  %184 = vmatprep.subr.mxu0 0.0
  %185 = vmatpush1.msra.mxu0 0.0
  %186 = vmatprep.subr.mxu0 0.0
  %187 = vmatpush1.msra.mxu0 %v157
  %188 = vmatprep.subr.mxu0 0.0
  %189 = vmatpush1.msra.mxu0 %v156
  %190 = vmatprep.subr.mxu0 0.0
  %191 = vmatpush1.msra.mxu0 %v155
  %192 = vmatprep.subr.mxu0 0.0
  %193 = vmatpush1.msra.mxu0 %v154
  %194 = vmatprep.subr.mxu0 0.0
  %195 = vmatpush2.msra.mxu0 0.0
  %196 = vmatprep.subr.mxu0 0.0
  %197 = vmatpush2.msra.mxu0 0.0
  %198 = vmatprep.subr.mxu0 0.0
  %199 = vmatpush2.msra.mxu0 0.0
  %200 = vmatprep.subr.mxu0 0.0
  %201 = vmatpush2.msra.mxu0 0.0
  %202 = vmatprep.subr.mxu0 0.0
  %203 = vmatpush2.msra.mxu0 0.0
  %204 = vmatprep.subr.mxu0 0.0
  %205 = vmatpush2.msra.mxu0 0.0
  %206 = vmatprep.subr.mxu0 0.0
  %207 = vmatpush2.msra.mxu0 0.0
  %208 = vmatprep.subr.mxu0 0.0
  %209 = vmatpush2.msra.mxu0 0.0
  %210 = vmatprep.subr.mxu0 0.0
  %211 = vmatpush2.msra.mxu0 0.0
  %212 = vmatprep.subr.mxu0 0.0
  %213 = vmatpush2.msra.mxu0 0.0
  %214 = vmatprep.subr.mxu0 0.0
  %215 = vmatpush2.msra.mxu0 0.0
  %216 = vmatprep.subr.mxu0 0.0
  %217 = vmatpush2.msra.mxu0 0.0
  %218 = vmatprep.subr.mxu0 0.0
  %219 = vmatpush2.msra.mxu0 0.0
  %220 = vmatprep.subr.mxu0 0.0
  %221 = vmatpush2.msra.mxu0 0.0
  %222 = vmatprep.subr.mxu0 0.0
  %223 = vmatpush2.msra.mxu0 0.0
  %224 = vmatprep.subr.mxu0 0.0
  %225 = vmatpush2.msra.mxu0 0.0
  %226 = vmatprep.mubr.f32.mxu0 0.0
  %227 = vmatmul.mubr.f32.gmra.mxu0 %v160
  %v228 = vpop.f32.mrf.mxu0
  %v229 = vadd.f32 0.0, %v228
  %v230 = vpop.f32.mrf.mxu0
  %231 = vdwg.mxu0
  %v232 = vadd.f32 %v153, %v229
  %vm233 = vcmask 74752
  %234 = vst.msk [vmem:[%s6] sm:$0x3] %vm233, %v232
  // Predicated region
  $region26: #{_lambda_.31} parent=0 // pred_check
    _
  $region27: #{_lambda_.31} parent=0 // pred_check_branch
    %236 = sbr.rel (0) target = $region29
  $region28: #{_lambda_.31} parent=0 // pred_region
    _
  $region29: #{_lambda_.31} parent=0 // pred_fallthru
    _
  // Predicated region
  $region30: #{_lambda_.31} parent=0 // pred_check
    _
  $region31: #{_lambda_.31} parent=0 // pred_check_branch
    %238 = sbr.rel (0) target = $region33
  $region32: #{_lambda_.31} parent=0 // pred_region
    _
  $region33: #{_lambda_.31} parent=0 // pred_fallthru
    _
  // Predicated region
  $region34: #{_lambda_.31} parent=0 // pred_check
    _
  $region35: #{_lambda_.31} parent=0 // pred_check_branch
    %240 = sbr.rel (0) target = $region37
  $region36: #{_lambda_.31} parent=0 // pred_region
    _
  $region37: #{_lambda_.31} parent=0 // pred_fallthru
    _
  // Predicated region
  $region38: #{_lambda_.31} parent=0 // pred_check
    _
  $region39: #{_lambda_.31} parent=0 // pred_check_branch
    %242 = sbr.rel (0) target = $region41
  $region40: #{_lambda_.31} parent=0 // pred_region
    _
  $region41: #{_lambda_.31} parent=0 // pred_fallthru
    _

// kernel: _lambda_.30
$region0: #{_lambda_.30}
  #allocation0 [shape = 'u32[]', space=smem, size = 0x4, offset = 0x4, fixed_abs, tag = 'smem constant byte address 0x4 - core index']
  #allocation1 [shape = 'u32[144,128]{1,0:T(1,128)}', space=vmem, size = 0x12000, scoped, tag = 'internal scratch']
  #allocation2 [shape = 'f32[8,128]{1,0:T(8,128)}', space=vmem, size = 0x1000, scoped, tag = 'scratch operand']
  %s0 = inlined_call_operand.vmem [shape: bf16[8,1152], index: 0, kind: input, shape index: {}]
  %s1 = inlined_call_operand.vmem [shape: bf16[1152,128], index: 1, kind: input, shape index: {}]
  %s2 = inlined_call_operand.vmem [shape: f32[1,128], index: 2, kind: input, shape index: {}]
  %s3 = inlined_call_operand.vmem [shape: f32[8,128], index: 3, kind: input, shape index: {}]
  %s4 = inlined_call_operand.vmem [shape: f32[8,128], index: 4, kind: input, shape index: {}, may-alias: {4,6}]
  %s5 = inlined_call_operand.vmem [shape: f32[8,128], index: 5, kind: output, shape index: {0}]
  %s6 = inlined_call_operand.vmem [shape: f32[8,128], index: 6, kind: output, shape index: {1}, may-alias: {4,6}]
  %7 = xla_tuple %s5, %s6
  %s8 = sld [smem:[#allocation0]]
  $region46: #{_lambda_.30} parent=0
    _
  %s10 = ssub.s32 1, %s8
  %s11 = scalar_select 0, %s10, %s8
  // Predicated region
  $region2: #{_lambda_.30} parent=0 // pred_check
    _
  $region3: #{_lambda_.30} parent=0 // pred_check_branch
    %13 = sbr.rel (0) target = $region5
  $region4: #{_lambda_.30} parent=0 // pred_region
    _
  $region5: #{_lambda_.30} parent=0 // pred_fallthru
    _
  // Predicated region
  $region6: #{_lambda_.30} parent=0 // pred_check
    _
  $region7: #{_lambda_.30} parent=0 // pred_check_branch
    %15 = sbr.rel (0) target = $region9
  $region8: #{_lambda_.30} parent=0 // pred_region
    _
  $region9: #{_lambda_.30} parent=0 // pred_fallthru
    _
  // Predicated region
  $region10: #{_lambda_.30} parent=0 // pred_check
    _
  $region11: #{_lambda_.30} parent=0 // pred_check_branch
    %17 = sbr.rel (0) target = $region13
  $region12: #{_lambda_.30} parent=0 // pred_region
    _
  $region13: #{_lambda_.30} parent=0 // pred_fallthru
    _
  // Predicated region
  $region14: #{_lambda_.30} parent=0 // pred_check
    _
  $region15: #{_lambda_.30} parent=0 // pred_check_branch
    %19 = sbr.rel (0) target = $region17
  $region16: #{_lambda_.30} parent=0 // pred_region
    _
  $region17: #{_lambda_.30} parent=0 // pred_fallthru
    _
  // Predicated region
  $region18: #{_lambda_.30} parent=0 // pred_check
    _
  $region19: #{_lambda_.30} parent=0 // pred_check_branch
    %21 = sbr.rel (0) target = $region21
  $region20: #{_lambda_.30} parent=0 // pred_region
    _
  $region21: #{_lambda_.30} parent=0 // pred_fallthru
    _
  %p23 = scmp.eq.s32.totalorder 0, 0
  // Predicated region
  $region22: #{_lambda_.30} parent=0 // pred_check
    %p24 = pneg %p23
  $region23: #{_lambda_.30} parent=0 // pred_check_branch
    %26 = sbr.rel (%p24) target = $region25
  $region24: #{_lambda_.30} parent=0 // pred_region
    %27 = vst [vmem:[#allocation2] sm:$0xff] 0.0
  $region25: #{_lambda_.30} parent=0 // pred_fallthru
    _
  %v28 = vld [vmem:[#allocation2] sm:$0xff]
  %v29 = vld [vmem:[%s0] sm:$0xff]
  %v30 = vld [vmem:[%s0 + $0x8] sm:$0xff]
  %v31 = vld [vmem:[%s0 + $0x10] sm:$0xff]
  %v32 = vld [vmem:[%s0 + $0x18] sm:$0xff]
  %v33 = vld [vmem:[%s0 + $0x20] sm:$0xf]
  %v34 = vld [vmem:[%s1] sm:$0xf]
  %v35 = vld [vmem:[%s1 + $0x4] sm:$0xf]
  %v36 = vld [vmem:[%s1 + $0x8] sm:$0xf]
  %v37 = vld [vmem:[%s1 + $0xc] sm:$0xf]
  %v38 = vld [vmem:[%s1 + $0x10] sm:$0xf]
  %v39 = vld [vmem:[%s1 + $0x14] sm:$0xf]
  %v40 = vld [vmem:[%s1 + $0x18] sm:$0xf]
  %v41 = vld [vmem:[%s1 + $0x1c] sm:$0xf]
  %v42 = vld [vmem:[%s1 + $0x20] sm:$0xf]
  %v43 = vld [vmem:[%s1 + $0x24] sm:$0xf]
  %v44 = vld [vmem:[%s1 + $0x28] sm:$0xf]
  %v45 = vld [vmem:[%s1 + $0x2c] sm:$0xf]
  %v46 = vld [vmem:[%s1 + $0x30] sm:$0xf]
  %v47 = vld [vmem:[%s1 + $0x34] sm:$0xf]
  %v48 = vld [vmem:[%s1 + $0x38] sm:$0xf]
  %v49 = vld [vmem:[%s1 + $0x3c] sm:$0xf]
  %v50 = vld [vmem:[%s1 + $0x40] sm:$0xf]
  %v51 = vld [vmem:[%s1 + $0x44] sm:$0xf]
  %v52 = vld [vmem:[%s1 + $0x48] sm:$0xf]
  %v53 = vld [vmem:[%s1 + $0x4c] sm:$0xf]
  %v54 = vld [vmem:[%s1 + $0x50] sm:$0xf]
  %v55 = vld [vmem:[%s1 + $0x54] sm:$0xf]
  %v56 = vld [vmem:[%s1 + $0x58] sm:$0xf]
  %v57 = vld [vmem:[%s1 + $0x5c] sm:$0xf]
  %v58 = vld [vmem:[%s1 + $0x60] sm:$0xf]
  %v59 = vld [vmem:[%s1 + $0x64] sm:$0xf]
  %v60 = vld [vmem:[%s1 + $0x68] sm:$0xf]
  %v61 = vld [vmem:[%s1 + $0x6c] sm:$0xf]
  %v62 = vld [vmem:[%s1 + $0x70] sm:$0xf]
  %v63 = vld [vmem:[%s1 + $0x74] sm:$0xf]
  %v64 = vld [vmem:[%s1 + $0x78] sm:$0xf]
  %v65 = vld [vmem:[%s1 + $0x7c] sm:$0xf]
  %v66 = vld [vmem:[%s1 + $0x80] sm:$0xf]
  %v67 = vld [vmem:[%s1 + $0x84] sm:$0xf]
  %v68 = vld [vmem:[%s1 + $0x88] sm:$0xf]
  %v69 = vld [vmem:[%s1 + $0x8c] sm:$0xf]
  %v70 = vld [vmem:[%s1 + $0x90] sm:$0xf]
  %v71 = vld [vmem:[%s1 + $0x94] sm:$0xf]
  %v72 = vld [vmem:[%s1 + $0x98] sm:$0xf]
  %v73 = vld [vmem:[%s1 + $0x9c] sm:$0xf]
  %v74 = vld [vmem:[%s1 + $0xa0] sm:$0xf]
  %v75 = vld [vmem:[%s1 + $0xa4] sm:$0xf]
  %v76 = vld [vmem:[%s1 + $0xa8] sm:$0xf]
  %v77 = vld [vmem:[%s1 + $0xac] sm:$0xf]
  %v78 = vld [vmem:[%s1 + $0xb0] sm:$0xf]
  %v79 = vld [vmem:[%s1 + $0xb4] sm:$0xf]
  %v80 = vld [vmem:[%s1 + $0xb8] sm:$0xf]
  %v81 = vld [vmem:[%s1 + $0xbc] sm:$0xf]
  %v82 = vld [vmem:[%s1 + $0xc0] sm:$0xf]
  %v83 = vld [vmem:[%s1 + $0xc4] sm:$0xf]
  %v84 = vld [vmem:[%s1 + $0xc8] sm:$0xf]
  %v85 = vld [vmem:[%s1 + $0xcc] sm:$0xf]
  %v86 = vld [vmem:[%s1 + $0xd0] sm:$0xf]
  %v87 = vld [vmem:[%s1 + $0xd4] sm:$0xf]
  %v88 = vld [vmem:[%s1 + $0xd8] sm:$0xf]
  %v89 = vld [vmem:[%s1 + $0xdc] sm:$0xf]
  %v90 = vld [vmem:[%s1 + $0xe0] sm:$0xf]
  %v91 = vld [vmem:[%s1 + $0xe4] sm:$0xf]
  %v92 = vld [vmem:[%s1 + $0xe8] sm:$0xf]
  %v93 = vld [vmem:[%s1 + $0xec] sm:$0xf]
  %v94 = vld [vmem:[%s1 + $0xf0] sm:$0xf]
  %v95 = vld [vmem:[%s1 + $0xf4] sm:$0xf]
  %v96 = vld [vmem:[%s1 + $0xf8] sm:$0xf]
  %v97 = vld [vmem:[%s1 + $0xfc] sm:$0xf]
  %v98 = vld [vmem:[%s1 + $0x100] sm:$0xf]
  %v99 = vld [vmem:[%s1 + $0x104] sm:$0xf]
  %v100 = vld [vmem:[%s1 + $0x108] sm:$0xf]
  %v101 = vld [vmem:[%s1 + $0x10c] sm:$0xf]
  %v102 = vld [vmem:[%s1 + $0x110] sm:$0xf]
  %v103 = vld [vmem:[%s1 + $0x114] sm:$0xf]
  %v104 = vld [vmem:[%s1 + $0x118] sm:$0xf]
  %v105 = vld [vmem:[%s1 + $0x11c] sm:$0xf]
  %v106 = vld [vmem:[%s1 + $0x120] sm:$0xf]
  %v107 = vld [vmem:[%s1 + $0x124] sm:$0xf]
  %v108 = vld [vmem:[%s1 + $0x128] sm:$0xf]
  %v109 = vld [vmem:[%s1 + $0x12c] sm:$0xf]
  %v110 = vld [vmem:[%s1 + $0x130] sm:$0xf]
  %v111 = vld [vmem:[%s1 + $0x134] sm:$0xf]
  %v112 = vld [vmem:[%s1 + $0x138] sm:$0xf]
  %v113 = vld [vmem:[%s1 + $0x13c] sm:$0xf]
  %v114 = vld [vmem:[%s1 + $0x140] sm:$0xf]
  %v115 = vld [vmem:[%s1 + $0x144] sm:$0xf]
  %v116 = vld [vmem:[%s1 + $0x148] sm:$0xf]
  %v117 = vld [vmem:[%s1 + $0x14c] sm:$0xf]
  %v118 = vld [vmem:[%s1 + $0x150] sm:$0xf]
  %v119 = vld [vmem:[%s1 + $0x154] sm:$0xf]
  %v120 = vld [vmem:[%s1 + $0x158] sm:$0xf]
  %v121 = vld [vmem:[%s1 + $0x15c] sm:$0xf]
  %v122 = vld [vmem:[%s1 + $0x160] sm:$0xf]
  %v123 = vld [vmem:[%s1 + $0x164] sm:$0xf]
  %v124 = vld [vmem:[%s1 + $0x168] sm:$0xf]
  %v125 = vld [vmem:[%s1 + $0x16c] sm:$0xf]
  %v126 = vld [vmem:[%s1 + $0x170] sm:$0xf]
  %v127 = vld [vmem:[%s1 + $0x174] sm:$0xf]
  %v128 = vld [vmem:[%s1 + $0x178] sm:$0xf]
  %v129 = vld [vmem:[%s1 + $0x17c] sm:$0xf]
  %v130 = vld [vmem:[%s1 + $0x180] sm:$0xf]
  %v131 = vld [vmem:[%s1 + $0x184] sm:$0xf]
  %v132 = vld [vmem:[%s1 + $0x188] sm:$0xf]
  %v133 = vld [vmem:[%s1 + $0x18c] sm:$0xf]
  %v134 = vld [vmem:[%s1 + $0x190] sm:$0xf]
  %v135 = vld [vmem:[%s1 + $0x194] sm:$0xf]
  %v136 = vld [vmem:[%s1 + $0x198] sm:$0xf]
  %v137 = vld [vmem:[%s1 + $0x19c] sm:$0xf]
  %v138 = vld [vmem:[%s1 + $0x1a0] sm:$0xf]
  %v139 = vld [vmem:[%s1 + $0x1a4] sm:$0xf]
  %v140 = vld [vmem:[%s1 + $0x1a8] sm:$0xf]
  %v141 = vld [vmem:[%s1 + $0x1ac] sm:$0xf]
  %v142 = vld [vmem:[%s1 + $0x1b0] sm:$0xf]
  %v143 = vld [vmem:[%s1 + $0x1b4] sm:$0xf]
  %v144 = vld [vmem:[%s1 + $0x1b8] sm:$0xf]
  %v145 = vld [vmem:[%s1 + $0x1bc] sm:$0xf]
  %v146 = vld [vmem:[%s1 + $0x1c0] sm:$0xf]
  %v147 = vld [vmem:[%s1 + $0x1c4] sm:$0xf]
  %v148 = vld [vmem:[%s1 + $0x1c8] sm:$0xf]
  %v149 = vld [vmem:[%s1 + $0x1cc] sm:$0xf]
  %v150 = vld [vmem:[%s1 + $0x1d0] sm:$0xf]
  %v151 = vld [vmem:[%s1 + $0x1d4] sm:$0xf]
  %v152 = vld [vmem:[%s1 + $0x1d8] sm:$0xf]
  %v153 = vld [vmem:[%s1 + $0x1dc] sm:$0xf]
  %v154 = vld [vmem:[%s1 + $0x1e0] sm:$0xf]
  %v155 = vld [vmem:[%s1 + $0x1e4] sm:$0xf]
  %v156 = vld [vmem:[%s1 + $0x1e8] sm:$0xf]
  %v157 = vld [vmem:[%s1 + $0x1ec] sm:$0xf]
  %v158 = vld [vmem:[%s1 + $0x1f0] sm:$0xf]
  %v159 = vld [vmem:[%s1 + $0x1f4] sm:$0xf]
  %v160 = vld [vmem:[%s1 + $0x1f8] sm:$0xf]
  %v161 = vld [vmem:[%s1 + $0x1fc] sm:$0xf]
  %v162 = vld [vmem:[%s1 + $0x200] sm:$0xf]
  %v163 = vld [vmem:[%s1 + $0x204] sm:$0xf]
  %v164 = vld [vmem:[%s1 + $0x208] sm:$0xf]
  %v165 = vld [vmem:[%s1 + $0x20c] sm:$0xf]
  %v166 = vld [vmem:[%s1 + $0x210] sm:$0xf]
  %v167 = vld [vmem:[%s1 + $0x214] sm:$0xf]
  %v168 = vld [vmem:[%s1 + $0x218] sm:$0xf]
  %v169 = vld [vmem:[%s1 + $0x21c] sm:$0xf]
  %v170 = vld [vmem:[%s1 + $0x220] sm:$0xf]
  %v171 = vld [vmem:[%s1 + $0x224] sm:$0xf]
  %v172 = vld [vmem:[%s1 + $0x228] sm:$0xf]
  %v173 = vld [vmem:[%s1 + $0x22c] sm:$0xf]
  %v174 = vld [vmem:[%s1 + $0x230] sm:$0xf]
  %v175 = vld [vmem:[%s1 + $0x234] sm:$0xf]
  %v176 = vld [vmem:[%s1 + $0x238] sm:$0xf]
  %v177 = vld [vmem:[%s1 + $0x23c] sm:$0xf]
  %v183 = vunpack.c.l.b16 %v29
  %v184 = vunpack.c.h.b16 %v29
  %v185 = vunpack.c.l.b16 %v30
  %v186 = vunpack.c.h.b16 %v30
  %v187 = vunpack.c.l.b16 %v31
  %v188 = vunpack.c.h.b16 %v31
  %v189 = vunpack.c.l.b16 %v32
  %v190 = vunpack.c.h.b16 %v32
  %v191 = vunpack.c.l.b16 %v33
  %v192 = vpack.c.b16 %v183, %v183
  %v193 = vpack.c.b16 %v184, %v184
  %v194 = vpack.c.b16 %v185, %v185
  %v195 = vpack.c.b16 %v186, %v186
  %v196 = vpack.c.b16 %v187, %v187
  %v197 = vpack.c.b16 %v188, %v188
  %v198 = vpack.c.b16 %v189, %v189
  %v199 = vpack.c.b16 %v190, %v190
  %v200 = vpack.c.b16 %v191, %v191
  %v354 = vunpack.c.l.b16 %v34
  %v355 = vunpack.c.l.b16 %v35
  %v356 = vunpack.c.l.b16 %v36
  %v357 = vunpack.c.l.b16 %v37
  %v358 = vunpack.c.l.b16 %v38
  %v359 = vunpack.c.l.b16 %v39
  %v360 = vunpack.c.l.b16 %v40
  %v361 = vunpack.c.l.b16 %v41
  %v362 = vunpack.c.l.b16 %v42
  %v363 = vunpack.c.l.b16 %v43
  %v364 = vunpack.c.l.b16 %v44
  %v365 = vunpack.c.l.b16 %v45
  %v366 = vunpack.c.l.b16 %v46
  %v367 = vunpack.c.l.b16 %v47
  %v368 = vunpack.c.l.b16 %v48
  %v369 = vunpack.c.l.b16 %v49
  %v370 = vunpack.c.l.b16 %v50
  %v371 = vunpack.c.l.b16 %v51
  %v372 = vunpack.c.l.b16 %v52
  %v373 = vunpack.c.l.b16 %v53
  %v374 = vunpack.c.l.b16 %v54
  %v375 = vunpack.c.l.b16 %v55
  %v376 = vunpack.c.l.b16 %v56
  %v377 = vunpack.c.l.b16 %v57
  %v378 = vunpack.c.l.b16 %v58
  %v379 = vunpack.c.l.b16 %v59
  %v380 = vunpack.c.l.b16 %v60
  %v381 = vunpack.c.l.b16 %v61
  %v382 = vunpack.c.l.b16 %v62
  %v383 = vunpack.c.l.b16 %v63
  %v384 = vunpack.c.l.b16 %v64
  %v385 = vunpack.c.l.b16 %v65
  %v386 = vunpack.c.l.b16 %v66
  %v387 = vunpack.c.l.b16 %v67
  %v388 = vunpack.c.l.b16 %v68
  %v389 = vunpack.c.l.b16 %v69
  %v390 = vunpack.c.l.b16 %v70
  %v391 = vunpack.c.l.b16 %v71
  %v392 = vunpack.c.l.b16 %v72
  %v393 = vunpack.c.l.b16 %v73
  %v394 = vunpack.c.l.b16 %v74
  %v395 = vunpack.c.l.b16 %v75
  %v396 = vunpack.c.l.b16 %v76
  %v397 = vunpack.c.l.b16 %v77
  %v398 = vunpack.c.l.b16 %v78
  %v399 = vunpack.c.l.b16 %v79
  %v400 = vunpack.c.l.b16 %v80
  %v401 = vunpack.c.l.b16 %v81
  %v402 = vunpack.c.l.b16 %v82
  %v403 = vunpack.c.l.b16 %v83
  %v404 = vunpack.c.l.b16 %v84
  %v405 = vunpack.c.l.b16 %v85
  %v406 = vunpack.c.l.b16 %v86
  %v407 = vunpack.c.l.b16 %v87
  %v408 = vunpack.c.l.b16 %v88
  %v409 = vunpack.c.l.b16 %v89
  %v410 = vunpack.c.l.b16 %v90
  %v411 = vunpack.c.l.b16 %v91
  %v412 = vunpack.c.l.b16 %v92
  %v413 = vunpack.c.l.b16 %v93
  %v414 = vunpack.c.l.b16 %v94
  %v415 = vunpack.c.l.b16 %v95
  %v416 = vunpack.c.l.b16 %v96
  %v417 = vunpack.c.l.b16 %v97
  %v418 = vunpack.c.l.b16 %v98
  %v419 = vunpack.c.l.b16 %v99
  %v420 = vunpack.c.l.b16 %v100
  %v421 = vunpack.c.l.b16 %v101
  %v422 = vunpack.c.l.b16 %v102
  %v423 = vunpack.c.l.b16 %v103
  %v424 = vunpack.c.l.b16 %v104
  %v425 = vunpack.c.l.b16 %v105
  %v426 = vunpack.c.l.b16 %v106
  %v427 = vunpack.c.l.b16 %v107
  %v428 = vunpack.c.l.b16 %v108
  %v429 = vunpack.c.l.b16 %v109
  %v430 = vunpack.c.l.b16 %v110
  %v431 = vunpack.c.l.b16 %v111
  %v432 = vunpack.c.l.b16 %v112
  %v433 = vunpack.c.l.b16 %v113
  %v434 = vunpack.c.l.b16 %v114
  %v435 = vunpack.c.l.b16 %v115
  %v436 = vunpack.c.l.b16 %v116
  %v437 = vunpack.c.l.b16 %v117
  %v438 = vunpack.c.l.b16 %v118
  %v439 = vunpack.c.l.b16 %v119
  %v440 = vunpack.c.l.b16 %v120
  %v441 = vunpack.c.l.b16 %v121
  %v442 = vunpack.c.l.b16 %v122
  %v443 = vunpack.c.l.b16 %v123
  %v444 = vunpack.c.l.b16 %v124
  %v445 = vunpack.c.l.b16 %v125
  %v446 = vunpack.c.l.b16 %v126
  %v447 = vunpack.c.l.b16 %v127
  %v448 = vunpack.c.l.b16 %v128
  %v449 = vunpack.c.l.b16 %v129
  %v450 = vunpack.c.l.b16 %v130
  %v451 = vunpack.c.l.b16 %v131
  %v452 = vunpack.c.l.b16 %v132
  %v453 = vunpack.c.l.b16 %v133
  %v454 = vunpack.c.l.b16 %v134
  %v455 = vunpack.c.l.b16 %v135
  %v456 = vunpack.c.l.b16 %v136
  %v457 = vunpack.c.l.b16 %v137
  %v458 = vunpack.c.l.b16 %v138
  %v459 = vunpack.c.l.b16 %v139
  %v460 = vunpack.c.l.b16 %v140
  %v461 = vunpack.c.l.b16 %v141
  %v462 = vunpack.c.l.b16 %v142
  %v463 = vunpack.c.l.b16 %v143
  %v464 = vunpack.c.l.b16 %v144
  %v465 = vunpack.c.l.b16 %v145
  %v466 = vunpack.c.l.b16 %v146
  %v467 = vunpack.c.l.b16 %v147
  %v468 = vunpack.c.l.b16 %v148
  %v469 = vunpack.c.l.b16 %v149
  %v470 = vunpack.c.l.b16 %v150
  %v471 = vunpack.c.l.b16 %v151
  %v472 = vunpack.c.l.b16 %v152
  %v473 = vunpack.c.l.b16 %v153
  %v474 = vunpack.c.l.b16 %v154
  %v475 = vunpack.c.l.b16 %v155
  %v476 = vunpack.c.l.b16 %v156
  %v477 = vunpack.c.l.b16 %v157
  %v478 = vunpack.c.l.b16 %v158
  %v479 = vunpack.c.l.b16 %v159
  %v480 = vunpack.c.l.b16 %v160
  %v481 = vunpack.c.l.b16 %v161
  %v482 = vunpack.c.l.b16 %v162
  %v483 = vunpack.c.l.b16 %v163
  %v484 = vunpack.c.l.b16 %v164
  %v485 = vunpack.c.l.b16 %v165
  %v486 = vunpack.c.l.b16 %v166
  %v487 = vunpack.c.l.b16 %v167
  %v488 = vunpack.c.l.b16 %v168
  %v489 = vunpack.c.l.b16 %v169
  %v490 = vunpack.c.l.b16 %v170
  %v491 = vunpack.c.l.b16 %v171
  %v492 = vunpack.c.l.b16 %v172
  %v493 = vunpack.c.l.b16 %v173
  %v494 = vunpack.c.l.b16 %v174
  %v495 = vunpack.c.l.b16 %v175
  %v496 = vunpack.c.l.b16 %v176
  %v497 = vunpack.c.l.b16 %v177
  %v498 = vpack.c.b16 %v355, %v354
  %v499 = vpack.c.b16 %v357, %v356
  %v500 = vpack.c.b16 %v359, %v358
  %v501 = vpack.c.b16 %v361, %v360
  %v502 = vpack.c.b16 %v363, %v362
  %v503 = vpack.c.b16 %v365, %v364
  %v504 = vpack.c.b16 %v367, %v366
  %v505 = vpack.c.b16 %v369, %v368
  %v506 = vpack.c.b16 %v371, %v370
  %v507 = vpack.c.b16 %v373, %v372
  %v508 = vpack.c.b16 %v375, %v374
  %v509 = vpack.c.b16 %v377, %v376
  %v510 = vpack.c.b16 %v379, %v378
  %v511 = vpack.c.b16 %v381, %v380
  %v512 = vpack.c.b16 %v383, %v382
  %v513 = vpack.c.b16 %v385, %v384
  %v514 = vpack.c.b16 %v387, %v386
  %v515 = vpack.c.b16 %v389, %v388
  %v516 = vpack.c.b16 %v391, %v390
  %v517 = vpack.c.b16 %v393, %v392
  %v518 = vpack.c.b16 %v395, %v394
  %v519 = vpack.c.b16 %v397, %v396
  %v520 = vpack.c.b16 %v399, %v398
  %v521 = vpack.c.b16 %v401, %v400
  %v522 = vpack.c.b16 %v403, %v402
  %v523 = vpack.c.b16 %v405, %v404
  %v524 = vpack.c.b16 %v407, %v406
  %v525 = vpack.c.b16 %v409, %v408
  %v526 = vpack.c.b16 %v411, %v410
  %v527 = vpack.c.b16 %v413, %v412
  %v528 = vpack.c.b16 %v415, %v414
  %v529 = vpack.c.b16 %v417, %v416
  %v530 = vpack.c.b16 %v419, %v418
  %v531 = vpack.c.b16 %v421, %v420
  %v532 = vpack.c.b16 %v423, %v422
  %v533 = vpack.c.b16 %v425, %v424
  %v534 = vpack.c.b16 %v427, %v426
  %v535 = vpack.c.b16 %v429, %v428
  %v536 = vpack.c.b16 %v431, %v430
  %v537 = vpack.c.b16 %v433, %v432
  %v538 = vpack.c.b16 %v435, %v434
  %v539 = vpack.c.b16 %v437, %v436
  %v540 = vpack.c.b16 %v439, %v438
  %v541 = vpack.c.b16 %v441, %v440
  %v542 = vpack.c.b16 %v443, %v442
  %v543 = vpack.c.b16 %v445, %v444
  %v544 = vpack.c.b16 %v447, %v446
  %v545 = vpack.c.b16 %v449, %v448
  %v546 = vpack.c.b16 %v451, %v450
  %v547 = vpack.c.b16 %v453, %v452
  %v548 = vpack.c.b16 %v455, %v454
  %v549 = vpack.c.b16 %v457, %v456
  %v550 = vpack.c.b16 %v459, %v458
  %v551 = vpack.c.b16 %v461, %v460
  %v552 = vpack.c.b16 %v463, %v462
  %v553 = vpack.c.b16 %v465, %v464
  %v554 = vpack.c.b16 %v467, %v466
  %v555 = vpack.c.b16 %v469, %v468
  %v556 = vpack.c.b16 %v471, %v470
  %v557 = vpack.c.b16 %v473, %v472
  %v558 = vpack.c.b16 %v475, %v474
  %v559 = vpack.c.b16 %v477, %v476
  %v560 = vpack.c.b16 %v479, %v478
  %v561 = vpack.c.b16 %v481, %v480
  %v562 = vpack.c.b16 %v483, %v482
  %v563 = vpack.c.b16 %v485, %v484
  %v564 = vpack.c.b16 %v487, %v486
  %v565 = vpack.c.b16 %v489, %v488
  %v566 = vpack.c.b16 %v491, %v490
  %v567 = vpack.c.b16 %v493, %v492
  %v568 = vpack.c.b16 %v495, %v494
  %v569 = vpack.c.b16 %v497, %v496
  %642 = vmatprep.subr.bf16.mxu0 0
  %643 = vmatpush1.bf16.msra.mxu0 %v505
  %644 = vmatprep.subr.bf16.mxu0 0
  %645 = vmatpush1.bf16.msra.mxu0 %v504
  %646 = vmatprep.subr.bf16.mxu0 0
  %647 = vmatpush1.bf16.msra.mxu0 %v503
  %648 = vmatprep.subr.bf16.mxu0 0
  %649 = vmatpush1.bf16.msra.mxu0 %v502
  %650 = vmatprep.subr.bf16.mxu0 0
  %651 = vmatpush1.bf16.msra.mxu0 %v501
  %652 = vmatprep.subr.bf16.mxu0 0
  %653 = vmatpush1.bf16.msra.mxu0 %v500
  %654 = vmatprep.subr.bf16.mxu0 0
  %655 = vmatpush1.bf16.msra.mxu0 %v499
  %656 = vmatprep.subr.bf16.mxu0 0
  %657 = vmatpush1.bf16.msra.mxu0 %v498
  %658 = vmatprep.subr.bf16.mxu0 0
  %659 = vmatpush2.bf16.msra.mxu0 %v513
  %660 = vmatprep.subr.bf16.mxu0 0
  %661 = vmatpush2.bf16.msra.mxu0 %v512
  %662 = vmatprep.subr.bf16.mxu0 0
  %663 = vmatpush2.bf16.msra.mxu0 %v511
  %664 = vmatprep.subr.bf16.mxu0 0
  %665 = vmatpush2.bf16.msra.mxu0 %v510
  %666 = vmatprep.subr.bf16.mxu0 0
  %667 = vmatpush2.bf16.msra.mxu0 %v509
  %668 = vmatprep.subr.bf16.mxu0 0
  %669 = vmatpush2.bf16.msra.mxu0 %v508
  %670 = vmatprep.subr.bf16.mxu0 0
  %671 = vmatpush2.bf16.msra.mxu0 %v507
  %672 = vmatprep.subr.bf16.mxu0 0
  %673 = vmatpush2.bf16.msra.mxu0 %v506
  %674 = vmatprep.mubr.bf16.mxu0 %v193
  %675 = vmatmul.mubr.bf16.gmra.mxu0 %v192
  %v676 = vpop.f32.mrf.mxu0
  %v677 = vadd.f32 0.0, %v676
  %v678 = vpop.f32.mrf.mxu0
  %v679 = vpop.f32.mrf.mxu0
  %v680 = vpop.f32.mrf.mxu0
  %681 = vdwg.mxu0
  %682 = vmatprep.subr.bf16.mxu0 0
  %683 = vmatpush1.bf16.msra.mxu0 %v521
  %684 = vmatprep.subr.bf16.mxu0 0
  %685 = vmatpush1.bf16.msra.mxu0 %v520
  %686 = vmatprep.subr.bf16.mxu0 0
  %687 = vmatpush1.bf16.msra.mxu0 %v519
  %688 = vmatprep.subr.bf16.mxu0 0
  %689 = vmatpush1.bf16.msra.mxu0 %v518
  %690 = vmatprep.subr.bf16.mxu0 0
  %691 = vmatpush1.bf16.msra.mxu0 %v517
  %692 = vmatprep.subr.bf16.mxu0 0
  %693 = vmatpush1.bf16.msra.mxu0 %v516
  %694 = vmatprep.subr.bf16.mxu0 0
  %695 = vmatpush1.bf16.msra.mxu0 %v515
  %696 = vmatprep.subr.bf16.mxu0 0
  %697 = vmatpush1.bf16.msra.mxu0 %v514
  %698 = vmatprep.subr.bf16.mxu0 0
  %699 = vmatpush2.bf16.msra.mxu0 %v529
  %700 = vmatprep.subr.bf16.mxu0 0
  %701 = vmatpush2.bf16.msra.mxu0 %v528
  %702 = vmatprep.subr.bf16.mxu0 0
  %703 = vmatpush2.bf16.msra.mxu0 %v527
  %704 = vmatprep.subr.bf16.mxu0 0
  %705 = vmatpush2.bf16.msra.mxu0 %v526
  %706 = vmatprep.subr.bf16.mxu0 0
  %707 = vmatpush2.bf16.msra.mxu0 %v525
  %708 = vmatprep.subr.bf16.mxu0 0
  %709 = vmatpush2.bf16.msra.mxu0 %v524
  %710 = vmatprep.subr.bf16.mxu0 0
  %711 = vmatpush2.bf16.msra.mxu0 %v523
  %712 = vmatprep.subr.bf16.mxu0 0
  %713 = vmatpush2.bf16.msra.mxu0 %v522
  %714 = vmatprep.mubr.bf16.mxu0 %v195
  %715 = vmatmul.mubr.bf16.gmra.mxu0 %v194
  %v716 = vpop.f32.mrf.mxu0
  %v717 = vadd.f32 %v677, %v716
  %v718 = vpop.f32.mrf.mxu0
  %v719 = vpop.f32.mrf.mxu0
  %v720 = vpop.f32.mrf.mxu0
  %721 = vdwg.mxu0
  %722 = vmatprep.subr.bf16.mxu0 0
  %723 = vmatpush1.bf16.msra.mxu0 %v537
  %724 = vmatprep.subr.bf16.mxu0 0
  %725 = vmatpush1.bf16.msra.mxu0 %v536
  %726 = vmatprep.subr.bf16.mxu0 0
  %727 = vmatpush1.bf16.msra.mxu0 %v535
  %728 = vmatprep.subr.bf16.mxu0 0
  %729 = vmatpush1.bf16.msra.mxu0 %v534
  %730 = vmatprep.subr.bf16.mxu0 0
  %731 = vmatpush1.bf16.msra.mxu0 %v533
  %732 = vmatprep.subr.bf16.mxu0 0
  %733 = vmatpush1.bf16.msra.mxu0 %v532
  %734 = vmatprep.subr.bf16.mxu0 0
  %735 = vmatpush1.bf16.msra.mxu0 %v531
  %736 = vmatprep.subr.bf16.mxu0 0
  %737 = vmatpush1.bf16.msra.mxu0 %v530
  %738 = vmatprep.subr.bf16.mxu0 0
  %739 = vmatpush2.bf16.msra.mxu0 %v545
  %740 = vmatprep.subr.bf16.mxu0 0
  %741 = vmatpush2.bf16.msra.mxu0 %v544
  %742 = vmatprep.subr.bf16.mxu0 0
  %743 = vmatpush2.bf16.msra.mxu0 %v543
  %744 = vmatprep.subr.bf16.mxu0 0
  %745 = vmatpush2.bf16.msra.mxu0 %v542
  %746 = vmatprep.subr.bf16.mxu0 0
  %747 = vmatpush2.bf16.msra.mxu0 %v541
  %748 = vmatprep.subr.bf16.mxu0 0
  %749 = vmatpush2.bf16.msra.mxu0 %v540
  %750 = vmatprep.subr.bf16.mxu0 0
  %751 = vmatpush2.bf16.msra.mxu0 %v539
  %752 = vmatprep.subr.bf16.mxu0 0
  %753 = vmatpush2.bf16.msra.mxu0 %v538
  %754 = vmatprep.mubr.bf16.mxu0 %v197
  %755 = vmatmul.mubr.bf16.gmra.mxu0 %v196
  %v756 = vpop.f32.mrf.mxu0
  %v757 = vadd.f32 %v717, %v756
  %v758 = vpop.f32.mrf.mxu0
  %v759 = vpop.f32.mrf.mxu0
  %v760 = vpop.f32.mrf.mxu0
  %761 = vdwg.mxu0
  %762 = vmatprep.subr.bf16.mxu0 0
  %763 = vmatpush1.bf16.msra.mxu0 %v553
  %764 = vmatprep.subr.bf16.mxu0 0
  %765 = vmatpush1.bf16.msra.mxu0 %v552
  %766 = vmatprep.subr.bf16.mxu0 0
  %767 = vmatpush1.bf16.msra.mxu0 %v551
  %768 = vmatprep.subr.bf16.mxu0 0
  %769 = vmatpush1.bf16.msra.mxu0 %v550
  %770 = vmatprep.subr.bf16.mxu0 0
  %771 = vmatpush1.bf16.msra.mxu0 %v549
  %772 = vmatprep.subr.bf16.mxu0 0
  %773 = vmatpush1.bf16.msra.mxu0 %v548
  %774 = vmatprep.subr.bf16.mxu0 0
  %775 = vmatpush1.bf16.msra.mxu0 %v547
  %776 = vmatprep.subr.bf16.mxu0 0
  %777 = vmatpush1.bf16.msra.mxu0 %v546
  %778 = vmatprep.subr.bf16.mxu0 0
  %779 = vmatpush2.bf16.msra.mxu0 %v561
  %780 = vmatprep.subr.bf16.mxu0 0
  %781 = vmatpush2.bf16.msra.mxu0 %v560
  %782 = vmatprep.subr.bf16.mxu0 0
  %783 = vmatpush2.bf16.msra.mxu0 %v559
  %784 = vmatprep.subr.bf16.mxu0 0
  %785 = vmatpush2.bf16.msra.mxu0 %v558
  %786 = vmatprep.subr.bf16.mxu0 0
  %787 = vmatpush2.bf16.msra.mxu0 %v557
  %788 = vmatprep.subr.bf16.mxu0 0
  %789 = vmatpush2.bf16.msra.mxu0 %v556
  %790 = vmatprep.subr.bf16.mxu0 0
  %791 = vmatpush2.bf16.msra.mxu0 %v555
  %792 = vmatprep.subr.bf16.mxu0 0
  %793 = vmatpush2.bf16.msra.mxu0 %v554
  %794 = vmatprep.mubr.bf16.mxu0 %v199
  %795 = vmatmul.mubr.bf16.gmra.mxu0 %v198
  %v796 = vpop.f32.mrf.mxu0
  %v797 = vadd.f32 %v757, %v796
  %v798 = vpop.f32.mrf.mxu0
  %v799 = vpop.f32.mrf.mxu0
  %v800 = vpop.f32.mrf.mxu0
  %801 = vdwg.mxu0
  %802 = vmatprep.subr.bf16.mxu0 0
  %803 = vmatpush1.bf16.msra.mxu0 %v569
  %804 = vmatprep.subr.bf16.mxu0 0
  %805 = vmatpush1.bf16.msra.mxu0 %v568
  %806 = vmatprep.subr.bf16.mxu0 0
  %807 = vmatpush1.bf16.msra.mxu0 %v567
  %808 = vmatprep.subr.bf16.mxu0 0
  %809 = vmatpush1.bf16.msra.mxu0 %v566
  %810 = vmatprep.subr.bf16.mxu0 0
  %811 = vmatpush1.bf16.msra.mxu0 %v565
  %812 = vmatprep.subr.bf16.mxu0 0
  %813 = vmatpush1.bf16.msra.mxu0 %v564
  %814 = vmatprep.subr.bf16.mxu0 0
  %815 = vmatpush1.bf16.msra.mxu0 %v563
  %816 = vmatprep.subr.bf16.mxu0 0
  %817 = vmatpush1.bf16.msra.mxu0 %v562
  %818 = vmatprep.subr.bf16.mxu0 0
  %819 = vmatpush2.bf16.msra.mxu0 0
  %820 = vmatprep.subr.bf16.mxu0 0
  %821 = vmatpush2.bf16.msra.mxu0 0
  %822 = vmatprep.subr.bf16.mxu0 0
  %823 = vmatpush2.bf16.msra.mxu0 0
  %824 = vmatprep.subr.bf16.mxu0 0
  %825 = vmatpush2.bf16.msra.mxu0 0
  %826 = vmatprep.subr.bf16.mxu0 0
  %827 = vmatpush2.bf16.msra.mxu0 0
  %828 = vmatprep.subr.bf16.mxu0 0
  %829 = vmatpush2.bf16.msra.mxu0 0
  %830 = vmatprep.subr.bf16.mxu0 0
  %831 = vmatpush2.bf16.msra.mxu0 0
  %832 = vmatprep.subr.bf16.mxu0 0
  %833 = vmatpush2.bf16.msra.mxu0 0
  %834 = vmatprep.mubr.bf16.mxu0 0
  %835 = vmatmul.mubr.bf16.gmra.mxu0 %v200
  %v836 = vpop.f32.mrf.mxu0
  %v837 = vadd.f32 %v797, %v836
  %v838 = vpop.f32.mrf.mxu0
  %v839 = vpop.f32.mrf.mxu0
  %v840 = vpop.f32.mrf.mxu0
  %841 = vdwg.mxu0
  %v842 = vadd.f32 %v28, %v837
  %843 = vst [vmem:[#allocation2] sm:$0xff] %v842
  // Predicated region
  $region26: #{_lambda_.30} parent=0 // pred_check
    %p844 = pneg %p23
  $region27: #{_lambda_.30} parent=0 // pred_check_branch
    %846 = sbr.rel (%p844) target = $region29
  $region28: #{_lambda_.30} parent=0 // pred_region
    %v847 = vld [vmem:[#allocation2] sm:$0xff]
    %v848 = vld [vmem:[%s2] sm:$0x1]
    %v850 = vlaneseq
    %v851 = vshrl.u32 %v850, 7
    %v852 = vsub.s32 0, %v851
    %v853 = vrot.slane %v848, %v852
    %v855 = vadd.f32 %v847, %v853
    %v856 = vld [vmem:[%s4] sm:$0xff]
    %vm857 = vcmp.gt.f32.partialorder %v856, 1.0
    %v858 = vsel %vm857, 1.0, 0.0
    %v859 = vmul.f32 %v856, 0.9
    %v860 = vadd.f32 %v859, %v855
    %v861 = vsub.f32 %v860, %v858
    %vm862 = vcmp.gt.f32.partialorder %v861, 1.0
    %v863 = vsel %vm862, 1.0, 0.0
    %v864 = vld [vmem:[%s3] sm:$0xff]
    %v865 = vadd.f32 %v863, %v864
    %866 = vst [vmem:[%s5] sm:$0xff] %v865
    %867 = vst [vmem:[%s6] sm:$0xff] %v861
  $region29: #{_lambda_.30} parent=0 // pred_fallthru
    _
  // Predicated region
  $region30: #{_lambda_.30} parent=0 // pred_check
    _
  $region31: #{_lambda_.30} parent=0 // pred_check_branch
    %869 = sbr.rel (0) target = $region33
  $region32: #{_lambda_.30} parent=0 // pred_region
    _
  $region33: #{_lambda_.30} parent=0 // pred_fallthru
    _
  // Predicated region
  $region34: #{_lambda_.30} parent=0 // pred_check
    _
  $region35: #{_lambda_.30} parent=0 // pred_check_branch
    %871 = sbr.rel (0) target = $region37
  $region36: #{_lambda_.30} parent=0 // pred_region
    _
  $region37: #{_lambda_.30} parent=0 // pred_fallthru
    _
  // Predicated region
  $region38: #{_lambda_.30} parent=0 // pred_check
    _
  $region39: #{_lambda_.30} parent=0 // pred_check_branch
    %873 = sbr.rel (0) target = $region41
  $region40: #{_lambda_.30} parent=0 // pred_region
    _
  $region41: #{_lambda_.30} parent=0 // pred_fallthru
    _
  // Predicated region
  $region42: #{_lambda_.30} parent=0 // pred_check
    _
  $region43: #{_lambda_.30} parent=0 // pred_check_branch
    %875 = sbr.rel (0) target = $region45
  $region44: #{_lambda_.30} parent=0 // pred_region
    _
  $region45: #{_lambda_.30} parent=0 // pred_fallthru
    _

</llo_original>
